<compile_context>
chip_gen: v6e
topology: v6e:2x2x1
jax: 0.10.0
libtpu: 0.0.40
codegen_flags: <defaults>
</compile_context>

<pallas_src>
import numpy as np
import jax
import jax.numpy as jnp
from jax.experimental import pallas as pl
from jax.experimental.pallas import tpu as pltpu

LEAKY_SLOPE = 0.01
BN_EPS = 1e-5


def _round_up(x, m):
    return ((x + m - 1) // m) * m


def _vmem_capacity_bytes():
    try:
        return int(pltpu.get_tpu_info().vmem_capacity_bytes)
    except Exception:
        return 64 * 1024 * 1024


_VMEM_CAP = _vmem_capacity_bytes()
_VMEM_LIMIT = int(min(_VMEM_CAP * 7 // 8, 112 * 1024 * 1024))


def _inv_spec(shape, index_map, single_buffer):
    """BlockSpec for a grid-invariant operand; request a single VMEM buffer."""
    if single_buffer:
        try:
            return pl.BlockSpec(shape, index_map, pipeline_mode=pl.Buffered(1))
        except Exception:
            pass
    return pl.BlockSpec(shape, index_map)


def _pick_row_tile(hw, w_img):
    """Pick (tile, halo) rows of the flattened image per grid step.

    tile: multiple of 128 that is <= HW (HW is padded up to a multiple of tile);
          larger on 128 MiB parts (v5e/v6e), smaller on 64 MiB parts (v7x).
    halo: multiple of 8, >= W+1 (3x3 conv reach) and a divisor of tile so the
          halo blocks are addressable with plain Blocked BlockSpecs.
    """
    min_halo = _round_up(w_img + 1, 8)
    prefs = (1024, 512, 256, 128) if _VMEM_CAP >= (100 << 20) else (512, 256, 128)
    for tile in prefs:
        if tile > hw or tile < min_halo:
            continue
        for halo in range(min_halo, tile + 1, 8):
            if tile % halo == 0:
                return tile, halo
    tile = _round_up(hw, 8)          # tiny images: one padded tile, full-tile halo
    return tile, tile


# ----------------------------------------------------------------------------
# Kernel 1: fused pyramid stages (pool + 1x1 conv + BN + leaky), HW-tiled reduction
# ----------------------------------------------------------------------------
def _stage_conv_kernel(x_ref, pool_ref, w_ref, scale_ref, shift_ref, mask_ref,
                       o_ref, pooled_acc):
    """x_ref:     (1, tile, Cin)   bf16  flattened NHWC feature tile
       pool_ref:  (P, tile)        bf16  adaptive-pool matrix tile (all stages)
       w_ref:     (Cin, S*Cout)    bf16  all stage 1x1 weights (stage-major cols)
       scale/shift: (1, S*Cout)    f32   folded BN
       mask_ref:  (P, S*Cout)      f32   block-diagonal stage selector
       o_ref:     (1, P, S*Cout)   bf16  block-diagonal stage activations
       pooled_acc:(P, Cin)         f32   scratch accumulator over the HW tiles
    """
    t = pl.program_id(1)

    @pl.when(t == 0)
    def _init():
        pooled_acc[...] = jnp.zeros_like(pooled_acc)

    pooled_acc[...] += jnp.dot(pool_ref[...], x_ref[0],
                               preferred_element_type=jnp.float32)

    @pl.when(t == pl.num_programs(1) - 1)
    def _finish():
        y = jnp.dot(pooled_acc[...].astype(jnp.bfloat16), w_ref[...],
                    preferred_element_type=jnp.float32)
        y = y * scale_ref[...] + shift_ref[...]
        y = jnp.where(y >= 0.0, y, LEAKY_SLOPE * y)
        o_ref[0] = (y * mask_ref[...]).astype(o_ref.dtype)


# ----------------------------------------------------------------------------
# Kernel 2: bottleneck 3x3 conv + BN + leaky with the bilinear upsample fused in
# ----------------------------------------------------------------------------
def _make_bottleneck_kernel(w_img, tile, halo):
    def kernel(y_ref, m_ref, ftop_ref, fcur_ref, fbot_ref,
               wp_ref, wf_ref, scale_ref, shift_ref, o_ref, pri_ref, fext_ref):
        """y_ref:   (1, P, Cp)              bf16  block-diag stage activations
           m_ref:   (1, tile+2*halo, P)     bf16  per-tile upsample window (zero rows
                                                  encode the conv's vertical padding)
           ftop/fcur/fbot: (1, halo/tile/halo, Cin) bf16 original features (+ halos)
           wp_ref:  (9, Cp, Cout)           bf16  3x3 weights, priors channel group
           wf_ref:  (9, Cin, Cout)          bf16  3x3 weights, feats channel group
           scale/shift: (1, Cout)           f32   folded BN
           o_ref:   (1, tile, Cout)         f32
           pri_ref: (tile+2*halo, Cp)       bf16  scratch: upsampled priors (+halo)
           fext_ref:(tile+2*halo, Cin)      bf16  scratch: features (+halo)
        """
        t = pl.program_id(1)
        nt = pl.num_programs(1)

        # Fused bilinear upsample of all stages for this tile + halo (never hits HBM).
        pri_ref[...] = jnp.dot(m_ref[0], y_ref[0],
                               preferred_element_type=jnp.float32).astype(pri_ref.dtype)

        # Original features with vertical zero padding at the image top / bottom.
        top = ftop_ref[0]
        bot = fbot_ref[0]
        top = jnp.where(t == 0, jnp.zeros_like(top), top)
        bot = jnp.where(t == nt - 1, jnp.zeros_like(bot), bot)
        fext_ref[0:halo, :] = top
        fext_ref[halo:halo + tile, :] = fcur_ref[0]
        fext_ref[halo + tile:, :] = bot

        # Horizontal-wrap masks (left/right conv zero padding), per output pixel.
        col = (t * tile +
               jax.lax.broadcasted_iota(jnp.int32, (tile, 1), 0)) % w_img
        not_left = col != 0
        not_right = col != (w_img - 1)

        acc = None
        tap = 0
        for ky in range(3):                # unrolled taps: 18 MXU matmuls, no im2col
            for kx in range(3):
                s = halo - w_img - 1 + ky * w_img + kx
                tp = pri_ref[pl.ds(s, tile), :]
                tf = fext_ref[pl.ds(s, tile), :]
                if kx == 0:
                    tp = jnp.where(not_left, tp, 0.0)
                    tf = jnp.where(not_left, tf, 0.0)
                elif kx == 2:
                    tp = jnp.where(not_right, tp, 0.0)
                    tf = jnp.where(not_right, tf, 0.0)
                part = jnp.dot(tp, wp_ref[tap], preferred_element_type=jnp.float32)
                part = part + jnp.dot(tf, wf_ref[tap],
                                      preferred_element_type=jnp.float32)
                acc = part if acc is None else acc + part
                tap += 1

        y = acc * scale_ref[...] + shift_ref[...]
        y = jnp.where(y >= 0.0, y, LEAKY_SLOPE * y)
        o_ref[0] = y.astype(o_ref.dtype)

    return kernel


# ----------------------------------------------------------------------------
# Host-side constant builders (numpy): pooling / bilinear / mask matrices
# ----------------------------------------------------------------------------
def _pool_matrix(in_size, out_size):
    """Row-stochastic matrix implementing AdaptiveAvgPool1d semantics: (out, in)."""
    m = np.zeros((out_size, in_size), np.float32)
    for i in range(out_size):
        start = (i * in_size) // out_size
        end = -(-((i + 1) * in_size) // out_size)  # ceil
        m[i, start:end] = 1.0 / (end - start)
    return m


def _bilinear_matrix(out_size, in_size):
    """Bilinear interpolation matrix (align_corners=True): (out, in)."""
    m = np.zeros((out_size, in_size), np.float32)
    if in_size == 1:
        m[:, 0] = 1.0
        return m
    if out_size == 1:
        m[0, 0] = 1.0
        return m
    scale = (in_size - 1) / (out_size - 1)
    for h in range(out_size):
        pos = h * scale
        i0 = min(int(np.floor(pos)), in_size - 1)
        frac = pos - i0
        i1 = min(i0 + 1, in_size - 1)
        m[h, i0] += 1.0 - frac
        m[h, i1] += frac
    return m


def _build_psp_constants(h, w, sizes, cout):
    """Fused pool matrix (P, HW), fused upsample matrix (HW, P), block-diag mask."""
    hw = h * w
    total = sum(s * s for s in sizes)
    p = _round_up(total, 8)                      # sublane-aligned pooled-row count
    pool = np.zeros((p, hw), np.float32)
    up = np.zeros((hw, p), np.float32)
    mask = np.zeros((p, len(sizes) * cout), np.float32)
    r0 = 0
    for si, s in enumerate(sizes):
        ph = _pool_matrix(h, s)                  # (s, h)
        pw = _pool_matrix(w, s)                  # (s, w)
        pool[r0:r0 + s * s, :] = np.einsum('iy,jx->ijyx', ph, pw).reshape(s * s, hw)
        ry = _bilinear_matrix(h, s)              # (h, s)
        rx = _bilinear_matrix(w, s)              # (w, s)
        up[:, r0:r0 + s * s] = np.einsum('hi,wj->hwij', ry, rx).reshape(hw, s * s)
        mask[r0:r0 + s * s, si * cout:(si + 1) * cout] = 1.0
        r0 += s * s
    return pool, up, mask, p


# ----------------------------------------------------------------------------
# Parameter init (deterministic, synthetic) and forward
# ----------------------------------------------------------------------------
def _fold_bn(gamma, beta, mean, var):
    scale = gamma / jnp.sqrt(var + BN_EPS)
    shift = beta - mean * scale
    return scale, shift


def init_psp_params(key, features, out_features=512, sizes=(1, 2, 3, 6)):
    n_stage = len(sizes)
    cp = n_stage * out_features
    keys = jax.random.split(key, n_stage + 1)

    w_list, sc_list, sh_list = [], [], []
    for i in range(n_stage):
        ks = jax.random.split(keys[i], 5)
        wmat = jax.random.normal(ks[0], (features, out_features), jnp.float32)
        wmat = wmat * (1.0 / np.sqrt(features))
        gamma = 1.0 + 0.1 * jax.random.normal(ks[1], (out_features,), jnp.float32)
        beta = 0.1 * jax.random.normal(ks[2], (out_features,), jnp.float32)
        mean = 0.1 * jax.random.normal(ks[3], (out_features,), jnp.float32)
        var = jnp.abs(jax.random.normal(ks[4], (out_features,), jnp.float32)) + 0.5
        scale, shift = _fold_bn(gamma, beta, mean, var)
        w_list.append(wmat)
        sc_list.append(scale)
        sh_list.append(shift)

    w_cat = jnp.concatenate(w_list, axis=1).astype(jnp.bfloat16)          # (Cin, S*Cout)
    scale_cat = jnp.concatenate(sc_list).reshape(1, cp)
    shift_cat = jnp.concatenate(sh_list).reshape(1, cp)

    cin_b = features + cp
    ks = jax.random.split(keys[-1], 5)
    w3 = jax.random.normal(ks[0], (3, 3, cin_b, out_features), jnp.float32)
    w3 = w3 * (1.0 / np.sqrt(9 * cin_b))
    # torch.cat channel order: [stage outputs ... , feats]
    w_p = w3[:, :, :cp, :].reshape(9, cp, out_features).astype(jnp.bfloat16)
    w_f = w3[:, :, cp:, :].reshape(9, features, out_features).astype(jnp.bfloat16)
    gamma = 1.0 + 0.1 * jax.random.normal(ks[1], (out_features,), jnp.float32)
    beta = 0.1 * jax.random.normal(ks[2], (out_features,), jnp.float32)
    mean = 0.1 * jax.random.normal(ks[3], (out_features,), jnp.float32)
    var = jnp.abs(jax.random.normal(ks[4], (out_features,), jnp.float32)) + 0.5
    scale_b, shift_b = _fold_bn(gamma, beta, mean, var)

    return dict(sizes=tuple(sizes), features=features, out_features=out_features,
                w_cat=w_cat, scale_cat=scale_cat, shift_cat=shift_cat,
                w_p=w_p, w_f=w_f,
                scale_b=scale_b.reshape(1, out_features),
                shift_b=shift_b.reshape(1, out_features))


def psp_forward(params, feats_nchw, *, single_buffer_invariants=True):
    """feats_nchw: (N, C, H, W) float32 — same convention as the PyTorch module."""
    n, cin, h, w_img = feats_nchw.shape
    hw = h * w_img
    cout = params['out_features']
    sizes = params['sizes']
    cp = len(sizes) * cout

    tile, halo = _pick_row_tile(hw, w_img)
    hwp = _round_up(hw, tile)                     # flattened HW padded up to the tile
    num_t = hwp // tile
    r = tile // halo
    nb_halo = hwp // halo

    pool_np, up_np, mask_np, p_rows = _build_psp_constants(h, w_img, sizes, cout)

    pool_full = np.zeros((p_rows, hwp), np.float32)
    pool_full[:, :hw] = pool_np
    pool_mat = jnp.asarray(pool_full, jnp.bfloat16)

    # Per-tile bilinear-upsample windows (tile + halo rows); zero rows encode the
    # 3x3 conv's vertical zero padding and the HW->HWp row padding.
    m_pad = np.zeros((halo + hwp + halo, p_rows), np.float32)
    m_pad[halo:halo + hw, :] = up_np
    m_win_np = np.stack([m_pad[i * tile:i * tile + tile + 2 * halo]
                         for i in range(num_t)], axis=0)
    m_win = jnp.asarray(m_win_np, jnp.bfloat16)

    mask = jnp.asarray(mask_np, jnp.float32)

    # bf16 BEFORE the NCHW->NHWC transpose: halves the bytes the layout change moves.
    x_flat = jnp.transpose(feats_nchw.astype(jnp.bfloat16),
                           (0, 2, 3, 1)).reshape(n, hw, cin)
    if hwp != hw:
        x_flat = jnp.pad(x_flat, ((0, 0), (0, hwp - hw), (0, 0)))

    sb = single_buffer_invariants

    # ---- Kernel 1: pool + 1x1 conv + BN + leaky (HW-tiled reduction) ----
    y_bd = pl.pallas_call(
        _stage_conv_kernel,
        out_shape=jax.ShapeDtypeStruct((n, p_rows, cp), jnp.bfloat16),
        grid=(n, num_t),
        in_specs=[
            pl.BlockSpec((1, tile, cin), lambda b, t: (b, t, 0)),
            pl.BlockSpec((p_rows, tile), lambda b, t: (0, t)),
            _inv_spec((cin, cp), lambda b, t: (0, 0), sb),
            _inv_spec((1, cp), lambda b, t: (0, 0), sb),
            _inv_spec((1, cp), lambda b, t: (0, 0), sb),
            _inv_spec((p_rows, cp), lambda b, t: (0, 0), sb),
        ],
        out_specs=pl.BlockSpec((1, p_rows, cp), lambda b, t: (b, 0, 0)),
        scratch_shapes=[pltpu.VMEM((p_rows, cin), jnp.float32)],
        compiler_params=pltpu.CompilerParams(
            dimension_semantics=("parallel", "arbitrary"),
            vmem_limit_bytes=_VMEM_LIMIT),
    )(x_flat, pool_mat, params['w_cat'], params['scale_cat'], params['shift_cat'],
      mask)

    # ---- Kernel 2: fused upsample + 3x3 conv + BN + leaky, HW-tiled, all parallel ----
    bottleneck = _make_bottleneck_kernel(w_img, tile, halo)

    flops = int(2 * n * hwp * 9 * (cp + cin) * cout
                + 2 * n * num_t * (tile + 2 * halo) * p_rows * cp)
    bytes_accessed = int(
        n * (hwp + 2 * halo * num_t) * cin * 2        # feature tiles + halo re-reads
        + n * p_rows * cp * 2                         # stage activations per batch
        + n * int(m_win_np.size) * 2                  # upsample windows per batch
        + 9 * (cp + cin) * cout * 2                   # 3x3 weights (read once)
        + n * hwp * cout * 4)                         # output

    out = pl.pallas_call(
        bottleneck,
        out_shape=jax.ShapeDtypeStruct((n, hwp, cout), jnp.float32),
        grid=(n, num_t),
        in_specs=[
            pl.BlockSpec((1, p_rows, cp), lambda b, t: (b, 0, 0)),
            pl.BlockSpec((1, tile + 2 * halo, p_rows), lambda b, t: (t, 0, 0)),
            pl.BlockSpec((1, halo, cin),
                         lambda b, t: (b, jnp.maximum(t * r - 1, 0), 0)),
            pl.BlockSpec((1, tile, cin), lambda b, t: (b, t, 0)),
            pl.BlockSpec((1, halo, cin),
                         lambda b, t: (b, jnp.minimum((t + 1) * r, nb_halo - 1), 0)),
            _inv_spec((9, cp, cout), lambda b, t: (0, 0, 0), sb),
            _inv_spec((9, cin, cout), lambda b, t: (0, 0, 0), sb),
            _inv_spec((1, cout), lambda b, t: (0, 0), sb),
            _inv_spec((1, cout), lambda b, t: (0, 0), sb),
        ],
        out_specs=pl.BlockSpec((1, tile, cout), lambda b, t: (b, t, 0)),
        scratch_shapes=[pltpu.VMEM((tile + 2 * halo, cp), jnp.bfloat16),
                        pltpu.VMEM((tile + 2 * halo, cin), jnp.bfloat16)],
        compiler_params=pltpu.CompilerParams(
            dimension_semantics=("parallel", "parallel"),
            vmem_limit_bytes=_VMEM_LIMIT),
        cost_estimate=pl.CostEstimate(flops=flops, transcendentals=0,
                                      bytes_accessed=bytes_accessed),
    )(y_bd, m_win, x_flat, x_flat, x_flat,
      params['w_p'], params['w_f'], params['scale_b'], params['shift_b'])

    # nn.Dropout2d(0.1) is identity in eval mode.
    # Output kept f32 to match the PyTorch module; cast to bf16 here if downstream
    # tolerates it (biggest writeback win on v5e).
    # TODO(synk): InPlaceABNSync training-mode batch-statistic sync is not modeled;
    # BN uses folded running stats (inference semantics).
    out = out[:, :hw, :].reshape(n, h, w_img, cout)
    return jnp.transpose(out, (0, 3, 1, 2))      # NHWC -> NCHW


# ----------------------------------------------------------------------------
# Pure-JAX reference (f32 math over the same bf16-rounded weights/constants)
# ----------------------------------------------------------------------------
def _psp_reference(params, feats_nchw):
    n, cin, h, w_img = feats_nchw.shape
    hw = h * w_img
    cout = params['out_features']
    sizes = params['sizes']
    cp = len(sizes) * cout
    hi = jax.lax.Precision.HIGHEST

    pool_np, up_np, mask_np, _ = _build_psp_constants(h, w_img, sizes, cout)
    pool = jnp.asarray(pool_np, jnp.bfloat16).astype(jnp.float32)
    up = jnp.asarray(up_np, jnp.bfloat16).astype(jnp.float32)
    mask = jnp.asarray(mask_np, jnp.float32)

    x = jnp.transpose(feats_nchw.astype(jnp.bfloat16).astype(jnp.float32),
                      (0, 2, 3, 1)).reshape(n, hw, cin)

    pooled = jnp.einsum('ph,nhc->npc', pool, x, precision=hi)
    pooled = pooled.astype(jnp.bfloat16).astype(jnp.float32)
    y = jnp.einsum('npc,cd->npd', pooled, params['w_cat'].astype(jnp.float32),
                   precision=hi)
    y = y * params['scale_cat'] + params['shift_cat']
    y = jnp.where(y >= 0, y, LEAKY_SLOPE * y)
    y = (y * mask).astype(jnp.bfloat16).astype(jnp.float32)
    priors = jnp.einsum('hp,npd->nhd', up, y, precision=hi)          # (n, hw, cp)
    priors = priors.astype(jnp.bfloat16).astype(jnp.float32)

    cat = jnp.concatenate([priors, x], axis=-1).reshape(n, h, w_img, cp + cin)
    w3 = jnp.concatenate([params['w_p'].astype(jnp.float32),
                          params['w_f'].astype(jnp.float32)], axis=1)  # (9, cp+cin, cout)
    catp = jnp.pad(cat, ((0, 0), (1, 1), (1, 1), (0, 0)))
    out = jnp.zeros((n, h, w_img, cout), jnp.float32)
    t = 0
    for ky in range(3):
        for kx in range(3):
            tap = catp[:, ky:ky + h, kx:kx + w_img, :]
            out = out + jnp.einsum('nhwc,cd->nhwd', tap, w3[t], precision=hi)
            t += 1
    out = out * params['scale_b'].reshape(1, 1, 1, cout) + \
        params['shift_b'].reshape(1, 1, 1, cout)
    out = jnp.where(out >= 0, out, LEAKY_SLOPE * out)
    return jnp.transpose(out, (0, 3, 1, 2))


if __name__ == "__main__":
    key = jax.random.PRNGKey(0)
    k_x, k_p = jax.random.split(key)

    # Small synthetic shapes.  H=W=24 makes HW=576 -> (tile=512, halo=32, padded to
    # 1024, 2 tiles) on all generations, so the multi-tile halo / row-padding path of
    # the bottleneck is exercised by the self-check.  Cout=128 keeps stores lane-dense.
    N, C, H, W = 2, 32, 24, 24
    OUT_FEATURES = 128
    SIZES = (1, 2, 3, 6)

    feats = jax.random.normal(k_x, (N, C, H, W), jnp.float32)
    params = init_psp_params(k_p, C, out_features=OUT_FEATURES, sizes=SIZES)

    try:
        y = jax.block_until_ready(psp_forward(params, feats))
    except Exception:
        # Fallback: identical kernels without the single-buffer pipeline hint.
        y = jax.block_until_ready(
            psp_forward(params, feats, single_buffer_invariants=False))

    assert y.shape == (N, OUT_FEATURES, H, W), y.shape
    assert bool(jnp.all(jnp.isfinite(y)))

    # Sanity check against a pure-JAX f32 reference (bf16 operand rounding only).
    y_ref = jax.block_until_ready(_psp_reference(params, feats))
    rel_err = float(jnp.max(jnp.abs(y - y_ref)) / (jnp.max(jnp.abs(y_ref)) + 1e-6))
    assert rel_err < 5e-2, rel_err

    print("KERNEL_OK")
</pallas_src>

<mosaic_0001>
module attributes {stable_mosaic.version = 11 : i64} {
  func.func @_stage_conv_kernel(%arg0: i32, %arg1: i32, %arg2: memref<1x512x32xbf16, #tpu.memory_space<vmem>>, %arg3: memref<56x512xbf16, #tpu.memory_space<vmem>>, %arg4: memref<32x512xbf16, #tpu.memory_space<vmem>>, %arg5: memref<1x512xf32, #tpu.memory_space<vmem>>, %arg6: memref<1x512xf32, #tpu.memory_space<vmem>>, %arg7: memref<56x512xf32, #tpu.memory_space<vmem>>, %arg8: memref<1x56x512xbf16, #tpu.memory_space<vmem>>, %arg9: memref<56x32xf32, #tpu.memory_space<vmem>>) attributes {dimension_semantics = [#tpu.dimension_semantics<parallel>, #tpu.dimension_semantics<arbitrary>], iteration_bounds = array<i64: 2, 2>, scalar_prefetch = 0 : i64, scratch_operands = 1 : i64, tpu.core_type = #tpu.core_type<tc>, window_params = [{transform_indices = @transform_0, window_bounds = array<i64: 1, 512, 32>}, {transform_indices = @transform_1, window_bounds = array<i64: 56, 512>}, {pipeline_mode = #tpu.pipeline_mode<synchronous>, transform_indices = @transform_2, window_bounds = array<i64: 32, 512>}, {pipeline_mode = #tpu.pipeline_mode<synchronous>, transform_indices = @transform_3, window_bounds = array<i64: 1, 512>}, {pipeline_mode = #tpu.pipeline_mode<synchronous>, transform_indices = @transform_4, window_bounds = array<i64: 1, 512>}, {pipeline_mode = #tpu.pipeline_mode<synchronous>, transform_indices = @transform_5, window_bounds = array<i64: 56, 512>}, {transform_indices = @transform_6, window_bounds = array<i64: 1, 56, 512>}]} {
    %c0_i32 = arith.constant 0 : i32
    %0 = arith.cmpi eq, %arg1, %c0_i32 : i32
    %1 = arith.extui %0 : i1 to i32
    %c0_i32_0 = arith.constant 0 : i32
    %2 = arith.cmpi ne, %1, %c0_i32_0 : i32
    scf.if %2 {
      %cst_10 = arith.constant 0.000000e+00 : f32
      %13 = vector.broadcast %cst_10 : f32 to vector<56x32xf32>
      %c0_11 = arith.constant 0 : index
      %c0_12 = arith.constant 0 : index
      %14 = vector.load %arg9[%c0_11, %c0_12] : memref<56x32xf32, #tpu.memory_space<vmem>>, vector<56x32xf32>
      tpu.vector_store %arg9[%c0_11, %c0_12], %13 {strides = array<i32>} : memref<56x32xf32, #tpu.memory_space<vmem>>, vector<56x32xf32>,
    } else {
    }
    %c0 = arith.constant 0 : index
    %c0_1 = arith.constant 0 : index
    %3 = vector.load %arg9[%c0, %c0_1] : memref<56x32xf32, #tpu.memory_space<vmem>>, vector<56x32xf32>
    %c0_2 = arith.constant 0 : index
    %c0_3 = arith.constant 0 : index
    %4 = vector.load %arg3[%c0_2, %c0_3] : memref<56x512xbf16, #tpu.memory_space<vmem>>, vector<56x512xbf16>
    %c0_4 = arith.constant 0 : index
    %c0_5 = arith.constant 0 : index
    %c0_6 = arith.constant 0 : index
    %5 = vector.load %arg2[%c0_4, %c0_5, %c0_6] : memref<1x512x32xbf16, #tpu.memory_space<vmem>>, vector<1x512x32xbf16>
    %6 = vector.shape_cast %5 : vector<1x512x32xbf16> to vector<512x32xbf16>
    %cst = arith.constant dense<0.000000e+00> : vector<56x32xf32>
    %7 = tpu.matmul %4, %6, %cst {dimension_numbers = #tpu.dot_dimension_numbers<[1], [0], [0], [1], [0, 0, 1, 1], [], []>} : vector<56x512xbf16>, vector<512x32xbf16>, vector<56x32xf32> -> vector<56x32xf32>
    %8 = arith.addf %3, %7 : vector<56x32xf32>
    %c0_7 = arith.constant 0 : index
    %c0_8 = arith.constant 0 : index
    %9 = vector.load %arg9[%c0_7, %c0_8] : memref<56x32xf32, #tpu.memory_space<vmem>>, vector<56x32xf32>
    tpu.vector_store %arg9[%c0_7, %c0_8], %8 {strides = array<i32>} : memref<56x32xf32, #tpu.memory_space<vmem>>, vector<56x32xf32>,
    %c1_i32 = arith.constant 1 : i32
    %10 = arith.cmpi eq, %arg1, %c1_i32 : i32
    %11 = arith.extui %10 : i1 to i32
    %c0_i32_9 = arith.constant 0 : i32
    %12 = arith.cmpi ne, %11, %c0_i32_9 : i32
    scf.if %12 {
      %c0_10 = arith.constant 0 : index
      %c0_11 = arith.constant 0 : index
      %13 = vector.load %arg9[%c0_10, %c0_11] : memref<56x32xf32, #tpu.memory_space<vmem>>, vector<56x32xf32>
      %14 = arith.truncf %13 : vector<56x32xf32> to vector<56x32xbf16>
      %c0_12 = arith.constant 0 : index
      %c0_13 = arith.constant 0 : index
      %15 = vector.load %arg4[%c0_12, %c0_13] : memref<32x512xbf16, #tpu.memory_space<vmem>>, vector<32x512xbf16>
      %cst_14 = arith.constant dense<0.000000e+00> : vector<56x512xf32>
      %16 = tpu.matmul %14, %15, %cst_14 {dimension_numbers = #tpu.dot_dimension_numbers<[1], [0], [0], [1], [0, 0, 1, 1], [], []>} : vector<56x32xbf16>, vector<32x512xbf16>, vector<56x512xf32> -> vector<56x512xf32>
      %c0_15 = arith.constant 0 : index
      %c0_16 = arith.constant 0 : index
      %17 = vector.load %arg5[%c0_15, %c0_16] : memref<1x512xf32, #tpu.memory_space<vmem>>, vector<1x512xf32>
      %18 = vector.broadcast %17 : vector<1x512xf32> to vector<56x512xf32>
      %19 = arith.mulf %16, %18 : vector<56x512xf32>
      %c0_17 = arith.constant 0 : index
      %c0_18 = arith.constant 0 : index
      %20 = vector.load %arg6[%c0_17, %c0_18] : memref<1x512xf32, #tpu.memory_space<vmem>>, vector<1x512xf32>
      %21 = vector.broadcast %20 : vector<1x512xf32> to vector<56x512xf32>
      %22 = arith.addf %19, %21 : vector<56x512xf32>
      %cst_19 = arith.constant 0.000000e+00 : f32
      %23 = vector.broadcast %cst_19 : f32 to vector<56x512xf32>
      %24 = arith.cmpf oge, %22, %23 : vector<56x512xf32>
      %cst_20 = arith.constant 0.00999999977 : f32
      %25 = vector.broadcast %cst_20 : f32 to vector<56x512xf32>
      %26 = arith.mulf %25, %22 : vector<56x512xf32>
      %27 = arith.select %24, %22, %26 : vector<56x512xi1>, vector<56x512xf32>
      %c0_21 = arith.constant 0 : index
      %c0_22 = arith.constant 0 : index
      %28 = vector.load %arg7[%c0_21, %c0_22] : memref<56x512xf32, #tpu.memory_space<vmem>>, vector<56x512xf32>
      %29 = arith.mulf %27, %28 : vector<56x512xf32>
      %30 = arith.truncf %29 : vector<56x512xf32> to vector<56x512xbf16>
      %c0_23 = arith.constant 0 : index
      %c0_24 = arith.constant 0 : index
      %c0_25 = arith.constant 0 : index
      %31 = vector.load %arg8[%c0_23, %c0_24, %c0_25] : memref<1x56x512xbf16, #tpu.memory_space<vmem>>, vector<1x56x512xbf16>
      %32 = vector.shape_cast %31 : vector<1x56x512xbf16> to vector<56x512xbf16>
      %33 = vector.shape_cast %30 : vector<56x512xbf16> to vector<1x56x512xbf16>
      tpu.vector_store %arg8[%c0_23, %c0_24, %c0_25], %33 {strides = array<i32>} : memref<1x56x512xbf16, #tpu.memory_space<vmem>>, vector<1x56x512xbf16>,
    } else {
    }
    return
  }
  func.func @transform_0(%arg0: i32, %arg1: i32) -> (i32, i32, i32) {
    %c0_i32 = arith.constant 0 : i32
    %c0_i32_0 = arith.constant 0 : i32
    return %arg0, %arg1, %c0_i32 : i32, i32, i32
  }
  func.func @transform_1(%arg0: i32, %arg1: i32) -> (i32, i32) {
    %c0_i32 = arith.constant 0 : i32
    %c0_i32_0 = arith.constant 0 : i32
    return %c0_i32, %arg1 : i32, i32
  }
  func.func @transform_2(%arg0: i32, %arg1: i32) -> (i32, i32) {
    %c0_i32 = arith.constant 0 : i32
    %c0_i32_0 = arith.constant 0 : i32
    %c0_i32_1 = arith.constant 0 : i32
    return %c0_i32, %c0_i32_0 : i32, i32
  }
  func.func @transform_3(%arg0: i32, %arg1: i32) -> (i32, i32) {
    %c0_i32 = arith.constant 0 : i32
    %c0_i32_0 = arith.constant 0 : i32
    %c0_i32_1 = arith.constant 0 : i32
    return %c0_i32, %c0_i32_0 : i32, i32
  }
  func.func @transform_4(%arg0: i32, %arg1: i32) -> (i32, i32) {
    %c0_i32 = arith.constant 0 : i32
    %c0_i32_0 = arith.constant 0 : i32
    %c0_i32_1 = arith.constant 0 : i32
    return %c0_i32, %c0_i32_0 : i32, i32
  }
  func.func @transform_5(%arg0: i32, %arg1: i32) -> (i32, i32) {
    %c0_i32 = arith.constant 0 : i32
    %c0_i32_0 = arith.constant 0 : i32
    %c0_i32_1 = arith.constant 0 : i32
    return %c0_i32, %c0_i32_0 : i32, i32
  }
  func.func @transform_6(%arg0: i32, %arg1: i32) -> (i32, i32, i32) {
    %c0_i32 = arith.constant 0 : i32
    %c0_i32_0 = arith.constant 0 : i32
    %c0_i32_1 = arith.constant 0 : i32
    return %arg0, %c0_i32, %c0_i32_0 : i32, i32, i32
  }
}

module attributes {stable_mosaic.version = 11 : i64} {
  func.func @_stage_conv_kernel(%arg0: i32, %arg1: i32, %arg2: memref<1x512x32xbf16, #tpu.memory_space<vmem>>, %arg3: memref<56x512xbf16, #tpu.memory_space<vmem>>, %arg4: memref<32x512xbf16, #tpu.memory_space<vmem>>, %arg5: memref<1x512xf32, #tpu.memory_space<vmem>>, %arg6: memref<1x512xf32, #tpu.memory_space<vmem>>, %arg7: memref<56x512xf32, #tpu.memory_space<vmem>>, %arg8: memref<1x56x512xbf16, #tpu.memory_space<vmem>>, %arg9: memref<56x32xf32, #tpu.memory_space<vmem>>) attributes {dimension_semantics = [#tpu.dimension_semantics<parallel>, #tpu.dimension_semantics<arbitrary>], iteration_bounds = array<i64: 2, 2>, scalar_prefetch = 0 : i64, scratch_operands = 1 : i64, tpu.core_type = #tpu.core_type<tc>, window_params = [{transform_indices = @transform_0, window_bounds = array<i64: 1, 512, 32>}, {transform_indices = @transform_1, window_bounds = array<i64: 56, 512>}, {pipeline_mode = #tpu.pipeline_mode<synchronous>, transform_indices = @transform_2, window_bounds = array<i64: 32, 512>}, {pipeline_mode = #tpu.pipeline_mode<synchronous>, transform_indices = @transform_3, window_bounds = array<i64: 1, 512>}, {pipeline_mode = #tpu.pipeline_mode<synchronous>, transform_indices = @transform_4, window_bounds = array<i64: 1, 512>}, {pipeline_mode = #tpu.pipeline_mode<synchronous>, transform_indices = @transform_5, window_bounds = array<i64: 56, 512>}, {transform_indices = @transform_6, window_bounds = array<i64: 1, 56, 512>}]} {
    %c0_i32 = arith.constant 0 : i32
    %0 = arith.cmpi eq, %arg1, %c0_i32 : i32
    %1 = arith.extui %0 : i1 to i32
    %c0_i32_0 = arith.constant 0 : i32
    %2 = arith.cmpi ne, %1, %c0_i32_0 : i32
    scf.if %2 {
      %cst_10 = arith.constant 0.000000e+00 : f32
      %13 = vector.broadcast %cst_10 : f32 to vector<56x32xf32>
      %c0_11 = arith.constant 0 : index
      %c0_12 = arith.constant 0 : index
      %14 = vector.load %arg9[%c0_11, %c0_12] : memref<56x32xf32, #tpu.memory_space<vmem>>, vector<56x32xf32>
      tpu.vector_store %arg9[%c0_11, %c0_12], %13 {strides = array<i32>} : memref<56x32xf32, #tpu.memory_space<vmem>>, vector<56x32xf32>,
    } else {
    }
    %c0 = arith.constant 0 : index
    %c0_1 = arith.constant 0 : index
    %3 = vector.load %arg9[%c0, %c0_1] : memref<56x32xf32, #tpu.memory_space<vmem>>, vector<56x32xf32>
    %c0_2 = arith.constant 0 : index
    %c0_3 = arith.constant 0 : index
    %4 = vector.load %arg3[%c0_2, %c0_3] : memref<56x512xbf16, #tpu.memory_space<vmem>>, vector<56x512xbf16>
    %c0_4 = arith.constant 0 : index
    %c0_5 = arith.constant 0 : index
    %c0_6 = arith.constant 0 : index
    %5 = vector.load %arg2[%c0_4, %c0_5, %c0_6] : memref<1x512x32xbf16, #tpu.memory_space<vmem>>, vector<1x512x32xbf16>
    %6 = vector.shape_cast %5 : vector<1x512x32xbf16> to vector<512x32xbf16>
    %cst = arith.constant dense<0.000000e+00> : vector<56x32xf32>
    %7 = tpu.matmul %4, %6, %cst {dimension_numbers = #tpu.dot_dimension_numbers<[1], [0], [0], [1], [0, 0, 1, 1], [], []>} : vector<56x512xbf16>, vector<512x32xbf16>, vector<56x32xf32> -> vector<56x32xf32>
    %8 = arith.addf %3, %7 : vector<56x32xf32>
    %c0_7 = arith.constant 0 : index
    %c0_8 = arith.constant 0 : index
    %9 = vector.load %arg9[%c0_7, %c0_8] : memref<56x32xf32, #tpu.memory_space<vmem>>, vector<56x32xf32>
    tpu.vector_store %arg9[%c0_7, %c0_8], %8 {strides = array<i32>} : memref<56x32xf32, #tpu.memory_space<vmem>>, vector<56x32xf32>,
    %c1_i32 = arith.constant 1 : i32
    %10 = arith.cmpi eq, %arg1, %c1_i32 : i32
    %11 = arith.extui %10 : i1 to i32
    %c0_i32_9 = arith.constant 0 : i32
    %12 = arith.cmpi ne, %11, %c0_i32_9 : i32
    scf.if %12 {
      %c0_10 = arith.constant 0 : index
      %c0_11 = arith.constant 0 : index
      %13 = vector.load %arg9[%c0_10, %c0_11] : memref<56x32xf32, #tpu.memory_space<vmem>>, vector<56x32xf32>
      %14 = arith.truncf %13 : vector<56x32xf32> to vector<56x32xbf16>
      %c0_12 = arith.constant 0 : index
      %c0_13 = arith.constant 0 : index
      %15 = vector.load %arg4[%c0_12, %c0_13] : memref<32x512xbf16, #tpu.memory_space<vmem>>, vector<32x512xbf16>
      %cst_14 = arith.constant dense<0.000000e+00> : vector<56x512xf32>
      %16 = tpu.matmul %14, %15, %cst_14 {dimension_numbers = #tpu.dot_dimension_numbers<[1], [0], [0], [1], [0, 0, 1, 1], [], []>} : vector<56x32xbf16>, vector<32x512xbf16>, vector<56x512xf32> -> vector<56x512xf32>
      %c0_15 = arith.constant 0 : index
      %c0_16 = arith.constant 0 : index
      %17 = vector.load %arg5[%c0_15, %c0_16] : memref<1x512xf32, #tpu.memory_space<vmem>>, vector<1x512xf32>
      %18 = vector.broadcast %17 : vector<1x512xf32> to vector<56x512xf32>
      %19 = arith.mulf %16, %18 : vector<56x512xf32>
      %c0_17 = arith.constant 0 : index
      %c0_18 = arith.constant 0 : index
      %20 = vector.load %arg6[%c0_17, %c0_18] : memref<1x512xf32, #tpu.memory_space<vmem>>, vector<1x512xf32>
      %21 = vector.broadcast %20 : vector<1x512xf32> to vector<56x512xf32>
      %22 = arith.addf %19, %21 : vector<56x512xf32>
      %cst_19 = arith.constant 0.000000e+00 : f32
      %23 = vector.broadcast %cst_19 : f32 to vector<56x512xf32>
      %24 = arith.cmpf oge, %22, %23 : vector<56x512xf32>
      %cst_20 = arith.constant 0.00999999977 : f32
      %25 = vector.broadcast %cst_20 : f32 to vector<56x512xf32>
      %26 = arith.mulf %25, %22 : vector<56x512xf32>
      %27 = arith.select %24, %22, %26 : vector<56x512xi1>, vector<56x512xf32>
      %c0_21 = arith.constant 0 : index
      %c0_22 = arith.constant 0 : index
      %28 = vector.load %arg7[%c0_21, %c0_22] : memref<56x512xf32, #tpu.memory_space<vmem>>, vector<56x512xf32>
      %29 = arith.mulf %27, %28 : vector<56x512xf32>
      %30 = arith.truncf %29 : vector<56x512xf32> to vector<56x512xbf16>
      %c0_23 = arith.constant 0 : index
      %c0_24 = arith.constant 0 : index
      %c0_25 = arith.constant 0 : index
      %31 = vector.load %arg8[%c0_23, %c0_24, %c0_25] : memref<1x56x512xbf16, #tpu.memory_space<vmem>>, vector<1x56x512xbf16>
      %32 = vector.shape_cast %31 : vector<1x56x512xbf16> to vector<56x512xbf16>
      %33 = vector.shape_cast %30 : vector<56x512xbf16> to vector<1x56x512xbf16>
      tpu.vector_store %arg8[%c0_23, %c0_24, %c0_25], %33 {strides = array<i32>} : memref<1x56x512xbf16, #tpu.memory_space<vmem>>, vector<1x56x512xbf16>,
    } else {
    }
    return
  }
  func.func @transform_0(%arg0: i32, %arg1: i32) -> (i32, i32, i32) {
    %c0_i32 = arith.constant 0 : i32
    %c0_i32_0 = arith.constant 0 : i32
    return %arg0, %arg1, %c0_i32 : i32, i32, i32
  }
  func.func @transform_1(%arg0: i32, %arg1: i32) -> (i32, i32) {
    %c0_i32 = arith.constant 0 : i32
    %c0_i32_0 = arith.constant 0 : i32
    return %c0_i32, %arg1 : i32, i32
  }
  func.func @transform_2(%arg0: i32, %arg1: i32) -> (i32, i32) {
    %c0_i32 = arith.constant 0 : i32
    %c0_i32_0 = arith.constant 0 : i32
    %c0_i32_1 = arith.constant 0 : i32
    return %c0_i32, %c0_i32_0 : i32, i32
  }
  func.func @transform_3(%arg0: i32, %arg1: i32) -> (i32, i32) {
    %c0_i32 = arith.constant 0 : i32
    %c0_i32_0 = arith.constant 0 : i32
    %c0_i32_1 = arith.constant 0 : i32
    return %c0_i32, %c0_i32_0 : i32, i32
  }
  func.func @transform_4(%arg0: i32, %arg1: i32) -> (i32, i32) {
    %c0_i32 = arith.constant 0 : i32
    %c0_i32_0 = arith.constant 0 : i32
    %c0_i32_1 = arith.constant 0 : i32
    return %c0_i32, %c0_i32_0 : i32, i32
  }
  func.func @transform_5(%arg0: i32, %arg1: i32) -> (i32, i32) {
    %c0_i32 = arith.constant 0 : i32
    %c0_i32_0 = arith.constant 0 : i32
    %c0_i32_1 = arith.constant 0 : i32
    return %c0_i32, %c0_i32_0 : i32, i32
  }
  func.func @transform_6(%arg0: i32, %arg1: i32) -> (i32, i32, i32) {
    %c0_i32 = arith.constant 0 : i32
    %c0_i32_0 = arith.constant 0 : i32
    %c0_i32_1 = arith.constant 0 : i32
    return %arg0, %c0_i32, %c0_i32_0 : i32, i32, i32
  }
}

</mosaic_0001>

<llo_original>
// kernel: tpu_custom_call.1
$region0: #{tpu_custom_call.1}
  #allocation0 [shape = 'u32[]', space=smem, size = 0x4, offset = 0x4, fixed_abs, tag = 'smem constant byte address 0x4 - core index']
  #allocation1 [shape = 'u32[144,128]{1,0:T(1,128)}', space=vmem, size = 0x12000, scoped, tag = 'internal scratch']
  #allocation2 [shape = 'f32[56,32]{1,0:T(8,128)}', space=vmem, size = 0x7000, scoped, tag = 'scratch operand']
  %s0 = inlined_call_operand.vmem [shape: bf16[2,1024,32], index: 0, kind: input, shape index: {}]
  %s1 = inlined_call_operand.vmem [shape: bf16[56,1024], index: 1, kind: input, shape index: {}]
  %s2 = inlined_call_operand.vmem [shape: bf16[32,512], index: 2, kind: input, shape index: {}]
  %s3 = inlined_call_operand.vmem [shape: f32[1,512], index: 3, kind: input, shape index: {}]
  %s4 = inlined_call_operand.vmem [shape: f32[1,512], index: 4, kind: input, shape index: {}]
  %s5 = inlined_call_operand.vmem [shape: f32[56,512], index: 5, kind: input, shape index: {}]
  %s6 = inlined_call_operand.hbm [shape: bf16[2,56,512], index: 6, kind: output, shape index: {}]
  %s7 = sld [smem:[#allocation0]]
  $region88: #{tpu_custom_call.1} parent=0
    _
  %s9 = ssub.s32 1, %s7
  %s10 = scalar_select 0, %s9, %s7
  $region1: #{tpu_custom_call.1} parent=0
    #allocation3 [shape = 'u8[114688]{0}', space=vmem, size = 0x1c000, scoped, tag = 'input window, operand 1']
    #allocation4 [shape = 'u8[114688]{0}', space=vmem, size = 0x1c000, scoped, tag = 'output window, operand 0']
    #allocation5 [shape = 's32[2]{0}', space=sflag, size = 0x8, scoped, tag = 'scoped memory for tpu_custom_call.1']
    %11 = vsyncpa [#allocation5], 0
    %s12 = scalar_lea.sflag [#allocation5], 1
    %13 = vsyncpa %s12, 0
    loop: start=0, step=1, limit=6
    $region2: #{tpu_custom_call.1} parent=1 // loop_pre_header
      _
    $region3: #{tpu_custom_call.1} parent=1 // loop_header
      %s15 = sphi 0, %s19
      %p16 = scmp.ge.s32.totalorder %s15, 6
      %s22 = sphi 0, %s34
      %s23 = sphi 0, %s30
      %s24 = sphi 0, %s22
      %s25 = sphi 0, %s23
      %s26 = sphi 0, %s24
      %s27 = sphi 0, %s25
      %s39 = sphi 0, %s41
      %s42 = sphi 0, %s39
      %s43 = sphi 0, %s42
      %s59 = sphi 0, %s43
      %s65 = sphi 0, %s67
      %s68 = sphi 0, %s65
      %s69 = sphi 0, %s68
      %s85 = sphi 0, %s69
      %s89 = sphi 0, %s89
      %s91 = sphi 0, %s89
      %s92 = sphi 0, %s91
      %s106 = sphi 0, %s92
      %s110 = sphi 0, %s110
      %s112 = sphi 0, %s110
      %s113 = sphi 0, %s112
      %s127 = sphi 0, %s113
      %s131 = sphi 0, %s131
      %s133 = sphi 0, %s131
      %s134 = sphi 0, %s133
      %s148 = sphi 0, %s134
      %s152 = sphi 0, %s152
      %s154 = sphi 0, %s152
      %s155 = sphi 0, %s154
      %s169 = sphi 0, %s155
      %s175 = sphi 0, %s177
      %s178 = sphi 0, %s175
      %s179 = sphi 0, %s178
      %s195 = sphi 0, %s179
    $region4: #{tpu_custom_call.1} parent=1 // loop_header_branch
      %18 = sbr.rel (%p16) target = $region8
    $region5: #{tpu_custom_call.1} parent=1 // loop_body
      %s20 = ssub.s32 %s15, 1
      %s21 = ssub.s32 %s15, 2
      %s28 = sadd.s32 1, %s23
      %p29 = scmp.ge.s32.totalorder %s28, 2
      %s30 = scalar_select %p29, 0, %s28
      %s31 = sadd.s32 1, %s22
      %s32 = scalar_select %p29, %s31, %s22
      %p33 = scmp.ge.s32.totalorder %s32, 2
      %s34 = scalar_select %p33, 0, %s32
      %s35 = ssub.s32 %s22, %s34
      %s36 = ssub.s32 %s23, %s30
      %s37 = sor.u32 %s35, %s36
      %p38 = scmp.eq.s32.totalorder %s37, 0
      %s40 = sadd.s32 %s39, 1
      %s41 = scalar_select %p38, %s39, %s40
      %p44 = pneg %p38
      %p45 = scmp.eq.s32.totalorder %s15, 3
      %p46 = por %p44, %p45
      %p47 = scmp.ne.s32.totalorder %s39, %s42
      %p48 = scmp.eq.s32.totalorder %s15, 0
      %p49 = por %p47, %p48
      %p50 = scmp.ne.s32.totalorder %s39, %s42
      %p51 = scmp.eq.s32.totalorder %s20, 3
      %p52 = por %p50, %p51
      %p53 = scmp.ne.s32.totalorder %s42, %s43
      %p54 = scmp.eq.s32.totalorder %s20, 0
      %p55 = por %p53, %p54
      %p56 = scmp.ne.s32.totalorder %s42, %s43
      %p57 = scmp.eq.s32.totalorder %s21, 3
      %p58 = por %p56, %p57
      %p60 = scmp.ne.s32.totalorder %s43, %s59
      %p61 = scmp.eq.s32.totalorder %s21, 0
      %p62 = por %p60, %p61
      %s63 = ssub.s32 %s23, %s30
      %p64 = scmp.eq.s32.totalorder %s63, 0
      %s66 = sadd.s32 %s65, 1
      %s67 = scalar_select %p64, %s65, %s66
      %p70 = pneg %p64
      %p71 = scmp.eq.s32.totalorder %s15, 3
      %p72 = por %p70, %p71
      %p73 = scmp.ne.s32.totalorder %s65, %s68
      %p74 = scmp.eq.s32.totalorder %s15, 0
      %p75 = por %p73, %p74
      %p76 = scmp.ne.s32.totalorder %s65, %s68
      %p77 = scmp.eq.s32.totalorder %s20, 3
      %p78 = por %p76, %p77
      %p79 = scmp.ne.s32.totalorder %s68, %s69
      %p80 = scmp.eq.s32.totalorder %s20, 0
      %p81 = por %p79, %p80
      %p82 = scmp.ne.s32.totalorder %s68, %s69
      %p83 = scmp.eq.s32.totalorder %s21, 3
      %p84 = por %p82, %p83
      %p86 = scmp.ne.s32.totalorder %s69, %s85
      %p87 = scmp.eq.s32.totalorder %s21, 0
      %p88 = por %p86, %p87
      %s90 = sadd.s32 %s89, 1
      %p93 = scmp.eq.s32.totalorder %s15, 3
      %p94 = scmp.ne.s32.totalorder %s89, %s91
      %p95 = scmp.eq.s32.totalorder %s15, 0
      %p96 = por %p94, %p95
      %p97 = scmp.ne.s32.totalorder %s89, %s91
      %p98 = scmp.eq.s32.totalorder %s20, 3
      %p99 = por %p97, %p98
      %p100 = scmp.ne.s32.totalorder %s91, %s92
      %p101 = scmp.eq.s32.totalorder %s20, 0
      %p102 = por %p100, %p101
      %p103 = scmp.ne.s32.totalorder %s91, %s92
      %p104 = scmp.eq.s32.totalorder %s21, 3
      %p105 = por %p103, %p104
      %p107 = scmp.ne.s32.totalorder %s92, %s106
      %p108 = scmp.eq.s32.totalorder %s21, 0
      %p109 = por %p107, %p108
      %s111 = sadd.s32 %s110, 1
      %p114 = scmp.eq.s32.totalorder %s15, 3
      %p115 = scmp.ne.s32.totalorder %s110, %s112
      %p116 = scmp.eq.s32.totalorder %s15, 0
      %p117 = por %p115, %p116
      %p118 = scmp.ne.s32.totalorder %s110, %s112
      %p119 = scmp.eq.s32.totalorder %s20, 3
      %p120 = por %p118, %p119
      %p121 = scmp.ne.s32.totalorder %s112, %s113
      %p122 = scmp.eq.s32.totalorder %s20, 0
      %p123 = por %p121, %p122
      %p124 = scmp.ne.s32.totalorder %s112, %s113
      %p125 = scmp.eq.s32.totalorder %s21, 3
      %p126 = por %p124, %p125
      %p128 = scmp.ne.s32.totalorder %s113, %s127
      %p129 = scmp.eq.s32.totalorder %s21, 0
      %p130 = por %p128, %p129
      %s132 = sadd.s32 %s131, 1
      %p135 = scmp.eq.s32.totalorder %s15, 3
      %p136 = scmp.ne.s32.totalorder %s131, %s133
      %p137 = scmp.eq.s32.totalorder %s15, 0
      %p138 = por %p136, %p137
      %p139 = scmp.ne.s32.totalorder %s131, %s133
      %p140 = scmp.eq.s32.totalorder %s20, 3
      %p141 = por %p139, %p140
      %p142 = scmp.ne.s32.totalorder %s133, %s134
      %p143 = scmp.eq.s32.totalorder %s20, 0
      %p144 = por %p142, %p143
      %p145 = scmp.ne.s32.totalorder %s133, %s134
      %p146 = scmp.eq.s32.totalorder %s21, 3
      %p147 = por %p145, %p146
      %p149 = scmp.ne.s32.totalorder %s134, %s148
      %p150 = scmp.eq.s32.totalorder %s21, 0
      %p151 = por %p149, %p150
      %s153 = sadd.s32 %s152, 1
      %p156 = scmp.eq.s32.totalorder %s15, 3
      %p157 = scmp.ne.s32.totalorder %s152, %s154
      %p158 = scmp.eq.s32.totalorder %s15, 0
      %p159 = por %p157, %p158
      %p160 = scmp.ne.s32.totalorder %s152, %s154
      %p161 = scmp.eq.s32.totalorder %s20, 3
      %p162 = por %p160, %p161
      %p163 = scmp.ne.s32.totalorder %s154, %s155
      %p164 = scmp.eq.s32.totalorder %s20, 0
      %p165 = por %p163, %p164
      %p166 = scmp.ne.s32.totalorder %s154, %s155
      %p167 = scmp.eq.s32.totalorder %s21, 3
      %p168 = por %p166, %p167
      %p170 = scmp.ne.s32.totalorder %s155, %s169
      %p171 = scmp.eq.s32.totalorder %s21, 0
      %p172 = por %p170, %p171
      %s173 = ssub.s32 %s22, %s34
      %p174 = scmp.eq.s32.totalorder %s173, 0
      %s176 = sadd.s32 %s175, 1
      %s177 = scalar_select %p174, %s175, %s176
      %p180 = pneg %p174
      %p181 = scmp.eq.s32.totalorder %s15, 3
      %p182 = por %p180, %p181
      %p183 = scmp.ne.s32.totalorder %s175, %s178
      %p184 = scmp.eq.s32.totalorder %s15, 0
      %p185 = por %p183, %p184
      %p186 = scmp.ne.s32.totalorder %s175, %s178
      %p187 = scmp.eq.s32.totalorder %s20, 3
      %p188 = por %p186, %p187
      %p189 = scmp.ne.s32.totalorder %s178, %s179
      %p190 = scmp.eq.s32.totalorder %s20, 0
      %p191 = por %p189, %p190
      %p192 = scmp.ne.s32.totalorder %s178, %s179
      %p193 = scmp.eq.s32.totalorder %s21, 3
      %p194 = por %p192, %p193
      %p196 = scmp.ne.s32.totalorder %s179, %s195
      %p197 = scmp.eq.s32.totalorder %s21, 0
      %p198 = por %p196, %p197
      %p199 = scmp.le.s32.totalorder 1, %s15
      %p200 = scmp.lt.s32.totalorder %s15, 5
      %p201 = pnand %p199, %p200
      %p202 = pneg %p201
      // Predicated region
      $region9: #{tpu_custom_call.1} parent=5 // pred_check
        _
      $region10: #{tpu_custom_call.1} parent=5 // pred_check_branch
        %204 = sbr.rel (%p201) target = $region12
      $region11: #{tpu_custom_call.1} parent=5 // pred_region
        %s205 = ssub.s32 %s15, 1
        // Predicated region
        $region13: #{tpu_custom_call.1} parent=11 // pred_check
          %p206 = pneg %p102
        $region14: #{tpu_custom_call.1} parent=11 // pred_check_branch
          %208 = sbr.rel (%p206) target = $region16
        $region15: #{tpu_custom_call.1} parent=11 // pred_region
          _
        $region16: #{tpu_custom_call.1} parent=11 // pred_fallthru
          _
        // Predicated region
        $region17: #{tpu_custom_call.1} parent=11 // pred_check
          %p209 = pneg %p123
        $region18: #{tpu_custom_call.1} parent=11 // pred_check_branch
          %211 = sbr.rel (%p209) target = $region20
        $region19: #{tpu_custom_call.1} parent=11 // pred_region
          _
        $region20: #{tpu_custom_call.1} parent=11 // pred_fallthru
          _
        // Predicated region
        $region21: #{tpu_custom_call.1} parent=11 // pred_check
          %p212 = pneg %p144
        $region22: #{tpu_custom_call.1} parent=11 // pred_check_branch
          %214 = sbr.rel (%p212) target = $region24
        $region23: #{tpu_custom_call.1} parent=11 // pred_region
          _
        $region24: #{tpu_custom_call.1} parent=11 // pred_fallthru
          _
        // Predicated region
        $region25: #{tpu_custom_call.1} parent=11 // pred_check
          %p215 = pneg %p165
        $region26: #{tpu_custom_call.1} parent=11 // pred_check_branch
          %217 = sbr.rel (%p215) target = $region28
        $region27: #{tpu_custom_call.1} parent=11 // pred_region
          _
        $region28: #{tpu_custom_call.1} parent=11 // pred_fallthru
          _
      $region12: #{tpu_custom_call.1} parent=5 // pred_fallthru
        _
      %p218 = scmp.lt.s32.totalorder %s15, 4
      // Predicated region
      $region29: #{tpu_custom_call.1} parent=5 // pred_check
        %p219 = pneg %p218
      $region30: #{tpu_custom_call.1} parent=5 // pred_check_branch
        %221 = sbr.rel (%p219) target = $region32
      $region31: #{tpu_custom_call.1} parent=5 // pred_region
        // Predicated region
        $region33: #{tpu_custom_call.1} parent=31 // pred_check
          %p222 = pneg %p49
        $region34: #{tpu_custom_call.1} parent=31 // pred_check_branch
          %224 = sbr.rel (%p222) target = $region36
        $region35: #{tpu_custom_call.1} parent=31 // pred_region
          %s225 = smul.u32 64, %s23
          %p226 = scmp.lt.s32.totalorder %s22, 1
          %s227 = scalar_select %p226, %s22, 1
          %p228 = scmp.lt.s32.totalorder %s225, 127
          %s229 = scalar_select %p228, %s225, 127
          %s230 = smul.addr %s227, 128
          %s231 = sadd.s32 %s229, %s230
          %s232 = smul.addr %s231, 4
          %s233 = scalar_lea.vmem %s0, %s232
          %s234 = smul.u32 64, %s23
        $region36: #{tpu_custom_call.1} parent=31 // pred_fallthru
          _
        // Predicated region
        $region37: #{tpu_custom_call.1} parent=31 // pred_check
          %p235 = pneg %p75
        $region38: #{tpu_custom_call.1} parent=31 // pred_check_branch
          %237 = sbr.rel (%p235) target = $region40
        $region39: #{tpu_custom_call.1} parent=31 // pred_region
          %s238 = sand.u32 %s65, 1
          %s239 = sand.u32 %s65, 1
          %s240 = smul.addr %s239, 112
          %s241 = scalar_lea.vmem [#allocation3], %s240
          %s242 = smul.u32 4, %s23
          %s243 = smul.addr %s242, 4
          %s244 = scalar_lea.vmem %s1, %s243
          // Predicated region
          $region41: #{tpu_custom_call.1} parent=39 // pred_check
            _
          $region42: #{tpu_custom_call.1} parent=39 // pred_check_branch
            %246 = sbr.rel (0) target = $region44
          $region43: #{tpu_custom_call.1} parent=39 // pred_region
            // Predicated region
            $region45: #{tpu_custom_call.1} parent=43 // pred_check
              _
            $region46: #{tpu_custom_call.1} parent=43 // pred_check_branch
              %248 = sbr.rel (0) target = $region48
            $region47: #{tpu_custom_call.1} parent=43 // pred_region
              loop: start=0, step=1, limit=1
              $region49: #{tpu_custom_call.1} parent=47 // loop_pre_header
                _
              $region50: #{tpu_custom_call.1} parent=47 // loop_header
                %s250 = sphi 0, %s254
                %p251 = scmp.ge.s32.totalorder %s250, 1
                %s255 = sphi %s244, %s244
                %s256 = sphi %s241, %s241
              $region51: #{tpu_custom_call.1} parent=47 // loop_header_branch
                %253 = sbr.rel (%p251) target = $region55
              $region52: #{tpu_custom_call.1} parent=47 // loop_body
                %v257 = vld [vmem:[%s255] sm:$0xff]
                %258 = vst [vmem:[%s256] sm:$0xff] %v257
                %v259 = vld [vmem:[%s255 + $0x8] sm:$0xff]
                %260 = vst [vmem:[%s256 + $0x8] sm:$0xff] %v259
                %v261 = vld [vmem:[%s255 + $0x20] sm:$0xff]
                %262 = vst [vmem:[%s256 + $0x10] sm:$0xff] %v261
                %v263 = vld [vmem:[%s255 + $0x28] sm:$0xff]
                %264 = vst [vmem:[%s256 + $0x18] sm:$0xff] %v263
                %v265 = vld [vmem:[%s255 + $0x40] sm:$0xff]
                %266 = vst [vmem:[%s256 + $0x20] sm:$0xff] %v265
                %v267 = vld [vmem:[%s255 + $0x48] sm:$0xff]
                %268 = vst [vmem:[%s256 + $0x28] sm:$0xff] %v267
                %v269 = vld [vmem:[%s255 + $0x60] sm:$0xff]
                %270 = vst [vmem:[%s256 + $0x30] sm:$0xff] %v269
                %v271 = vld [vmem:[%s255 + $0x68] sm:$0xff]
                %272 = vst [vmem:[%s256 + $0x38] sm:$0xff] %v271
                %v273 = vld [vmem:[%s255 + $0x80] sm:$0xff]
                %274 = vst [vmem:[%s256 + $0x40] sm:$0xff] %v273
                %v275 = vld [vmem:[%s255 + $0x88] sm:$0xff]
                %276 = vst [vmem:[%s256 + $0x48] sm:$0xff] %v275
                %v277 = vld [vmem:[%s255 + $0xa0] sm:$0xff]
                %278 = vst [vmem:[%s256 + $0x50] sm:$0xff] %v277
                %v279 = vld [vmem:[%s255 + $0xa8] sm:$0xff]
                %280 = vst [vmem:[%s256 + $0x58] sm:$0xff] %v279
                %v281 = vld [vmem:[%s255 + $0xc0] sm:$0xff]
                %282 = vst [vmem:[%s256 + $0x60] sm:$0xff] %v281
                %v283 = vld [vmem:[%s255 + $0xc8] sm:$0xff]
                %284 = vst [vmem:[%s256 + $0x68] sm:$0xff] %v283
              $region53: #{tpu_custom_call.1} parent=47 // loop_footer
                %s254 = sadd.s32 1, %s250
              $region54: #{tpu_custom_call.1} parent=47 // loop_footer_branch
                %249 = sbr.rel target = $region50
              $region55: #{tpu_custom_call.1} parent=47 // loop_exit
                _
            $region48: #{tpu_custom_call.1} parent=43 // pred_fallthru
              _
            // Predicated region
            $region56: #{tpu_custom_call.1} parent=43 // pred_check
              _
            $region57: #{tpu_custom_call.1} parent=43 // pred_check_branch
              %286 = sbr.rel target = $region59
            $region58: #{tpu_custom_call.1} parent=43 // pred_region
              _
            $region59: #{tpu_custom_call.1} parent=43 // pred_fallthru
              _
          $region44: #{tpu_custom_call.1} parent=39 // pred_fallthru
            _
          %287 = vnop
        $region40: #{tpu_custom_call.1} parent=31 // pred_fallthru
          _
      $region32: #{tpu_custom_call.1} parent=5 // pred_fallthru
        _
      %p288 = scmp.le.s32.totalorder 1, %s15
      %p289 = scmp.lt.s32.totalorder %s15, 5
      %p290 = pnand %p288, %p289
      %p291 = pneg %p290
      // Predicated region
      $region60: #{tpu_custom_call.1} parent=5 // pred_check
        _
      $region61: #{tpu_custom_call.1} parent=5 // pred_check_branch
        %293 = sbr.rel (%p290) target = $region63
      $region62: #{tpu_custom_call.1} parent=5 // pred_region
        %s294 = ssub.s32 %s15, 1
        %s295 = sand.u32 %s68, 1
        %s296 = sand.u32 %s68, 1
        %s297 = smul.addr %s296, 112
        %s298 = scalar_lea.vmem [#allocation3], %s297
        // Predicated region
        $region64: #{tpu_custom_call.1} parent=62 // pred_check
          %p299 = pneg %p81
        $region65: #{tpu_custom_call.1} parent=62 // pred_check_branch
          %301 = sbr.rel (%p299) target = $region67
        $region66: #{tpu_custom_call.1} parent=62 // pred_region
          _
        $region67: #{tpu_custom_call.1} parent=62 // pred_fallthru
          _
        %s302 = smul.u32 64, %s25
        %p303 = scmp.lt.s32.totalorder %s24, 1
        %s304 = scalar_select %p303, %s24, 1
        %p305 = scmp.lt.s32.totalorder %s302, 127
        %s306 = scalar_select %p305, %s302, 127
        %s307 = smul.addr %s304, 128
        %s308 = sadd.s32 %s306, %s307
        %s309 = smul.addr %s308, 4
        %s310 = scalar_lea.vmem %s0, %s309
        %p311 = pneg %p55
        %p312 = pneg %p52
        %s313 = sand.u32 %s68, 1
        %s314 = sand.u32 %s68, 1
        %s315 = smul.addr %s314, 112
        %s316 = scalar_lea.vmem [#allocation3], %s315
        %p317 = pneg %p81
        %p318 = pneg %p78
        %p319 = pneg %p102
        %p320 = pneg %p99
        %p321 = pneg %p123
        %p322 = pneg %p120
        %p323 = pneg %p144
        %p324 = pneg %p141
        %p325 = pneg %p165
        %p326 = pneg %p162
        %p327 = pneg %p191
        %p328 = pneg %p188
        %s329 = sand.u32 %s178, 1
        %s330 = scalar_lea.sflag [#allocation5], %s329
        %s331 = sand.u32 %s178, 1
        %s332 = smul.addr %s331, 112
        %s333 = scalar_lea.vmem [#allocation4], %s332
        %s334 = smul.u32 64, %s25
        %p335 = scmp.lt.s32.totalorder %s24, 1
        %s336 = scalar_select %p335, %s24, 1
        %p337 = scmp.lt.s32.totalorder %s334, 127
        %s338 = scalar_select %p337, %s334, 127
        %s339 = smul.addr %s336, 128
        %s340 = sadd.s32 %s338, %s339
        %s341 = smul.addr %s340, 4
        %s342 = scalar_lea.vmem %s0, %s341
        %s343 = smul.u32 64, %s25
        %s344 = smul.u32 4, %s25
        %p346 = scmp.eq.s32.totalorder %s25, 0
        // Predicated region
        $region68: #{tpu_custom_call.1} parent=62 // pred_check
          %p347 = pneg %p346
        $region69: #{tpu_custom_call.1} parent=62 // pred_check_branch
          %349 = sbr.rel (%p347) target = $region71
        $region70: #{tpu_custom_call.1} parent=62 // pred_region
          %vm350 = vcmask 261120
          %351 = vst.msk [vmem:[#allocation2] sm:$0xff] %vm350, 0.0
          %352 = vst.msk [vmem:[#allocation2 + $0x8] sm:$0xff] %vm350, 0.0
          %353 = vst.msk [vmem:[#allocation2 + $0x10] sm:$0xff] %vm350, 0.0
          %354 = vst.msk [vmem:[#allocation2 + $0x18] sm:$0xff] %vm350, 0.0
          %355 = vst.msk [vmem:[#allocation2 + $0x20] sm:$0xff] %vm350, 0.0
          %356 = vst.msk [vmem:[#allocation2 + $0x28] sm:$0xff] %vm350, 0.0
          %357 = vst.msk [vmem:[#allocation2 + $0x30] sm:$0xff] %vm350, 0.0
        $region71: #{tpu_custom_call.1} parent=62 // pred_fallthru
          _
        %v358 = vld [vmem:[#allocation2] sm:$0xff]
        %v359 = vld [vmem:[#allocation2 + $0x8] sm:$0xff]
        %v360 = vld [vmem:[#allocation2 + $0x10] sm:$0xff]
        %v361 = vld [vmem:[#allocation2 + $0x18] sm:$0xff]
        %v362 = vld [vmem:[#allocation2 + $0x20] sm:$0xff]
        %v363 = vld [vmem:[#allocation2 + $0x28] sm:$0xff]
        %v364 = vld [vmem:[#allocation2 + $0x30] sm:$0xff]
        %v365 = vld [vmem:[%s298] sm:$0xff]
        %v366 = vld [vmem:[%s298 + $0x8] sm:$0xff]
        %v367 = vld [vmem:[%s298 + $0x10] sm:$0xff]
        %v368 = vld [vmem:[%s298 + $0x18] sm:$0xff]
        %v369 = vld [vmem:[%s298 + $0x20] sm:$0xff]
        %v370 = vld [vmem:[%s298 + $0x28] sm:$0xff]
        %v371 = vld [vmem:[%s298 + $0x30] sm:$0xff]
        %v372 = vld [vmem:[%s298 + $0x38] sm:$0xff]
        %v373 = vld [vmem:[%s298 + $0x40] sm:$0xff]
        %v374 = vld [vmem:[%s298 + $0x48] sm:$0xff]
        %v375 = vld [vmem:[%s298 + $0x50] sm:$0xff]
        %v376 = vld [vmem:[%s298 + $0x58] sm:$0xff]
        %v377 = vld [vmem:[%s298 + $0x60] sm:$0xff]
        %v378 = vld [vmem:[%s298 + $0x68] sm:$0xff]
        %v379 = vld [vmem:[%s342] sm:$0xf]
        %v380 = vld [vmem:[%s342 + $0x4] sm:$0xf]
        %v381 = vld [vmem:[%s342 + $0x8] sm:$0xf]
        %v382 = vld [vmem:[%s342 + $0xc] sm:$0xf]
        %v383 = vld [vmem:[%s342 + $0x10] sm:$0xf]
        %v384 = vld [vmem:[%s342 + $0x14] sm:$0xf]
        %v385 = vld [vmem:[%s342 + $0x18] sm:$0xf]
        %v386 = vld [vmem:[%s342 + $0x1c] sm:$0xf]
        %v387 = vld [vmem:[%s342 + $0x20] sm:$0xf]
        %v388 = vld [vmem:[%s342 + $0x24] sm:$0xf]
        %v389 = vld [vmem:[%s342 + $0x28] sm:$0xf]
        %v390 = vld [vmem:[%s342 + $0x2c] sm:$0xf]
        %v391 = vld [vmem:[%s342 + $0x30] sm:$0xf]
        %v392 = vld [vmem:[%s342 + $0x34] sm:$0xf]
        %v393 = vld [vmem:[%s342 + $0x38] sm:$0xf]
        %v394 = vld [vmem:[%s342 + $0x3c] sm:$0xf]
        %v395 = vld [vmem:[%s342 + $0x40] sm:$0xf]
        %v396 = vld [vmem:[%s342 + $0x44] sm:$0xf]
        %v397 = vld [vmem:[%s342 + $0x48] sm:$0xf]
        %v398 = vld [vmem:[%s342 + $0x4c] sm:$0xf]
        %v399 = vld [vmem:[%s342 + $0x50] sm:$0xf]
        %v400 = vld [vmem:[%s342 + $0x54] sm:$0xf]
        %v401 = vld [vmem:[%s342 + $0x58] sm:$0xf]
        %v402 = vld [vmem:[%s342 + $0x5c] sm:$0xf]
        %v403 = vld [vmem:[%s342 + $0x60] sm:$0xf]
        %v404 = vld [vmem:[%s342 + $0x64] sm:$0xf]
        %v405 = vld [vmem:[%s342 + $0x68] sm:$0xf]
        %v406 = vld [vmem:[%s342 + $0x6c] sm:$0xf]
        %v407 = vld [vmem:[%s342 + $0x70] sm:$0xf]
        %v408 = vld [vmem:[%s342 + $0x74] sm:$0xf]
        %v409 = vld [vmem:[%s342 + $0x78] sm:$0xf]
        %v410 = vld [vmem:[%s342 + $0x7c] sm:$0xf]
        %v411 = vld [vmem:[%s342 + $0x80] sm:$0xf]
        %v412 = vld [vmem:[%s342 + $0x84] sm:$0xf]
        %v413 = vld [vmem:[%s342 + $0x88] sm:$0xf]
        %v414 = vld [vmem:[%s342 + $0x8c] sm:$0xf]
        %v415 = vld [vmem:[%s342 + $0x90] sm:$0xf]
        %v416 = vld [vmem:[%s342 + $0x94] sm:$0xf]
        %v417 = vld [vmem:[%s342 + $0x98] sm:$0xf]
        %v418 = vld [vmem:[%s342 + $0x9c] sm:$0xf]
        %v419 = vld [vmem:[%s342 + $0xa0] sm:$0xf]
        %v420 = vld [vmem:[%s342 + $0xa4] sm:$0xf]
        %v421 = vld [vmem:[%s342 + $0xa8] sm:$0xf]
        %v422 = vld [vmem:[%s342 + $0xac] sm:$0xf]
        %v423 = vld [vmem:[%s342 + $0xb0] sm:$0xf]
        %v424 = vld [vmem:[%s342 + $0xb4] sm:$0xf]
        %v425 = vld [vmem:[%s342 + $0xb8] sm:$0xf]
        %v426 = vld [vmem:[%s342 + $0xbc] sm:$0xf]
        %v427 = vld [vmem:[%s342 + $0xc0] sm:$0xf]
        %v428 = vld [vmem:[%s342 + $0xc4] sm:$0xf]
        %v429 = vld [vmem:[%s342 + $0xc8] sm:$0xf]
        %v430 = vld [vmem:[%s342 + $0xcc] sm:$0xf]
        %v431 = vld [vmem:[%s342 + $0xd0] sm:$0xf]
        %v432 = vld [vmem:[%s342 + $0xd4] sm:$0xf]
        %v433 = vld [vmem:[%s342 + $0xd8] sm:$0xf]
        %v434 = vld [vmem:[%s342 + $0xdc] sm:$0xf]
        %v435 = vld [vmem:[%s342 + $0xe0] sm:$0xf]
        %v436 = vld [vmem:[%s342 + $0xe4] sm:$0xf]
        %v437 = vld [vmem:[%s342 + $0xe8] sm:$0xf]
        %v438 = vld [vmem:[%s342 + $0xec] sm:$0xf]
        %v439 = vld [vmem:[%s342 + $0xf0] sm:$0xf]
        %v440 = vld [vmem:[%s342 + $0xf4] sm:$0xf]
        %v441 = vld [vmem:[%s342 + $0xf8] sm:$0xf]
        %v442 = vld [vmem:[%s342 + $0xfc] sm:$0xf]
        %v457 = vunpack.c.l.b16 %v365
        %v458 = vunpack.c.h.b16 %v365
        %v459 = vunpack.c.l.b16 %v366
        %v460 = vunpack.c.h.b16 %v366
        %v461 = vunpack.c.l.b16 %v367
        %v462 = vunpack.c.h.b16 %v367
        %v463 = vunpack.c.l.b16 %v368
        %v464 = vunpack.c.h.b16 %v368
        %v465 = vunpack.c.l.b16 %v369
        %v466 = vunpack.c.h.b16 %v369
        %v467 = vunpack.c.l.b16 %v370
        %v468 = vunpack.c.h.b16 %v370
        %v469 = vunpack.c.l.b16 %v371
        %v470 = vunpack.c.h.b16 %v371
        %v471 = vunpack.c.l.b16 %v372
        %v472 = vunpack.c.h.b16 %v372
        %v473 = vunpack.c.l.b16 %v373
        %v474 = vunpack.c.h.b16 %v373
        %v475 = vunpack.c.l.b16 %v374
        %v476 = vunpack.c.h.b16 %v374
        %v477 = vunpack.c.l.b16 %v375
        %v478 = vunpack.c.h.b16 %v375
        %v479 = vunpack.c.l.b16 %v376
        %v480 = vunpack.c.h.b16 %v376
        %v481 = vunpack.c.l.b16 %v377
        %v482 = vunpack.c.h.b16 %v377
        %v483 = vunpack.c.l.b16 %v378
        %v484 = vunpack.c.h.b16 %v378
        %v485 = vpack.c.b16 %v461, %v457
        %v486 = vpack.c.b16 %v462, %v458
        %v487 = vpack.c.b16 %v463, %v459
        %v488 = vpack.c.b16 %v464, %v460
        %v489 = vpack.c.b16 %v469, %v465
        %v490 = vpack.c.b16 %v470, %v466
        %v491 = vpack.c.b16 %v471, %v467
        %v492 = vpack.c.b16 %v472, %v468
        %v493 = vpack.c.b16 %v477, %v473
        %v494 = vpack.c.b16 %v478, %v474
        %v495 = vpack.c.b16 %v479, %v475
        %v496 = vpack.c.b16 %v480, %v476
        %v497 = vpack.c.b16 %v481, %v481
        %v498 = vpack.c.b16 %v482, %v482
        %v499 = vpack.c.b16 %v483, %v483
        %v500 = vpack.c.b16 %v484, %v484
        %v581 = vunpack.c.l.b16 %v379
        %v582 = vunpack.c.l.b16 %v380
        %v583 = vunpack.c.l.b16 %v381
        %v584 = vunpack.c.l.b16 %v382
        %v585 = vunpack.c.l.b16 %v383
        %v586 = vunpack.c.l.b16 %v384
        %v587 = vunpack.c.l.b16 %v385
        %v588 = vunpack.c.l.b16 %v386
        %v589 = vunpack.c.l.b16 %v387
        %v590 = vunpack.c.l.b16 %v388
        %v591 = vunpack.c.l.b16 %v389
        %v592 = vunpack.c.l.b16 %v390
        %v593 = vunpack.c.l.b16 %v391
        %v594 = vunpack.c.l.b16 %v392
        %v595 = vunpack.c.l.b16 %v393
        %v596 = vunpack.c.l.b16 %v394
        %v597 = vunpack.c.l.b16 %v395
        %v598 = vunpack.c.l.b16 %v396
        %v599 = vunpack.c.l.b16 %v397
        %v600 = vunpack.c.l.b16 %v398
        %v601 = vunpack.c.l.b16 %v399
        %v602 = vunpack.c.l.b16 %v400
        %v603 = vunpack.c.l.b16 %v401
        %v604 = vunpack.c.l.b16 %v402
        %v605 = vunpack.c.l.b16 %v403
        %v606 = vunpack.c.l.b16 %v404
        %v607 = vunpack.c.l.b16 %v405
        %v608 = vunpack.c.l.b16 %v406
        %v609 = vunpack.c.l.b16 %v407
        %v610 = vunpack.c.l.b16 %v408
        %v611 = vunpack.c.l.b16 %v409
        %v612 = vunpack.c.l.b16 %v410
        %v613 = vunpack.c.l.b16 %v411
        %v614 = vunpack.c.l.b16 %v412
        %v615 = vunpack.c.l.b16 %v413
        %v616 = vunpack.c.l.b16 %v414
        %v617 = vunpack.c.l.b16 %v415
        %v618 = vunpack.c.l.b16 %v416
        %v619 = vunpack.c.l.b16 %v417
        %v620 = vunpack.c.l.b16 %v418
        %v621 = vunpack.c.l.b16 %v419
        %v622 = vunpack.c.l.b16 %v420
        %v623 = vunpack.c.l.b16 %v421
        %v624 = vunpack.c.l.b16 %v422
        %v625 = vunpack.c.l.b16 %v423
        %v626 = vunpack.c.l.b16 %v424
        %v627 = vunpack.c.l.b16 %v425
        %v628 = vunpack.c.l.b16 %v426
        %v629 = vunpack.c.l.b16 %v427
        %v630 = vunpack.c.l.b16 %v428
        %v631 = vunpack.c.l.b16 %v429
        %v632 = vunpack.c.l.b16 %v430
        %v633 = vunpack.c.l.b16 %v431
        %v634 = vunpack.c.l.b16 %v432
        %v635 = vunpack.c.l.b16 %v433
        %v636 = vunpack.c.l.b16 %v434
        %v637 = vunpack.c.l.b16 %v435
        %v638 = vunpack.c.l.b16 %v436
        %v639 = vunpack.c.l.b16 %v437
        %v640 = vunpack.c.l.b16 %v438
        %v641 = vunpack.c.l.b16 %v439
        %v642 = vunpack.c.l.b16 %v440
        %v643 = vunpack.c.l.b16 %v441
        %v644 = vunpack.c.l.b16 %v442
        %v645 = vpack.c.b16 %v582, %v581
        %v646 = vpack.c.b16 %v584, %v583
        %v647 = vpack.c.b16 %v586, %v585
        %v648 = vpack.c.b16 %v588, %v587
        %v649 = vpack.c.b16 %v590, %v589
        %v650 = vpack.c.b16 %v592, %v591
        %v651 = vpack.c.b16 %v594, %v593
        %v652 = vpack.c.b16 %v596, %v595
        %v653 = vpack.c.b16 %v598, %v597
        %v654 = vpack.c.b16 %v600, %v599
        %v655 = vpack.c.b16 %v602, %v601
        %v656 = vpack.c.b16 %v604, %v603
        %v657 = vpack.c.b16 %v606, %v605
        %v658 = vpack.c.b16 %v608, %v607
        %v659 = vpack.c.b16 %v610, %v609
        %v660 = vpack.c.b16 %v612, %v611
        %v661 = vpack.c.b16 %v614, %v613
        %v662 = vpack.c.b16 %v616, %v615
        %v663 = vpack.c.b16 %v618, %v617
        %v664 = vpack.c.b16 %v620, %v619
        %v665 = vpack.c.b16 %v622, %v621
        %v666 = vpack.c.b16 %v624, %v623
        %v667 = vpack.c.b16 %v626, %v625
        %v668 = vpack.c.b16 %v628, %v627
        %v669 = vpack.c.b16 %v630, %v629
        %v670 = vpack.c.b16 %v632, %v631
        %v671 = vpack.c.b16 %v634, %v633
        %v672 = vpack.c.b16 %v636, %v635
        %v673 = vpack.c.b16 %v638, %v637
        %v674 = vpack.c.b16 %v640, %v639
        %v675 = vpack.c.b16 %v642, %v641
        %v676 = vpack.c.b16 %v644, %v643
        %709 = vmatprep.subr.bf16.mxu0 0
        %710 = vmatpush1.bf16.msra.mxu0 %v652
        %711 = vmatprep.subr.bf16.mxu0 0
        %712 = vmatpush1.bf16.msra.mxu0 %v651
        %713 = vmatprep.subr.bf16.mxu0 0
        %714 = vmatpush1.bf16.msra.mxu0 %v650
        %715 = vmatprep.subr.bf16.mxu0 0
        %716 = vmatpush1.bf16.msra.mxu0 %v649
        %717 = vmatprep.subr.bf16.mxu0 0
        %718 = vmatpush1.bf16.msra.mxu0 %v648
        %719 = vmatprep.subr.bf16.mxu0 0
        %720 = vmatpush1.bf16.msra.mxu0 %v647
        %721 = vmatprep.subr.bf16.mxu0 0
        %722 = vmatpush1.bf16.msra.mxu0 %v646
        %723 = vmatprep.subr.bf16.mxu0 0
        %724 = vmatpush1.bf16.msra.mxu0 %v645
        %725 = vmatprep.subr.bf16.mxu0 0
        %726 = vmatpush2.bf16.msra.mxu0 %v660
        %727 = vmatprep.subr.bf16.mxu0 0
        %728 = vmatpush2.bf16.msra.mxu0 %v659
        %729 = vmatprep.subr.bf16.mxu0 0
        %730 = vmatpush2.bf16.msra.mxu0 %v658
        %731 = vmatprep.subr.bf16.mxu0 0
        %732 = vmatpush2.bf16.msra.mxu0 %v657
        %733 = vmatprep.subr.bf16.mxu0 0
        %734 = vmatpush2.bf16.msra.mxu0 %v656
        %735 = vmatprep.subr.bf16.mxu0 0
        %736 = vmatpush2.bf16.msra.mxu0 %v655
        %737 = vmatprep.subr.bf16.mxu0 0
        %738 = vmatpush2.bf16.msra.mxu0 %v654
        %739 = vmatprep.subr.bf16.mxu0 0
        %740 = vmatpush2.bf16.msra.mxu0 %v653
        %741 = vmatprep.mubr.bf16.mxu0 %v486
        %742 = vmatmul.mubr.bf16.gmra.mxu0 %v485
        %v743 = vpop.f32.mrf.mxu0
        %v744 = vadd.f32 0.0, %v743
        %v745 = vpop.f32.mrf.mxu0
        %v746 = vpop.f32.mrf.mxu0
        %v747 = vadd.f32 0.0, %v746
        %v748 = vpop.f32.mrf.mxu0
        %749 = vmatprep.mubr.bf16.mxu0 %v490
        %750 = vmatmul.mubr.bf16.gmra.mxu0 %v489
        %v751 = vpop.f32.mrf.mxu0
        %v752 = vadd.f32 0.0, %v751
        %v753 = vpop.f32.mrf.mxu0
        %v754 = vpop.f32.mrf.mxu0
        %v755 = vadd.f32 0.0, %v754
        %v756 = vpop.f32.mrf.mxu0
        %757 = vmatprep.mubr.bf16.mxu0 %v494
        %758 = vmatmul.mubr.bf16.gmra.mxu0 %v493
        %v759 = vpop.f32.mrf.mxu0
        %v760 = vadd.f32 0.0, %v759
        %v761 = vpop.f32.mrf.mxu0
        %v762 = vpop.f32.mrf.mxu0
        %v763 = vadd.f32 0.0, %v762
        %v764 = vpop.f32.mrf.mxu0
        %765 = vmatprep.mubr.bf16.mxu0 %v498
        %766 = vmatmul.mubr.bf16.gmra.mxu0 %v497
        %v767 = vpop.f32.mrf.mxu0
        %v768 = vadd.f32 0.0, %v767
        %v769 = vpop.f32.mrf.mxu0
        %v770 = vpop.f32.mrf.mxu0
        %v771 = vpop.f32.mrf.mxu0
        %772 = vdwg.mxu0
        %773 = vmatprep.subr.bf16.mxu0 0
        %774 = vmatpush1.bf16.msra.mxu0 %v668
        %775 = vmatprep.subr.bf16.mxu0 0
        %776 = vmatpush1.bf16.msra.mxu0 %v667
        %777 = vmatprep.subr.bf16.mxu0 0
        %778 = vmatpush1.bf16.msra.mxu0 %v666
        %779 = vmatprep.subr.bf16.mxu0 0
        %780 = vmatpush1.bf16.msra.mxu0 %v665
        %781 = vmatprep.subr.bf16.mxu0 0
        %782 = vmatpush1.bf16.msra.mxu0 %v664
        %783 = vmatprep.subr.bf16.mxu0 0
        %784 = vmatpush1.bf16.msra.mxu0 %v663
        %785 = vmatprep.subr.bf16.mxu0 0
        %786 = vmatpush1.bf16.msra.mxu0 %v662
        %787 = vmatprep.subr.bf16.mxu0 0
        %788 = vmatpush1.bf16.msra.mxu0 %v661
        %789 = vmatprep.subr.bf16.mxu0 0
        %790 = vmatpush2.bf16.msra.mxu0 %v676
        %791 = vmatprep.subr.bf16.mxu0 0
        %792 = vmatpush2.bf16.msra.mxu0 %v675
        %793 = vmatprep.subr.bf16.mxu0 0
        %794 = vmatpush2.bf16.msra.mxu0 %v674
        %795 = vmatprep.subr.bf16.mxu0 0
        %796 = vmatpush2.bf16.msra.mxu0 %v673
        %797 = vmatprep.subr.bf16.mxu0 0
        %798 = vmatpush2.bf16.msra.mxu0 %v672
        %799 = vmatprep.subr.bf16.mxu0 0
        %800 = vmatpush2.bf16.msra.mxu0 %v671
        %801 = vmatprep.subr.bf16.mxu0 0
        %802 = vmatpush2.bf16.msra.mxu0 %v670
        %803 = vmatprep.subr.bf16.mxu0 0
        %804 = vmatpush2.bf16.msra.mxu0 %v669
        %805 = vmatprep.mubr.bf16.mxu0 %v488
        %806 = vmatmul.mubr.bf16.gmra.mxu0 %v487
        %v807 = vpop.f32.mrf.mxu0
        %v808 = vadd.f32 %v744, %v807
        %v809 = vpop.f32.mrf.mxu0
        %v810 = vpop.f32.mrf.mxu0
        %v811 = vadd.f32 %v747, %v810
        %v812 = vpop.f32.mrf.mxu0
        %813 = vmatprep.mubr.bf16.mxu0 %v492
        %814 = vmatmul.mubr.bf16.gmra.mxu0 %v491
        %v815 = vpop.f32.mrf.mxu0
        %v816 = vadd.f32 %v752, %v815
        %v817 = vpop.f32.mrf.mxu0
        %v818 = vpop.f32.mrf.mxu0
        %v819 = vadd.f32 %v755, %v818
        %v820 = vpop.f32.mrf.mxu0
        %821 = vmatprep.mubr.bf16.mxu0 %v496
        %822 = vmatmul.mubr.bf16.gmra.mxu0 %v495
        %v823 = vpop.f32.mrf.mxu0
        %v824 = vadd.f32 %v760, %v823
        %v825 = vpop.f32.mrf.mxu0
        %v826 = vpop.f32.mrf.mxu0
        %v827 = vadd.f32 %v763, %v826
        %v828 = vpop.f32.mrf.mxu0
        %829 = vmatprep.mubr.bf16.mxu0 %v500
        %830 = vmatmul.mubr.bf16.gmra.mxu0 %v499
        %v831 = vpop.f32.mrf.mxu0
        %v832 = vadd.f32 %v768, %v831
        %v833 = vpop.f32.mrf.mxu0
        %v834 = vpop.f32.mrf.mxu0
        %v835 = vpop.f32.mrf.mxu0
        %836 = vdwg.mxu0
        %v837 = vadd.f32 %v358, %v808
        %v838 = vadd.f32 %v359, %v811
        %v839 = vadd.f32 %v360, %v816
        %v840 = vadd.f32 %v361, %v819
        %v841 = vadd.f32 %v362, %v824
        %v842 = vadd.f32 %v363, %v827
        %v843 = vadd.f32 %v364, %v832
        %vm844 = vcmask 261120
        %845 = vst.msk [vmem:[#allocation2] sm:$0xff] %vm844, %v837
        %846 = vst.msk [vmem:[#allocation2 + $0x8] sm:$0xff] %vm844, %v838
        %847 = vst.msk [vmem:[#allocation2 + $0x10] sm:$0xff] %vm844, %v839
        %848 = vst.msk [vmem:[#allocation2 + $0x18] sm:$0xff] %vm844, %v840
        %849 = vst.msk [vmem:[#allocation2 + $0x20] sm:$0xff] %vm844, %v841
        %850 = vst.msk [vmem:[#allocation2 + $0x28] sm:$0xff] %vm844, %v842
        %851 = vst.msk [vmem:[#allocation2 + $0x30] sm:$0xff] %vm844, %v843
        %p852 = scmp.eq.s32.totalorder %s25, 1
        // Predicated region
        $region72: #{tpu_custom_call.1} parent=62 // pred_check
          %p853 = pneg %p852
        $region73: #{tpu_custom_call.1} parent=62 // pred_check_branch
          %855 = sbr.rel (%p853) target = $region75
        $region74: #{tpu_custom_call.1} parent=62 // pred_region
          %v856 = vld [vmem:[#allocation2] sm:$0xff]
          %v857 = vld [vmem:[#allocation2 + $0x8] sm:$0xff]
          %v858 = vld [vmem:[#allocation2 + $0x10] sm:$0xff]
          %v859 = vld [vmem:[#allocation2 + $0x18] sm:$0xff]
          %v860 = vld [vmem:[#allocation2 + $0x20] sm:$0xff]
          %v861 = vld [vmem:[#allocation2 + $0x28] sm:$0xff]
          %v862 = vld [vmem:[#allocation2 + $0x30] sm:$0xff]
          %v863 = vpack.c.bf16 %v857, %v856
          %v864 = vpack.c.bf16 %v859, %v858
          %v865 = vpack.c.bf16 %v861, %v860
          %v866 = vpack.c.bf16 %v862, %v862
          %v867 = vld [vmem:[%s2] sm:$0xff]
          %v868 = vld [vmem:[%s2 + $0x8] sm:$0xff]
          %v869 = vld [vmem:[%s2 + $0x10] sm:$0xff]
          %v870 = vld [vmem:[%s2 + $0x18] sm:$0xff]
          %v871 = vld [vmem:[%s2 + $0x20] sm:$0xff]
          %v872 = vld [vmem:[%s2 + $0x28] sm:$0xff]
          %v873 = vld [vmem:[%s2 + $0x30] sm:$0xff]
          %v874 = vld [vmem:[%s2 + $0x38] sm:$0xff]
          %v883 = vunpack.c.l.b16 %v867
          %v884 = vunpack.c.h.b16 %v867
          %v885 = vunpack.c.l.b16 %v868
          %v886 = vunpack.c.h.b16 %v868
          %v887 = vunpack.c.l.b16 %v869
          %v888 = vunpack.c.h.b16 %v869
          %v889 = vunpack.c.l.b16 %v870
          %v890 = vunpack.c.h.b16 %v870
          %v891 = vunpack.c.l.b16 %v871
          %v892 = vunpack.c.h.b16 %v871
          %v893 = vunpack.c.l.b16 %v872
          %v894 = vunpack.c.h.b16 %v872
          %v895 = vunpack.c.l.b16 %v873
          %v896 = vunpack.c.h.b16 %v873
          %v897 = vunpack.c.l.b16 %v874
          %v898 = vunpack.c.h.b16 %v874
          %v899 = vpack.c.b16 %v887, %v883
          %v900 = vpack.c.b16 %v888, %v884
          %v901 = vpack.c.b16 %v889, %v885
          %v902 = vpack.c.b16 %v890, %v886
          %v903 = vpack.c.b16 %v895, %v891
          %v904 = vpack.c.b16 %v896, %v892
          %v905 = vpack.c.b16 %v897, %v893
          %v906 = vpack.c.b16 %v898, %v894
          %v916 = vsel %vm844, %v863, 0
          %v919 = vsel %vm844, %v864, 0
          %v922 = vsel %vm844, %v865, 0
          %v925 = vsel %vm844, %v866, 0
          %927 = vmatprep.subr.bf16.mxu0 0
          %928 = vmatpush1.bf16.msra.mxu0 0
          %929 = vmatprep.subr.bf16.mxu0 0
          %930 = vmatpush1.bf16.msra.mxu0 0
          %931 = vmatprep.subr.bf16.mxu0 0
          %932 = vmatpush1.bf16.msra.mxu0 0
          %933 = vmatprep.subr.bf16.mxu0 0
          %934 = vmatpush1.bf16.msra.mxu0 0
          %935 = vmatprep.subr.bf16.mxu0 0
          %936 = vmatpush1.bf16.msra.mxu0 0
          %937 = vmatprep.subr.bf16.mxu0 0
          %938 = vmatpush1.bf16.msra.mxu0 0
          %939 = vmatprep.subr.bf16.mxu0 %v904
          %940 = vmatpush1.bf16.msra.mxu0 %v903
          %941 = vmatprep.subr.bf16.mxu0 %v900
          %942 = vmatpush1.bf16.msra.mxu0 %v899
          %943 = vmatprep.subr.bf16.mxu0 0
          %944 = vmatpush2.bf16.msra.mxu0 0
          %945 = vmatprep.subr.bf16.mxu0 0
          %946 = vmatpush2.bf16.msra.mxu0 0
          %947 = vmatprep.subr.bf16.mxu0 0
          %948 = vmatpush2.bf16.msra.mxu0 0
          %949 = vmatprep.subr.bf16.mxu0 0
          %950 = vmatpush2.bf16.msra.mxu0 0
          %951 = vmatprep.subr.bf16.mxu0 0
          %952 = vmatpush2.bf16.msra.mxu0 0
          %953 = vmatprep.subr.bf16.mxu0 0
          %954 = vmatpush2.bf16.msra.mxu0 0
          %955 = vmatprep.subr.bf16.mxu0 0
          %956 = vmatpush2.bf16.msra.mxu0 0
          %957 = vmatprep.subr.bf16.mxu0 0
          %958 = vmatpush2.bf16.msra.mxu0 0
          %959 = vmatprep.mubr.bf16.mxu0 0
          %960 = vmatmul.mubr.bf16.gmra.mxu0 %v916
          %v961 = vpop.f32.mrf.mxu0
          %v962 = vadd.f32 0.0, %v961
          %v963 = vpop.f32.mrf.mxu0
          %v964 = vadd.f32 0.0, %v963
          %v965 = vpop.f32.mrf.mxu0
          %v966 = vadd.f32 0.0, %v965
          %v967 = vpop.f32.mrf.mxu0
          %v968 = vadd.f32 0.0, %v967
          %969 = vmatprep.mubr.bf16.mxu0 0
          %970 = vmatmul.mubr.bf16.gmra.mxu0 %v919
          %v971 = vpop.f32.mrf.mxu0
          %v972 = vadd.f32 0.0, %v971
          %v973 = vpop.f32.mrf.mxu0
          %v974 = vadd.f32 0.0, %v973
          %v975 = vpop.f32.mrf.mxu0
          %v976 = vadd.f32 0.0, %v975
          %v977 = vpop.f32.mrf.mxu0
          %v978 = vadd.f32 0.0, %v977
          %979 = vmatprep.mubr.bf16.mxu0 0
          %980 = vmatmul.mubr.bf16.gmra.mxu0 %v922
          %v981 = vpop.f32.mrf.mxu0
          %v982 = vadd.f32 0.0, %v981
          %v983 = vpop.f32.mrf.mxu0
          %v984 = vadd.f32 0.0, %v983
          %v985 = vpop.f32.mrf.mxu0
          %v986 = vadd.f32 0.0, %v985
          %v987 = vpop.f32.mrf.mxu0
          %v988 = vadd.f32 0.0, %v987
          %989 = vmatprep.mubr.bf16.mxu0 0
          %990 = vmatmul.mubr.bf16.gmra.mxu0 %v925
          %v991 = vpop.f32.mrf.mxu0
          %v992 = vadd.f32 0.0, %v991
          %v993 = vpop.f32.mrf.mxu0
          %v994 = vadd.f32 0.0, %v993
          %v995 = vpop.f32.mrf.mxu0
          %v996 = vpop.f32.mrf.mxu0
          %997 = vdwg.mxu0
          %998 = vmatprep.subr.bf16.mxu0 0
          %999 = vmatpush1.bf16.msra.mxu0 0
          %1000 = vmatprep.subr.bf16.mxu0 0
          %1001 = vmatpush1.bf16.msra.mxu0 0
          %1002 = vmatprep.subr.bf16.mxu0 0
          %1003 = vmatpush1.bf16.msra.mxu0 0
          %1004 = vmatprep.subr.bf16.mxu0 0
          %1005 = vmatpush1.bf16.msra.mxu0 0
          %1006 = vmatprep.subr.bf16.mxu0 0
          %1007 = vmatpush1.bf16.msra.mxu0 0
          %1008 = vmatprep.subr.bf16.mxu0 0
          %1009 = vmatpush1.bf16.msra.mxu0 0
          %1010 = vmatprep.subr.bf16.mxu0 %v906
          %1011 = vmatpush1.bf16.msra.mxu0 %v905
          %1012 = vmatprep.subr.bf16.mxu0 %v902
          %1013 = vmatpush1.bf16.msra.mxu0 %v901
          %1014 = vmatprep.subr.bf16.mxu0 0
          %1015 = vmatpush2.bf16.msra.mxu0 0
          %1016 = vmatprep.subr.bf16.mxu0 0
          %1017 = vmatpush2.bf16.msra.mxu0 0
          %1018 = vmatprep.subr.bf16.mxu0 0
          %1019 = vmatpush2.bf16.msra.mxu0 0
          %1020 = vmatprep.subr.bf16.mxu0 0
          %1021 = vmatpush2.bf16.msra.mxu0 0
          %1022 = vmatprep.subr.bf16.mxu0 0
          %1023 = vmatpush2.bf16.msra.mxu0 0
          %1024 = vmatprep.subr.bf16.mxu0 0
          %1025 = vmatpush2.bf16.msra.mxu0 0
          %1026 = vmatprep.subr.bf16.mxu0 0
          %1027 = vmatpush2.bf16.msra.mxu0 0
          %1028 = vmatprep.subr.bf16.mxu0 0
          %1029 = vmatpush2.bf16.msra.mxu0 0
          %1030 = vmatprep.mubr.bf16.mxu0 0
          %1031 = vmatmul.mubr.bf16.gmra.mxu0 %v916
          %v1032 = vpop.f32.mrf.mxu0
          %v1033 = vadd.f32 0.0, %v1032
          %v1034 = vpop.f32.mrf.mxu0
          %v1035 = vadd.f32 0.0, %v1034
          %v1036 = vpop.f32.mrf.mxu0
          %v1037 = vadd.f32 0.0, %v1036
          %v1038 = vpop.f32.mrf.mxu0
          %v1039 = vadd.f32 0.0, %v1038
          %1040 = vmatprep.mubr.bf16.mxu0 0
          %1041 = vmatmul.mubr.bf16.gmra.mxu0 %v919
          %v1042 = vpop.f32.mrf.mxu0
          %v1043 = vadd.f32 0.0, %v1042
          %v1044 = vpop.f32.mrf.mxu0
          %v1045 = vadd.f32 0.0, %v1044
          %v1046 = vpop.f32.mrf.mxu0
          %v1047 = vadd.f32 0.0, %v1046
          %v1048 = vpop.f32.mrf.mxu0
          %v1049 = vadd.f32 0.0, %v1048
          %1050 = vmatprep.mubr.bf16.mxu0 0
          %1051 = vmatmul.mubr.bf16.gmra.mxu0 %v922
          %v1052 = vpop.f32.mrf.mxu0
          %v1053 = vadd.f32 0.0, %v1052
          %v1054 = vpop.f32.mrf.mxu0
          %v1055 = vadd.f32 0.0, %v1054
          %v1056 = vpop.f32.mrf.mxu0
          %v1057 = vadd.f32 0.0, %v1056
          %v1058 = vpop.f32.mrf.mxu0
          %v1059 = vadd.f32 0.0, %v1058
          %1060 = vmatprep.mubr.bf16.mxu0 0
          %1061 = vmatmul.mubr.bf16.gmra.mxu0 %v925
          %v1062 = vpop.f32.mrf.mxu0
          %v1063 = vadd.f32 0.0, %v1062
          %v1064 = vpop.f32.mrf.mxu0
          %v1065 = vadd.f32 0.0, %v1064
          %v1066 = vpop.f32.mrf.mxu0
          %v1067 = vpop.f32.mrf.mxu0
          %1068 = vdwg.mxu0
          %v1069 = vld [vmem:[%s3] sm:$0xf]
          %v1071 = vlaneseq
          %v1072 = vshrl.u32 %v1071, 7
          %v1073 = vsub.s32 0, %v1072
          %v1074 = vrot.slane %v1069, %v1073
          %v1075 = vlaneseq
          %v1076 = vshrl.u32 %v1075, 7
          %v1077 = vsub.s32 1, %v1076
          %v1078 = vrot.slane %v1069, %v1077
          %v1079 = vlaneseq
          %v1080 = vshrl.u32 %v1079, 7
          %v1081 = vsub.s32 2, %v1080
          %v1082 = vrot.slane %v1069, %v1081
          %v1083 = vlaneseq
          %v1084 = vshrl.u32 %v1083, 7
          %v1085 = vsub.s32 3, %v1084
          %v1086 = vrot.slane %v1069, %v1085
          %v1091 = vmul.f32 %v962, %v1074
          %v1092 = vmul.f32 %v964, %v1078
          %v1093 = vmul.f32 %v1033, %v1082
          %v1094 = vmul.f32 %v1035, %v1086
          %v1095 = vmul.f32 %v966, %v1074
          %v1096 = vmul.f32 %v968, %v1078
          %v1097 = vmul.f32 %v1037, %v1082
          %v1098 = vmul.f32 %v1039, %v1086
          %v1099 = vmul.f32 %v972, %v1074
          %v1100 = vmul.f32 %v974, %v1078
          %v1101 = vmul.f32 %v1043, %v1082
          %v1102 = vmul.f32 %v1045, %v1086
          %v1103 = vmul.f32 %v976, %v1074
          %v1104 = vmul.f32 %v978, %v1078
          %v1105 = vmul.f32 %v1047, %v1082
          %v1106 = vmul.f32 %v1049, %v1086
          %v1107 = vmul.f32 %v982, %v1074
          %v1108 = vmul.f32 %v984, %v1078
          %v1109 = vmul.f32 %v1053, %v1082
          %v1110 = vmul.f32 %v1055, %v1086
          %v1111 = vmul.f32 %v986, %v1074
          %v1112 = vmul.f32 %v988, %v1078
          %v1113 = vmul.f32 %v1057, %v1082
          %v1114 = vmul.f32 %v1059, %v1086
          %v1115 = vmul.f32 %v992, %v1074
          %v1116 = vmul.f32 %v994, %v1078
          %v1117 = vmul.f32 %v1063, %v1082
          %v1118 = vmul.f32 %v1065, %v1086
          %v1119 = vld [vmem:[%s4] sm:$0xf]
          %v1121 = vlaneseq
          %v1122 = vshrl.u32 %v1121, 7
          %v1123 = vsub.s32 0, %v1122
          %v1124 = vrot.slane %v1119, %v1123
          %v1125 = vlaneseq
          %v1126 = vshrl.u32 %v1125, 7
          %v1127 = vsub.s32 1, %v1126
          %v1128 = vrot.slane %v1119, %v1127
          %v1129 = vlaneseq
          %v1130 = vshrl.u32 %v1129, 7
          %v1131 = vsub.s32 2, %v1130
          %v1132 = vrot.slane %v1119, %v1131
          %v1133 = vlaneseq
          %v1134 = vshrl.u32 %v1133, 7
          %v1135 = vsub.s32 3, %v1134
          %v1136 = vrot.slane %v1119, %v1135
          %v1141 = vadd.f32 %v1091, %v1124
          %v1142 = vadd.f32 %v1092, %v1128
          %v1143 = vadd.f32 %v1093, %v1132
          %v1144 = vadd.f32 %v1094, %v1136
          %v1145 = vadd.f32 %v1095, %v1124
          %v1146 = vadd.f32 %v1096, %v1128
          %v1147 = vadd.f32 %v1097, %v1132
          %v1148 = vadd.f32 %v1098, %v1136
          %v1149 = vadd.f32 %v1099, %v1124
          %v1150 = vadd.f32 %v1100, %v1128
          %v1151 = vadd.f32 %v1101, %v1132
          %v1152 = vadd.f32 %v1102, %v1136
          %v1153 = vadd.f32 %v1103, %v1124
          %v1154 = vadd.f32 %v1104, %v1128
          %v1155 = vadd.f32 %v1105, %v1132
          %v1156 = vadd.f32 %v1106, %v1136
          %v1157 = vadd.f32 %v1107, %v1124
          %v1158 = vadd.f32 %v1108, %v1128
          %v1159 = vadd.f32 %v1109, %v1132
          %v1160 = vadd.f32 %v1110, %v1136
          %v1161 = vadd.f32 %v1111, %v1124
          %v1162 = vadd.f32 %v1112, %v1128
          %v1163 = vadd.f32 %v1113, %v1132
          %v1164 = vadd.f32 %v1114, %v1136
          %v1165 = vadd.f32 %v1115, %v1124
          %v1166 = vadd.f32 %v1116, %v1128
          %v1167 = vadd.f32 %v1117, %v1132
          %v1168 = vadd.f32 %v1118, %v1136
          %vm1169 = vcmp.ge.f32.partialorder %v1141, 0.0
          %vm1170 = vcmp.ge.f32.partialorder %v1142, 0.0
          %vm1171 = vcmp.ge.f32.partialorder %v1143, 0.0
          %vm1172 = vcmp.ge.f32.partialorder %v1144, 0.0
          %vm1173 = vcmp.ge.f32.partialorder %v1145, 0.0
          %vm1174 = vcmp.ge.f32.partialorder %v1146, 0.0
          %vm1175 = vcmp.ge.f32.partialorder %v1147, 0.0
          %vm1176 = vcmp.ge.f32.partialorder %v1148, 0.0
          %vm1177 = vcmp.ge.f32.partialorder %v1149, 0.0
          %vm1178 = vcmp.ge.f32.partialorder %v1150, 0.0
          %vm1179 = vcmp.ge.f32.partialorder %v1151, 0.0
          %vm1180 = vcmp.ge.f32.partialorder %v1152, 0.0
          %vm1181 = vcmp.ge.f32.partialorder %v1153, 0.0
          %vm1182 = vcmp.ge.f32.partialorder %v1154, 0.0
          %vm1183 = vcmp.ge.f32.partialorder %v1155, 0.0
          %vm1184 = vcmp.ge.f32.partialorder %v1156, 0.0
          %vm1185 = vcmp.ge.f32.partialorder %v1157, 0.0
          %vm1186 = vcmp.ge.f32.partialorder %v1158, 0.0
          %vm1187 = vcmp.ge.f32.partialorder %v1159, 0.0
          %vm1188 = vcmp.ge.f32.partialorder %v1160, 0.0
          %vm1189 = vcmp.ge.f32.partialorder %v1161, 0.0
          %vm1190 = vcmp.ge.f32.partialorder %v1162, 0.0
          %vm1191 = vcmp.ge.f32.partialorder %v1163, 0.0
          %vm1192 = vcmp.ge.f32.partialorder %v1164, 0.0
          %vm1193 = vcmp.ge.f32.partialorder %v1165, 0.0
          %vm1194 = vcmp.ge.f32.partialorder %v1166, 0.0
          %vm1195 = vcmp.ge.f32.partialorder %v1167, 0.0
          %vm1196 = vcmp.ge.f32.partialorder %v1168, 0.0
          %v1197 = vmul.f32 %v1141, 0.01
          %v1198 = vmul.f32 %v1142, 0.01
          %v1199 = vmul.f32 %v1143, 0.01
          %v1200 = vmul.f32 %v1144, 0.01
          %v1201 = vmul.f32 %v1145, 0.01
          %v1202 = vmul.f32 %v1146, 0.01
          %v1203 = vmul.f32 %v1147, 0.01
          %v1204 = vmul.f32 %v1148, 0.01
          %v1205 = vmul.f32 %v1149, 0.01
          %v1206 = vmul.f32 %v1150, 0.01
          %v1207 = vmul.f32 %v1151, 0.01
          %v1208 = vmul.f32 %v1152, 0.01
          %v1209 = vmul.f32 %v1153, 0.01
          %v1210 = vmul.f32 %v1154, 0.01
          %v1211 = vmul.f32 %v1155, 0.01
          %v1212 = vmul.f32 %v1156, 0.01
          %v1213 = vmul.f32 %v1157, 0.01
          %v1214 = vmul.f32 %v1158, 0.01
          %v1215 = vmul.f32 %v1159, 0.01
          %v1216 = vmul.f32 %v1160, 0.01
          %v1217 = vmul.f32 %v1161, 0.01
          %v1218 = vmul.f32 %v1162, 0.01
          %v1219 = vmul.f32 %v1163, 0.01
          %v1220 = vmul.f32 %v1164, 0.01
          %v1221 = vmul.f32 %v1165, 0.01
          %v1222 = vmul.f32 %v1166, 0.01
          %v1223 = vmul.f32 %v1167, 0.01
          %v1224 = vmul.f32 %v1168, 0.01
          %v1225 = vsel %vm1169, %v1141, %v1197
          %v1226 = vsel %vm1170, %v1142, %v1198
          %v1227 = vsel %vm1171, %v1143, %v1199
          %v1228 = vsel %vm1172, %v1144, %v1200
          %v1229 = vsel %vm1173, %v1145, %v1201
          %v1230 = vsel %vm1174, %v1146, %v1202
          %v1231 = vsel %vm1175, %v1147, %v1203
          %v1232 = vsel %vm1176, %v1148, %v1204
          %v1233 = vsel %vm1177, %v1149, %v1205
          %v1234 = vsel %vm1178, %v1150, %v1206
          %v1235 = vsel %vm1179, %v1151, %v1207
          %v1236 = vsel %vm1180, %v1152, %v1208
          %v1237 = vsel %vm1181, %v1153, %v1209
          %v1238 = vsel %vm1182, %v1154, %v1210
          %v1239 = vsel %vm1183, %v1155, %v1211
          %v1240 = vsel %vm1184, %v1156, %v1212
          %v1241 = vsel %vm1185, %v1157, %v1213
          %v1242 = vsel %vm1186, %v1158, %v1214
          %v1243 = vsel %vm1187, %v1159, %v1215
          %v1244 = vsel %vm1188, %v1160, %v1216
          %v1245 = vsel %vm1189, %v1161, %v1217
          %v1246 = vsel %vm1190, %v1162, %v1218
          %v1247 = vsel %vm1191, %v1163, %v1219
          %v1248 = vsel %vm1192, %v1164, %v1220
          %v1249 = vsel %vm1193, %v1165, %v1221
          %v1250 = vsel %vm1194, %v1166, %v1222
          %v1251 = vsel %vm1195, %v1167, %v1223
          %v1252 = vsel %vm1196, %v1168, %v1224
          %v1253 = vld [vmem:[%s5] sm:$0xff]
          %v1254 = vld [vmem:[%s5 + $0x8] sm:$0xff]
          %v1255 = vld [vmem:[%s5 + $0x10] sm:$0xff]
          %v1256 = vld [vmem:[%s5 + $0x18] sm:$0xff]
          %v1257 = vld [vmem:[%s5 + $0x20] sm:$0xff]
          %v1258 = vld [vmem:[%s5 + $0x28] sm:$0xff]
          %v1259 = vld [vmem:[%s5 + $0x30] sm:$0xff]
          %v1260 = vld [vmem:[%s5 + $0x38] sm:$0xff]
          %v1261 = vld [vmem:[%s5 + $0x40] sm:$0xff]
          %v1262 = vld [vmem:[%s5 + $0x48] sm:$0xff]
          %v1263 = vld [vmem:[%s5 + $0x50] sm:$0xff]
          %v1264 = vld [vmem:[%s5 + $0x58] sm:$0xff]
          %v1265 = vld [vmem:[%s5 + $0x60] sm:$0xff]
          %v1266 = vld [vmem:[%s5 + $0x68] sm:$0xff]
          %v1267 = vld [vmem:[%s5 + $0x70] sm:$0xff]
          %v1268 = vld [vmem:[%s5 + $0x78] sm:$0xff]
          %v1269 = vld [vmem:[%s5 + $0x80] sm:$0xff]
          %v1270 = vld [vmem:[%s5 + $0x88] sm:$0xff]
          %v1271 = vld [vmem:[%s5 + $0x90] sm:$0xff]
          %v1272 = vld [vmem:[%s5 + $0x98] sm:$0xff]
          %v1273 = vld [vmem:[%s5 + $0xa0] sm:$0xff]
          %v1274 = vld [vmem:[%s5 + $0xa8] sm:$0xff]
          %v1275 = vld [vmem:[%s5 + $0xb0] sm:$0xff]
          %v1276 = vld [vmem:[%s5 + $0xb8] sm:$0xff]
          %v1277 = vld [vmem:[%s5 + $0xc0] sm:$0xff]
          %v1278 = vld [vmem:[%s5 + $0xc8] sm:$0xff]
          %v1279 = vld [vmem:[%s5 + $0xd0] sm:$0xff]
          %v1280 = vld [vmem:[%s5 + $0xd8] sm:$0xff]
          %v1281 = vmul.f32 %v1225, %v1253
          %v1282 = vmul.f32 %v1226, %v1254
          %v1283 = vmul.f32 %v1227, %v1255
          %v1284 = vmul.f32 %v1228, %v1256
          %v1285 = vmul.f32 %v1229, %v1257
          %v1286 = vmul.f32 %v1230, %v1258
          %v1287 = vmul.f32 %v1231, %v1259
          %v1288 = vmul.f32 %v1232, %v1260
          %v1289 = vmul.f32 %v1233, %v1261
          %v1290 = vmul.f32 %v1234, %v1262
          %v1291 = vmul.f32 %v1235, %v1263
          %v1292 = vmul.f32 %v1236, %v1264
          %v1293 = vmul.f32 %v1237, %v1265
          %v1294 = vmul.f32 %v1238, %v1266
          %v1295 = vmul.f32 %v1239, %v1267
          %v1296 = vmul.f32 %v1240, %v1268
          %v1297 = vmul.f32 %v1241, %v1269
          %v1298 = vmul.f32 %v1242, %v1270
          %v1299 = vmul.f32 %v1243, %v1271
          %v1300 = vmul.f32 %v1244, %v1272
          %v1301 = vmul.f32 %v1245, %v1273
          %v1302 = vmul.f32 %v1246, %v1274
          %v1303 = vmul.f32 %v1247, %v1275
          %v1304 = vmul.f32 %v1248, %v1276
          %v1305 = vmul.f32 %v1249, %v1277
          %v1306 = vmul.f32 %v1250, %v1278
          %v1307 = vmul.f32 %v1251, %v1279
          %v1308 = vmul.f32 %v1252, %v1280
          %v1309 = vpack.c.bf16 %v1285, %v1281
          %v1310 = vpack.c.bf16 %v1286, %v1282
          %v1311 = vpack.c.bf16 %v1287, %v1283
          %v1312 = vpack.c.bf16 %v1288, %v1284
          %v1313 = vpack.c.bf16 %v1293, %v1289
          %v1314 = vpack.c.bf16 %v1294, %v1290
          %v1315 = vpack.c.bf16 %v1295, %v1291
          %v1316 = vpack.c.bf16 %v1296, %v1292
          %v1317 = vpack.c.bf16 %v1301, %v1297
          %v1318 = vpack.c.bf16 %v1302, %v1298
          %v1319 = vpack.c.bf16 %v1303, %v1299
          %v1320 = vpack.c.bf16 %v1304, %v1300
          %v1321 = vpack.c.bf16 %v1305, %v1305
          %v1322 = vpack.c.bf16 %v1306, %v1306
          %v1323 = vpack.c.bf16 %v1307, %v1307
          %v1324 = vpack.c.bf16 %v1308, %v1308
          %v1341 = vunpack.c.l.b16 %v1309
          %v1342 = vunpack.c.l.b16 %v1310
          %v1343 = vunpack.c.l.b16 %v1311
          %v1344 = vunpack.c.l.b16 %v1312
          %v1345 = vunpack.c.h.b16 %v1309
          %v1346 = vunpack.c.h.b16 %v1310
          %v1347 = vunpack.c.h.b16 %v1311
          %v1348 = vunpack.c.h.b16 %v1312
          %v1349 = vunpack.c.l.b16 %v1313
          %v1350 = vunpack.c.l.b16 %v1314
          %v1351 = vunpack.c.l.b16 %v1315
          %v1352 = vunpack.c.l.b16 %v1316
          %v1353 = vunpack.c.h.b16 %v1313
          %v1354 = vunpack.c.h.b16 %v1314
          %v1355 = vunpack.c.h.b16 %v1315
          %v1356 = vunpack.c.h.b16 %v1316
          %v1357 = vunpack.c.l.b16 %v1317
          %v1358 = vunpack.c.l.b16 %v1318
          %v1359 = vunpack.c.l.b16 %v1319
          %v1360 = vunpack.c.l.b16 %v1320
          %v1361 = vunpack.c.h.b16 %v1317
          %v1362 = vunpack.c.h.b16 %v1318
          %v1363 = vunpack.c.h.b16 %v1319
          %v1364 = vunpack.c.h.b16 %v1320
          %v1365 = vunpack.c.l.b16 %v1321
          %v1366 = vunpack.c.l.b16 %v1322
          %v1367 = vunpack.c.l.b16 %v1323
          %v1368 = vunpack.c.l.b16 %v1324
          %v1369 = vpack.c.b16 %v1342, %v1341
          %v1370 = vpack.c.b16 %v1344, %v1343
          %v1371 = vpack.c.b16 %v1346, %v1345
          %v1372 = vpack.c.b16 %v1348, %v1347
          %v1373 = vpack.c.b16 %v1350, %v1349
          %v1374 = vpack.c.b16 %v1352, %v1351
          %v1375 = vpack.c.b16 %v1354, %v1353
          %v1376 = vpack.c.b16 %v1356, %v1355
          %v1377 = vpack.c.b16 %v1358, %v1357
          %v1378 = vpack.c.b16 %v1360, %v1359
          %v1379 = vpack.c.b16 %v1362, %v1361
          %v1380 = vpack.c.b16 %v1364, %v1363
          %v1381 = vpack.c.b16 %v1366, %v1365
          %v1382 = vpack.c.b16 %v1368, %v1367
          %1397 = vst [vmem:[%s333] sm:$0xff] %v1369
          %1398 = vst [vmem:[%s333 + $0x8] sm:$0xff] %v1370
          %1399 = vst [vmem:[%s333 + $0x10] sm:$0xff] %v1371
          %1400 = vst [vmem:[%s333 + $0x18] sm:$0xff] %v1372
          %1401 = vst [vmem:[%s333 + $0x20] sm:$0xff] %v1373
          %1402 = vst [vmem:[%s333 + $0x28] sm:$0xff] %v1374
          %1403 = vst [vmem:[%s333 + $0x30] sm:$0xff] %v1375
          %1404 = vst [vmem:[%s333 + $0x38] sm:$0xff] %v1376
          %1405 = vst [vmem:[%s333 + $0x40] sm:$0xff] %v1377
          %1406 = vst [vmem:[%s333 + $0x48] sm:$0xff] %v1378
          %1407 = vst [vmem:[%s333 + $0x50] sm:$0xff] %v1379
          %1408 = vst [vmem:[%s333 + $0x58] sm:$0xff] %v1380
          %1409 = vst [vmem:[%s333 + $0x60] sm:$0xff] %v1381
          %1410 = vst [vmem:[%s333 + $0x68] sm:$0xff] %v1382
        $region75: #{tpu_custom_call.1} parent=62 // pred_fallthru
          _
        %s1411 = sand.u32 %s178, 1
        %s1412 = scalar_lea.sflag [#allocation5], %s1411
        %s1413 = sand.u32 %s178, 1
        %s1414 = smul.addr %s1413, 112
        %s1415 = scalar_lea.vmem [#allocation4], %s1414
        // Predicated region
        $region76: #{tpu_custom_call.1} parent=62 // pred_check
          %p1416 = pneg %p188
        $region77: #{tpu_custom_call.1} parent=62 // pred_check_branch
          %1418 = sbr.rel (%p1416) target = $region79
        $region78: #{tpu_custom_call.1} parent=62 // pred_region
          %s1420 = ssub.s32 1792, 1792
          %1421 = vsyncadd %s1412, %s1420
          %s1422 = smul.addr %s24, 28
          %s1423 = smul.addr %s1422, 64
          %s1424 = scalar_lea.hbm %s6, %s1423
          %s1425 = sshll.u32 %s1415, 4
          %s1426 = int_to_ptr.vmem [resolvable:$true] %s1425
          %1431 = dma.vmem_to_hbm [thread:$0]  %s1426, 1792, %s1424, %s1412, 256, 256, 16
        $region79: #{tpu_custom_call.1} parent=62 // pred_fallthru
          _
      $region63: #{tpu_custom_call.1} parent=5 // pred_fallthru
        _
      %p1432 = scmp.le.s32.totalorder 2, %s15
      // Predicated region
      $region80: #{tpu_custom_call.1} parent=5 // pred_check
        %p1433 = pneg %p1432
      $region81: #{tpu_custom_call.1} parent=5 // pred_check_branch
        %1435 = sbr.rel (%p1433) target = $region83
      $region82: #{tpu_custom_call.1} parent=5 // pred_region
        %s1436 = ssub.s32 %s15, 2
        // Predicated region
        $region84: #{tpu_custom_call.1} parent=82 // pred_check
          %p1437 = pneg %p194
        $region85: #{tpu_custom_call.1} parent=82 // pred_check_branch
          %1439 = sbr.rel (%p1437) target = $region87
        $region86: #{tpu_custom_call.1} parent=82 // pred_region
          %s1440 = sand.u32 %s179, 1
          %s1441 = scalar_lea.sflag [#allocation5], %s1440
          %s1442 = sand.u32 %s179, 1
          %s1443 = smul.addr %s1442, 112
          %s1444 = scalar_lea.vmem [#allocation4], %s1443
          %1445 = dma.done %s1441, 1792
        $region87: #{tpu_custom_call.1} parent=82 // pred_fallthru
          _
      $region83: #{tpu_custom_call.1} parent=5 // pred_fallthru
        _
    $region6: #{tpu_custom_call.1} parent=1 // loop_footer
      %s19 = sadd.s32 1, %s15
    $region7: #{tpu_custom_call.1} parent=1 // loop_footer_branch
      %14 = sbr.rel target = $region3
    $region8: #{tpu_custom_call.1} parent=1 // loop_exit
      _
    %1446 = vsyncpa [#allocation5], 1
    %s1447 = scalar_lea.sflag [#allocation5], 1
    %1448 = vsyncpa %s1447, 1

// kernel: tpu_custom_call.1
$region0: #{tpu_custom_call.1}
  #allocation0 [shape = 'u32[]', space=smem, size = 0x4, offset = 0x4, fixed_abs, tag = 'smem constant byte address 0x4 - core index']
  #allocation1 [shape = 'u32[144,128]{1,0:T(1,128)}', space=vmem, size = 0x12000, scoped, tag = 'internal scratch']
  #allocation2 [shape = 'f32[56,32]{1,0:T(8,128)}', space=vmem, size = 0x7000, scoped, tag = 'scratch operand']
  %s0 = inlined_call_operand.vmem [shape: bf16[2,1024,32], index: 0, kind: input, shape index: {}]
  %s1 = inlined_call_operand.vmem [shape: bf16[56,1024], index: 1, kind: input, shape index: {}]
  %s2 = inlined_call_operand.vmem [shape: bf16[32,512], index: 2, kind: input, shape index: {}]
  %s3 = inlined_call_operand.vmem [shape: f32[1,512], index: 3, kind: input, shape index: {}]
  %s4 = inlined_call_operand.vmem [shape: f32[1,512], index: 4, kind: input, shape index: {}]
  %s5 = inlined_call_operand.vmem [shape: f32[56,512], index: 5, kind: input, shape index: {}]
  %s6 = inlined_call_operand.hbm [shape: bf16[2,56,512], index: 6, kind: output, shape index: {}]
  %s7 = sld [smem:[#allocation0]]
  $region88: #{tpu_custom_call.1} parent=0
    _
  %s9 = ssub.s32 1, %s7
  %s10 = scalar_select 0, %s9, %s7
  $region1: #{tpu_custom_call.1} parent=0
    #allocation3 [shape = 'u8[114688]{0}', space=vmem, size = 0x1c000, scoped, tag = 'input window, operand 1']
    #allocation4 [shape = 'u8[114688]{0}', space=vmem, size = 0x1c000, scoped, tag = 'output window, operand 0']
    #allocation5 [shape = 's32[2]{0}', space=sflag, size = 0x8, scoped, tag = 'scoped memory for tpu_custom_call.1']
    %11 = vsyncpa [#allocation5], 0
    %s12 = scalar_lea.sflag [#allocation5], 1
    %13 = vsyncpa %s12, 0
    loop: start=0, step=1, limit=6
    $region2: #{tpu_custom_call.1} parent=1 // loop_pre_header
      _
    $region3: #{tpu_custom_call.1} parent=1 // loop_header
      %s15 = sphi 0, %s19
      %p16 = scmp.ge.s32.totalorder %s15, 6
      %s22 = sphi 0, %s34
      %s23 = sphi 0, %s30
      %s24 = sphi 0, %s22
      %s25 = sphi 0, %s23
      %s26 = sphi 0, %s24
      %s27 = sphi 0, %s25
      %s39 = sphi 0, %s41
      %s42 = sphi 0, %s39
      %s43 = sphi 0, %s42
      %s59 = sphi 0, %s43
      %s65 = sphi 0, %s67
      %s68 = sphi 0, %s65
      %s69 = sphi 0, %s68
      %s85 = sphi 0, %s69
      %s89 = sphi 0, %s89
      %s91 = sphi 0, %s89
      %s92 = sphi 0, %s91
      %s106 = sphi 0, %s92
      %s110 = sphi 0, %s110
      %s112 = sphi 0, %s110
      %s113 = sphi 0, %s112
      %s127 = sphi 0, %s113
      %s131 = sphi 0, %s131
      %s133 = sphi 0, %s131
      %s134 = sphi 0, %s133
      %s148 = sphi 0, %s134
      %s152 = sphi 0, %s152
      %s154 = sphi 0, %s152
      %s155 = sphi 0, %s154
      %s169 = sphi 0, %s155
      %s175 = sphi 0, %s177
      %s178 = sphi 0, %s175
      %s179 = sphi 0, %s178
      %s195 = sphi 0, %s179
    $region4: #{tpu_custom_call.1} parent=1 // loop_header_branch
      %18 = sbr.rel (%p16) target = $region8
    $region5: #{tpu_custom_call.1} parent=1 // loop_body
      %s20 = ssub.s32 %s15, 1
      %s21 = ssub.s32 %s15, 2
      %s28 = sadd.s32 1, %s23
      %p29 = scmp.ge.s32.totalorder %s28, 2
      %s30 = scalar_select %p29, 0, %s28
      %s31 = sadd.s32 1, %s22
      %s32 = scalar_select %p29, %s31, %s22
      %p33 = scmp.ge.s32.totalorder %s32, 2
      %s34 = scalar_select %p33, 0, %s32
      %s35 = ssub.s32 %s22, %s34
      %s36 = ssub.s32 %s23, %s30
      %s37 = sor.u32 %s35, %s36
      %p38 = scmp.eq.s32.totalorder %s37, 0
      %s40 = sadd.s32 %s39, 1
      %s41 = scalar_select %p38, %s39, %s40
      %p44 = pneg %p38
      %p45 = scmp.eq.s32.totalorder %s15, 3
      %p46 = por %p44, %p45
      %p47 = scmp.ne.s32.totalorder %s39, %s42
      %p48 = scmp.eq.s32.totalorder %s15, 0
      %p49 = por %p47, %p48
      %p50 = scmp.ne.s32.totalorder %s39, %s42
      %p51 = scmp.eq.s32.totalorder %s20, 3
      %p52 = por %p50, %p51
      %p53 = scmp.ne.s32.totalorder %s42, %s43
      %p54 = scmp.eq.s32.totalorder %s20, 0
      %p55 = por %p53, %p54
      %p56 = scmp.ne.s32.totalorder %s42, %s43
      %p57 = scmp.eq.s32.totalorder %s21, 3
      %p58 = por %p56, %p57
      %p60 = scmp.ne.s32.totalorder %s43, %s59
      %p61 = scmp.eq.s32.totalorder %s21, 0
      %p62 = por %p60, %p61
      %s63 = ssub.s32 %s23, %s30
      %p64 = scmp.eq.s32.totalorder %s63, 0
      %s66 = sadd.s32 %s65, 1
      %s67 = scalar_select %p64, %s65, %s66
      %p70 = pneg %p64
      %p71 = scmp.eq.s32.totalorder %s15, 3
      %p72 = por %p70, %p71
      %p73 = scmp.ne.s32.totalorder %s65, %s68
      %p74 = scmp.eq.s32.totalorder %s15, 0
      %p75 = por %p73, %p74
      %p76 = scmp.ne.s32.totalorder %s65, %s68
      %p77 = scmp.eq.s32.totalorder %s20, 3
      %p78 = por %p76, %p77
      %p79 = scmp.ne.s32.totalorder %s68, %s69
      %p80 = scmp.eq.s32.totalorder %s20, 0
      %p81 = por %p79, %p80
      %p82 = scmp.ne.s32.totalorder %s68, %s69
      %p83 = scmp.eq.s32.totalorder %s21, 3
      %p84 = por %p82, %p83
      %p86 = scmp.ne.s32.totalorder %s69, %s85
      %p87 = scmp.eq.s32.totalorder %s21, 0
      %p88 = por %p86, %p87
      %s90 = sadd.s32 %s89, 1
      %p93 = scmp.eq.s32.totalorder %s15, 3
      %p94 = scmp.ne.s32.totalorder %s89, %s91
      %p95 = scmp.eq.s32.totalorder %s15, 0
      %p96 = por %p94, %p95
      %p97 = scmp.ne.s32.totalorder %s89, %s91
      %p98 = scmp.eq.s32.totalorder %s20, 3
      %p99 = por %p97, %p98
      %p100 = scmp.ne.s32.totalorder %s91, %s92
      %p101 = scmp.eq.s32.totalorder %s20, 0
      %p102 = por %p100, %p101
      %p103 = scmp.ne.s32.totalorder %s91, %s92
      %p104 = scmp.eq.s32.totalorder %s21, 3
      %p105 = por %p103, %p104
      %p107 = scmp.ne.s32.totalorder %s92, %s106
      %p108 = scmp.eq.s32.totalorder %s21, 0
      %p109 = por %p107, %p108
      %s111 = sadd.s32 %s110, 1
      %p114 = scmp.eq.s32.totalorder %s15, 3
      %p115 = scmp.ne.s32.totalorder %s110, %s112
      %p116 = scmp.eq.s32.totalorder %s15, 0
      %p117 = por %p115, %p116
      %p118 = scmp.ne.s32.totalorder %s110, %s112
      %p119 = scmp.eq.s32.totalorder %s20, 3
      %p120 = por %p118, %p119
      %p121 = scmp.ne.s32.totalorder %s112, %s113
      %p122 = scmp.eq.s32.totalorder %s20, 0
      %p123 = por %p121, %p122
      %p124 = scmp.ne.s32.totalorder %s112, %s113
      %p125 = scmp.eq.s32.totalorder %s21, 3
      %p126 = por %p124, %p125
      %p128 = scmp.ne.s32.totalorder %s113, %s127
      %p129 = scmp.eq.s32.totalorder %s21, 0
      %p130 = por %p128, %p129
      %s132 = sadd.s32 %s131, 1
      %p135 = scmp.eq.s32.totalorder %s15, 3
      %p136 = scmp.ne.s32.totalorder %s131, %s133
      %p137 = scmp.eq.s32.totalorder %s15, 0
      %p138 = por %p136, %p137
      %p139 = scmp.ne.s32.totalorder %s131, %s133
      %p140 = scmp.eq.s32.totalorder %s20, 3
      %p141 = por %p139, %p140
      %p142 = scmp.ne.s32.totalorder %s133, %s134
      %p143 = scmp.eq.s32.totalorder %s20, 0
      %p144 = por %p142, %p143
      %p145 = scmp.ne.s32.totalorder %s133, %s134
      %p146 = scmp.eq.s32.totalorder %s21, 3
      %p147 = por %p145, %p146
      %p149 = scmp.ne.s32.totalorder %s134, %s148
      %p150 = scmp.eq.s32.totalorder %s21, 0
      %p151 = por %p149, %p150
      %s153 = sadd.s32 %s152, 1
      %p156 = scmp.eq.s32.totalorder %s15, 3
      %p157 = scmp.ne.s32.totalorder %s152, %s154
      %p158 = scmp.eq.s32.totalorder %s15, 0
      %p159 = por %p157, %p158
      %p160 = scmp.ne.s32.totalorder %s152, %s154
      %p161 = scmp.eq.s32.totalorder %s20, 3
      %p162 = por %p160, %p161
      %p163 = scmp.ne.s32.totalorder %s154, %s155
      %p164 = scmp.eq.s32.totalorder %s20, 0
      %p165 = por %p163, %p164
      %p166 = scmp.ne.s32.totalorder %s154, %s155
      %p167 = scmp.eq.s32.totalorder %s21, 3
      %p168 = por %p166, %p167
      %p170 = scmp.ne.s32.totalorder %s155, %s169
      %p171 = scmp.eq.s32.totalorder %s21, 0
      %p172 = por %p170, %p171
      %s173 = ssub.s32 %s22, %s34
      %p174 = scmp.eq.s32.totalorder %s173, 0
      %s176 = sadd.s32 %s175, 1
      %s177 = scalar_select %p174, %s175, %s176
      %p180 = pneg %p174
      %p181 = scmp.eq.s32.totalorder %s15, 3
      %p182 = por %p180, %p181
      %p183 = scmp.ne.s32.totalorder %s175, %s178
      %p184 = scmp.eq.s32.totalorder %s15, 0
      %p185 = por %p183, %p184
      %p186 = scmp.ne.s32.totalorder %s175, %s178
      %p187 = scmp.eq.s32.totalorder %s20, 3
      %p188 = por %p186, %p187
      %p189 = scmp.ne.s32.totalorder %s178, %s179
      %p190 = scmp.eq.s32.totalorder %s20, 0
      %p191 = por %p189, %p190
      %p192 = scmp.ne.s32.totalorder %s178, %s179
      %p193 = scmp.eq.s32.totalorder %s21, 3
      %p194 = por %p192, %p193
      %p196 = scmp.ne.s32.totalorder %s179, %s195
      %p197 = scmp.eq.s32.totalorder %s21, 0
      %p198 = por %p196, %p197
      %p199 = scmp.le.s32.totalorder 1, %s15
      %p200 = scmp.lt.s32.totalorder %s15, 5
      %p201 = pnand %p199, %p200
      %p202 = pneg %p201
      // Predicated region
      $region9: #{tpu_custom_call.1} parent=5 // pred_check
        _
      $region10: #{tpu_custom_call.1} parent=5 // pred_check_branch
        %204 = sbr.rel (%p201) target = $region12
      $region11: #{tpu_custom_call.1} parent=5 // pred_region
        %s205 = ssub.s32 %s15, 1
        // Predicated region
        $region13: #{tpu_custom_call.1} parent=11 // pred_check
          %p206 = pneg %p102
        $region14: #{tpu_custom_call.1} parent=11 // pred_check_branch
          %208 = sbr.rel (%p206) target = $region16
        $region15: #{tpu_custom_call.1} parent=11 // pred_region
          _
        $region16: #{tpu_custom_call.1} parent=11 // pred_fallthru
          _
        // Predicated region
        $region17: #{tpu_custom_call.1} parent=11 // pred_check
          %p209 = pneg %p123
        $region18: #{tpu_custom_call.1} parent=11 // pred_check_branch
          %211 = sbr.rel (%p209) target = $region20
        $region19: #{tpu_custom_call.1} parent=11 // pred_region
          _
        $region20: #{tpu_custom_call.1} parent=11 // pred_fallthru
          _
        // Predicated region
        $region21: #{tpu_custom_call.1} parent=11 // pred_check
          %p212 = pneg %p144
        $region22: #{tpu_custom_call.1} parent=11 // pred_check_branch
          %214 = sbr.rel (%p212) target = $region24
        $region23: #{tpu_custom_call.1} parent=11 // pred_region
          _
        $region24: #{tpu_custom_call.1} parent=11 // pred_fallthru
          _
        // Predicated region
        $region25: #{tpu_custom_call.1} parent=11 // pred_check
          %p215 = pneg %p165
        $region26: #{tpu_custom_call.1} parent=11 // pred_check_branch
          %217 = sbr.rel (%p215) target = $region28
        $region27: #{tpu_custom_call.1} parent=11 // pred_region
          _
        $region28: #{tpu_custom_call.1} parent=11 // pred_fallthru
          _
      $region12: #{tpu_custom_call.1} parent=5 // pred_fallthru
        _
      %p218 = scmp.lt.s32.totalorder %s15, 4
      // Predicated region
      $region29: #{tpu_custom_call.1} parent=5 // pred_check
        %p219 = pneg %p218
      $region30: #{tpu_custom_call.1} parent=5 // pred_check_branch
        %221 = sbr.rel (%p219) target = $region32
      $region31: #{tpu_custom_call.1} parent=5 // pred_region
        // Predicated region
        $region33: #{tpu_custom_call.1} parent=31 // pred_check
          %p222 = pneg %p49
        $region34: #{tpu_custom_call.1} parent=31 // pred_check_branch
          %224 = sbr.rel (%p222) target = $region36
        $region35: #{tpu_custom_call.1} parent=31 // pred_region
          %s225 = smul.u32 64, %s23
          %p226 = scmp.lt.s32.totalorder %s22, 1
          %s227 = scalar_select %p226, %s22, 1
          %p228 = scmp.lt.s32.totalorder %s225, 127
          %s229 = scalar_select %p228, %s225, 127
          %s230 = smul.addr %s227, 128
          %s231 = sadd.s32 %s229, %s230
          %s232 = smul.addr %s231, 4
          %s233 = scalar_lea.vmem %s0, %s232
          %s234 = smul.u32 64, %s23
        $region36: #{tpu_custom_call.1} parent=31 // pred_fallthru
          _
        // Predicated region
        $region37: #{tpu_custom_call.1} parent=31 // pred_check
          %p235 = pneg %p75
        $region38: #{tpu_custom_call.1} parent=31 // pred_check_branch
          %237 = sbr.rel (%p235) target = $region40
        $region39: #{tpu_custom_call.1} parent=31 // pred_region
          %s238 = sand.u32 %s65, 1
          %s239 = sand.u32 %s65, 1
          %s240 = smul.addr %s239, 112
          %s241 = scalar_lea.vmem [#allocation3], %s240
          %s242 = smul.u32 4, %s23
          %s243 = smul.addr %s242, 4
          %s244 = scalar_lea.vmem %s1, %s243
          // Predicated region
          $region41: #{tpu_custom_call.1} parent=39 // pred_check
            _
          $region42: #{tpu_custom_call.1} parent=39 // pred_check_branch
            %246 = sbr.rel (0) target = $region44
          $region43: #{tpu_custom_call.1} parent=39 // pred_region
            // Predicated region
            $region45: #{tpu_custom_call.1} parent=43 // pred_check
              _
            $region46: #{tpu_custom_call.1} parent=43 // pred_check_branch
              %248 = sbr.rel (0) target = $region48
            $region47: #{tpu_custom_call.1} parent=43 // pred_region
              loop: start=0, step=1, limit=1
              $region49: #{tpu_custom_call.1} parent=47 // loop_pre_header
                _
              $region50: #{tpu_custom_call.1} parent=47 // loop_header
                %s250 = sphi 0, %s254
                %p251 = scmp.ge.s32.totalorder %s250, 1
                %s255 = sphi %s244, %s244
                %s256 = sphi %s241, %s241
              $region51: #{tpu_custom_call.1} parent=47 // loop_header_branch
                %253 = sbr.rel (%p251) target = $region55
              $region52: #{tpu_custom_call.1} parent=47 // loop_body
                %v257 = vld [vmem:[%s255] sm:$0xff]
                %258 = vst [vmem:[%s256] sm:$0xff] %v257
                %v259 = vld [vmem:[%s255 + $0x8] sm:$0xff]
                %260 = vst [vmem:[%s256 + $0x8] sm:$0xff] %v259
                %v261 = vld [vmem:[%s255 + $0x20] sm:$0xff]
                %262 = vst [vmem:[%s256 + $0x10] sm:$0xff] %v261
                %v263 = vld [vmem:[%s255 + $0x28] sm:$0xff]
                %264 = vst [vmem:[%s256 + $0x18] sm:$0xff] %v263
                %v265 = vld [vmem:[%s255 + $0x40] sm:$0xff]
                %266 = vst [vmem:[%s256 + $0x20] sm:$0xff] %v265
                %v267 = vld [vmem:[%s255 + $0x48] sm:$0xff]
                %268 = vst [vmem:[%s256 + $0x28] sm:$0xff] %v267
                %v269 = vld [vmem:[%s255 + $0x60] sm:$0xff]
                %270 = vst [vmem:[%s256 + $0x30] sm:$0xff] %v269
                %v271 = vld [vmem:[%s255 + $0x68] sm:$0xff]
                %272 = vst [vmem:[%s256 + $0x38] sm:$0xff] %v271
                %v273 = vld [vmem:[%s255 + $0x80] sm:$0xff]
                %274 = vst [vmem:[%s256 + $0x40] sm:$0xff] %v273
                %v275 = vld [vmem:[%s255 + $0x88] sm:$0xff]
                %276 = vst [vmem:[%s256 + $0x48] sm:$0xff] %v275
                %v277 = vld [vmem:[%s255 + $0xa0] sm:$0xff]
                %278 = vst [vmem:[%s256 + $0x50] sm:$0xff] %v277
                %v279 = vld [vmem:[%s255 + $0xa8] sm:$0xff]
                %280 = vst [vmem:[%s256 + $0x58] sm:$0xff] %v279
                %v281 = vld [vmem:[%s255 + $0xc0] sm:$0xff]
                %282 = vst [vmem:[%s256 + $0x60] sm:$0xff] %v281
                %v283 = vld [vmem:[%s255 + $0xc8] sm:$0xff]
                %284 = vst [vmem:[%s256 + $0x68] sm:$0xff] %v283
              $region53: #{tpu_custom_call.1} parent=47 // loop_footer
                %s254 = sadd.s32 1, %s250
              $region54: #{tpu_custom_call.1} parent=47 // loop_footer_branch
                %249 = sbr.rel target = $region50
              $region55: #{tpu_custom_call.1} parent=47 // loop_exit
                _
            $region48: #{tpu_custom_call.1} parent=43 // pred_fallthru
              _
            // Predicated region
            $region56: #{tpu_custom_call.1} parent=43 // pred_check
              _
            $region57: #{tpu_custom_call.1} parent=43 // pred_check_branch
              %286 = sbr.rel target = $region59
            $region58: #{tpu_custom_call.1} parent=43 // pred_region
              _
            $region59: #{tpu_custom_call.1} parent=43 // pred_fallthru
              _
          $region44: #{tpu_custom_call.1} parent=39 // pred_fallthru
            _
          %287 = vnop
        $region40: #{tpu_custom_call.1} parent=31 // pred_fallthru
          _
      $region32: #{tpu_custom_call.1} parent=5 // pred_fallthru
        _
      %p288 = scmp.le.s32.totalorder 1, %s15
      %p289 = scmp.lt.s32.totalorder %s15, 5
      %p290 = pnand %p288, %p289
      %p291 = pneg %p290
      // Predicated region
      $region60: #{tpu_custom_call.1} parent=5 // pred_check
        _
      $region61: #{tpu_custom_call.1} parent=5 // pred_check_branch
        %293 = sbr.rel (%p290) target = $region63
      $region62: #{tpu_custom_call.1} parent=5 // pred_region
        %s294 = ssub.s32 %s15, 1
        %s295 = sand.u32 %s68, 1
        %s296 = sand.u32 %s68, 1
        %s297 = smul.addr %s296, 112
        %s298 = scalar_lea.vmem [#allocation3], %s297
        // Predicated region
        $region64: #{tpu_custom_call.1} parent=62 // pred_check
          %p299 = pneg %p81
        $region65: #{tpu_custom_call.1} parent=62 // pred_check_branch
          %301 = sbr.rel (%p299) target = $region67
        $region66: #{tpu_custom_call.1} parent=62 // pred_region
          _
        $region67: #{tpu_custom_call.1} parent=62 // pred_fallthru
          _
        %s302 = smul.u32 64, %s25
        %p303 = scmp.lt.s32.totalorder %s24, 1
        %s304 = scalar_select %p303, %s24, 1
        %p305 = scmp.lt.s32.totalorder %s302, 127
        %s306 = scalar_select %p305, %s302, 127
        %s307 = smul.addr %s304, 128
        %s308 = sadd.s32 %s306, %s307
        %s309 = smul.addr %s308, 4
        %s310 = scalar_lea.vmem %s0, %s309
        %p311 = pneg %p55
        %p312 = pneg %p52
        %s313 = sand.u32 %s68, 1
        %s314 = sand.u32 %s68, 1
        %s315 = smul.addr %s314, 112
        %s316 = scalar_lea.vmem [#allocation3], %s315
        %p317 = pneg %p81
        %p318 = pneg %p78
        %p319 = pneg %p102
        %p320 = pneg %p99
        %p321 = pneg %p123
        %p322 = pneg %p120
        %p323 = pneg %p144
        %p324 = pneg %p141
        %p325 = pneg %p165
        %p326 = pneg %p162
        %p327 = pneg %p191
        %p328 = pneg %p188
        %s329 = sand.u32 %s178, 1
        %s330 = scalar_lea.sflag [#allocation5], %s329
        %s331 = sand.u32 %s178, 1
        %s332 = smul.addr %s331, 112
        %s333 = scalar_lea.vmem [#allocation4], %s332
        %s334 = smul.u32 64, %s25
        %p335 = scmp.lt.s32.totalorder %s24, 1
        %s336 = scalar_select %p335, %s24, 1
        %p337 = scmp.lt.s32.totalorder %s334, 127
        %s338 = scalar_select %p337, %s334, 127
        %s339 = smul.addr %s336, 128
        %s340 = sadd.s32 %s338, %s339
        %s341 = smul.addr %s340, 4
        %s342 = scalar_lea.vmem %s0, %s341
        %s343 = smul.u32 64, %s25
        %s344 = smul.u32 4, %s25
        %p346 = scmp.eq.s32.totalorder %s25, 0
        // Predicated region
        $region68: #{tpu_custom_call.1} parent=62 // pred_check
          %p347 = pneg %p346
        $region69: #{tpu_custom_call.1} parent=62 // pred_check_branch
          %349 = sbr.rel (%p347) target = $region71
        $region70: #{tpu_custom_call.1} parent=62 // pred_region
          %vm350 = vcmask 261120
          %351 = vst.msk [vmem:[#allocation2] sm:$0xff] %vm350, 0.0
          %352 = vst.msk [vmem:[#allocation2 + $0x8] sm:$0xff] %vm350, 0.0
          %353 = vst.msk [vmem:[#allocation2 + $0x10] sm:$0xff] %vm350, 0.0
          %354 = vst.msk [vmem:[#allocation2 + $0x18] sm:$0xff] %vm350, 0.0
          %355 = vst.msk [vmem:[#allocation2 + $0x20] sm:$0xff] %vm350, 0.0
          %356 = vst.msk [vmem:[#allocation2 + $0x28] sm:$0xff] %vm350, 0.0
          %357 = vst.msk [vmem:[#allocation2 + $0x30] sm:$0xff] %vm350, 0.0
        $region71: #{tpu_custom_call.1} parent=62 // pred_fallthru
          _
        %v358 = vld [vmem:[#allocation2] sm:$0xff]
        %v359 = vld [vmem:[#allocation2 + $0x8] sm:$0xff]
        %v360 = vld [vmem:[#allocation2 + $0x10] sm:$0xff]
        %v361 = vld [vmem:[#allocation2 + $0x18] sm:$0xff]
        %v362 = vld [vmem:[#allocation2 + $0x20] sm:$0xff]
        %v363 = vld [vmem:[#allocation2 + $0x28] sm:$0xff]
        %v364 = vld [vmem:[#allocation2 + $0x30] sm:$0xff]
        %v365 = vld [vmem:[%s298] sm:$0xff]
        %v366 = vld [vmem:[%s298 + $0x8] sm:$0xff]
        %v367 = vld [vmem:[%s298 + $0x10] sm:$0xff]
        %v368 = vld [vmem:[%s298 + $0x18] sm:$0xff]
        %v369 = vld [vmem:[%s298 + $0x20] sm:$0xff]
        %v370 = vld [vmem:[%s298 + $0x28] sm:$0xff]
        %v371 = vld [vmem:[%s298 + $0x30] sm:$0xff]
        %v372 = vld [vmem:[%s298 + $0x38] sm:$0xff]
        %v373 = vld [vmem:[%s298 + $0x40] sm:$0xff]
        %v374 = vld [vmem:[%s298 + $0x48] sm:$0xff]
        %v375 = vld [vmem:[%s298 + $0x50] sm:$0xff]
        %v376 = vld [vmem:[%s298 + $0x58] sm:$0xff]
        %v377 = vld [vmem:[%s298 + $0x60] sm:$0xff]
        %v378 = vld [vmem:[%s298 + $0x68] sm:$0xff]
        %v379 = vld [vmem:[%s342] sm:$0xf]
        %v380 = vld [vmem:[%s342 + $0x4] sm:$0xf]
        %v381 = vld [vmem:[%s342 + $0x8] sm:$0xf]
        %v382 = vld [vmem:[%s342 + $0xc] sm:$0xf]
        %v383 = vld [vmem:[%s342 + $0x10] sm:$0xf]
        %v384 = vld [vmem:[%s342 + $0x14] sm:$0xf]
        %v385 = vld [vmem:[%s342 + $0x18] sm:$0xf]
        %v386 = vld [vmem:[%s342 + $0x1c] sm:$0xf]
        %v387 = vld [vmem:[%s342 + $0x20] sm:$0xf]
        %v388 = vld [vmem:[%s342 + $0x24] sm:$0xf]
        %v389 = vld [vmem:[%s342 + $0x28] sm:$0xf]
        %v390 = vld [vmem:[%s342 + $0x2c] sm:$0xf]
        %v391 = vld [vmem:[%s342 + $0x30] sm:$0xf]
        %v392 = vld [vmem:[%s342 + $0x34] sm:$0xf]
        %v393 = vld [vmem:[%s342 + $0x38] sm:$0xf]
        %v394 = vld [vmem:[%s342 + $0x3c] sm:$0xf]
        %v395 = vld [vmem:[%s342 + $0x40] sm:$0xf]
        %v396 = vld [vmem:[%s342 + $0x44] sm:$0xf]
        %v397 = vld [vmem:[%s342 + $0x48] sm:$0xf]
        %v398 = vld [vmem:[%s342 + $0x4c] sm:$0xf]
        %v399 = vld [vmem:[%s342 + $0x50] sm:$0xf]
        %v400 = vld [vmem:[%s342 + $0x54] sm:$0xf]
        %v401 = vld [vmem:[%s342 + $0x58] sm:$0xf]
        %v402 = vld [vmem:[%s342 + $0x5c] sm:$0xf]
        %v403 = vld [vmem:[%s342 + $0x60] sm:$0xf]
        %v404 = vld [vmem:[%s342 + $0x64] sm:$0xf]
        %v405 = vld [vmem:[%s342 + $0x68] sm:$0xf]
        %v406 = vld [vmem:[%s342 + $0x6c] sm:$0xf]
        %v407 = vld [vmem:[%s342 + $0x70] sm:$0xf]
        %v408 = vld [vmem:[%s342 + $0x74] sm:$0xf]
        %v409 = vld [vmem:[%s342 + $0x78] sm:$0xf]
        %v410 = vld [vmem:[%s342 + $0x7c] sm:$0xf]
        %v411 = vld [vmem:[%s342 + $0x80] sm:$0xf]
        %v412 = vld [vmem:[%s342 + $0x84] sm:$0xf]
        %v413 = vld [vmem:[%s342 + $0x88] sm:$0xf]
        %v414 = vld [vmem:[%s342 + $0x8c] sm:$0xf]
        %v415 = vld [vmem:[%s342 + $0x90] sm:$0xf]
        %v416 = vld [vmem:[%s342 + $0x94] sm:$0xf]
        %v417 = vld [vmem:[%s342 + $0x98] sm:$0xf]
        %v418 = vld [vmem:[%s342 + $0x9c] sm:$0xf]
        %v419 = vld [vmem:[%s342 + $0xa0] sm:$0xf]
        %v420 = vld [vmem:[%s342 + $0xa4] sm:$0xf]
        %v421 = vld [vmem:[%s342 + $0xa8] sm:$0xf]
        %v422 = vld [vmem:[%s342 + $0xac] sm:$0xf]
        %v423 = vld [vmem:[%s342 + $0xb0] sm:$0xf]
        %v424 = vld [vmem:[%s342 + $0xb4] sm:$0xf]
        %v425 = vld [vmem:[%s342 + $0xb8] sm:$0xf]
        %v426 = vld [vmem:[%s342 + $0xbc] sm:$0xf]
        %v427 = vld [vmem:[%s342 + $0xc0] sm:$0xf]
        %v428 = vld [vmem:[%s342 + $0xc4] sm:$0xf]
        %v429 = vld [vmem:[%s342 + $0xc8] sm:$0xf]
        %v430 = vld [vmem:[%s342 + $0xcc] sm:$0xf]
        %v431 = vld [vmem:[%s342 + $0xd0] sm:$0xf]
        %v432 = vld [vmem:[%s342 + $0xd4] sm:$0xf]
        %v433 = vld [vmem:[%s342 + $0xd8] sm:$0xf]
        %v434 = vld [vmem:[%s342 + $0xdc] sm:$0xf]
        %v435 = vld [vmem:[%s342 + $0xe0] sm:$0xf]
        %v436 = vld [vmem:[%s342 + $0xe4] sm:$0xf]
        %v437 = vld [vmem:[%s342 + $0xe8] sm:$0xf]
        %v438 = vld [vmem:[%s342 + $0xec] sm:$0xf]
        %v439 = vld [vmem:[%s342 + $0xf0] sm:$0xf]
        %v440 = vld [vmem:[%s342 + $0xf4] sm:$0xf]
        %v441 = vld [vmem:[%s342 + $0xf8] sm:$0xf]
        %v442 = vld [vmem:[%s342 + $0xfc] sm:$0xf]
        %v457 = vunpack.c.l.b16 %v365
        %v458 = vunpack.c.h.b16 %v365
        %v459 = vunpack.c.l.b16 %v366
        %v460 = vunpack.c.h.b16 %v366
        %v461 = vunpack.c.l.b16 %v367
        %v462 = vunpack.c.h.b16 %v367
        %v463 = vunpack.c.l.b16 %v368
        %v464 = vunpack.c.h.b16 %v368
        %v465 = vunpack.c.l.b16 %v369
        %v466 = vunpack.c.h.b16 %v369
        %v467 = vunpack.c.l.b16 %v370
        %v468 = vunpack.c.h.b16 %v370
        %v469 = vunpack.c.l.b16 %v371
        %v470 = vunpack.c.h.b16 %v371
        %v471 = vunpack.c.l.b16 %v372
        %v472 = vunpack.c.h.b16 %v372
        %v473 = vunpack.c.l.b16 %v373
        %v474 = vunpack.c.h.b16 %v373
        %v475 = vunpack.c.l.b16 %v374
        %v476 = vunpack.c.h.b16 %v374
        %v477 = vunpack.c.l.b16 %v375
        %v478 = vunpack.c.h.b16 %v375
        %v479 = vunpack.c.l.b16 %v376
        %v480 = vunpack.c.h.b16 %v376
        %v481 = vunpack.c.l.b16 %v377
        %v482 = vunpack.c.h.b16 %v377
        %v483 = vunpack.c.l.b16 %v378
        %v484 = vunpack.c.h.b16 %v378
        %v485 = vpack.c.b16 %v461, %v457
        %v486 = vpack.c.b16 %v462, %v458
        %v487 = vpack.c.b16 %v463, %v459
        %v488 = vpack.c.b16 %v464, %v460
        %v489 = vpack.c.b16 %v469, %v465
        %v490 = vpack.c.b16 %v470, %v466
        %v491 = vpack.c.b16 %v471, %v467
        %v492 = vpack.c.b16 %v472, %v468
        %v493 = vpack.c.b16 %v477, %v473
        %v494 = vpack.c.b16 %v478, %v474
        %v495 = vpack.c.b16 %v479, %v475
        %v496 = vpack.c.b16 %v480, %v476
        %v497 = vpack.c.b16 %v481, %v481
        %v498 = vpack.c.b16 %v482, %v482
        %v499 = vpack.c.b16 %v483, %v483
        %v500 = vpack.c.b16 %v484, %v484
        %v581 = vunpack.c.l.b16 %v379
        %v582 = vunpack.c.l.b16 %v380
        %v583 = vunpack.c.l.b16 %v381
        %v584 = vunpack.c.l.b16 %v382
        %v585 = vunpack.c.l.b16 %v383
        %v586 = vunpack.c.l.b16 %v384
        %v587 = vunpack.c.l.b16 %v385
        %v588 = vunpack.c.l.b16 %v386
        %v589 = vunpack.c.l.b16 %v387
        %v590 = vunpack.c.l.b16 %v388
        %v591 = vunpack.c.l.b16 %v389
        %v592 = vunpack.c.l.b16 %v390
        %v593 = vunpack.c.l.b16 %v391
        %v594 = vunpack.c.l.b16 %v392
        %v595 = vunpack.c.l.b16 %v393
        %v596 = vunpack.c.l.b16 %v394
        %v597 = vunpack.c.l.b16 %v395
        %v598 = vunpack.c.l.b16 %v396
        %v599 = vunpack.c.l.b16 %v397
        %v600 = vunpack.c.l.b16 %v398
        %v601 = vunpack.c.l.b16 %v399
        %v602 = vunpack.c.l.b16 %v400
        %v603 = vunpack.c.l.b16 %v401
        %v604 = vunpack.c.l.b16 %v402
        %v605 = vunpack.c.l.b16 %v403
        %v606 = vunpack.c.l.b16 %v404
        %v607 = vunpack.c.l.b16 %v405
        %v608 = vunpack.c.l.b16 %v406
        %v609 = vunpack.c.l.b16 %v407
        %v610 = vunpack.c.l.b16 %v408
        %v611 = vunpack.c.l.b16 %v409
        %v612 = vunpack.c.l.b16 %v410
        %v613 = vunpack.c.l.b16 %v411
        %v614 = vunpack.c.l.b16 %v412
        %v615 = vunpack.c.l.b16 %v413
        %v616 = vunpack.c.l.b16 %v414
        %v617 = vunpack.c.l.b16 %v415
        %v618 = vunpack.c.l.b16 %v416
        %v619 = vunpack.c.l.b16 %v417
        %v620 = vunpack.c.l.b16 %v418
        %v621 = vunpack.c.l.b16 %v419
        %v622 = vunpack.c.l.b16 %v420
        %v623 = vunpack.c.l.b16 %v421
        %v624 = vunpack.c.l.b16 %v422
        %v625 = vunpack.c.l.b16 %v423
        %v626 = vunpack.c.l.b16 %v424
        %v627 = vunpack.c.l.b16 %v425
        %v628 = vunpack.c.l.b16 %v426
        %v629 = vunpack.c.l.b16 %v427
        %v630 = vunpack.c.l.b16 %v428
        %v631 = vunpack.c.l.b16 %v429
        %v632 = vunpack.c.l.b16 %v430
        %v633 = vunpack.c.l.b16 %v431
        %v634 = vunpack.c.l.b16 %v432
        %v635 = vunpack.c.l.b16 %v433
        %v636 = vunpack.c.l.b16 %v434
        %v637 = vunpack.c.l.b16 %v435
        %v638 = vunpack.c.l.b16 %v436
        %v639 = vunpack.c.l.b16 %v437
        %v640 = vunpack.c.l.b16 %v438
        %v641 = vunpack.c.l.b16 %v439
        %v642 = vunpack.c.l.b16 %v440
        %v643 = vunpack.c.l.b16 %v441
        %v644 = vunpack.c.l.b16 %v442
        %v645 = vpack.c.b16 %v582, %v581
        %v646 = vpack.c.b16 %v584, %v583
        %v647 = vpack.c.b16 %v586, %v585
        %v648 = vpack.c.b16 %v588, %v587
        %v649 = vpack.c.b16 %v590, %v589
        %v650 = vpack.c.b16 %v592, %v591
        %v651 = vpack.c.b16 %v594, %v593
        %v652 = vpack.c.b16 %v596, %v595
        %v653 = vpack.c.b16 %v598, %v597
        %v654 = vpack.c.b16 %v600, %v599
        %v655 = vpack.c.b16 %v602, %v601
        %v656 = vpack.c.b16 %v604, %v603
        %v657 = vpack.c.b16 %v606, %v605
        %v658 = vpack.c.b16 %v608, %v607
        %v659 = vpack.c.b16 %v610, %v609
        %v660 = vpack.c.b16 %v612, %v611
        %v661 = vpack.c.b16 %v614, %v613
        %v662 = vpack.c.b16 %v616, %v615
        %v663 = vpack.c.b16 %v618, %v617
        %v664 = vpack.c.b16 %v620, %v619
        %v665 = vpack.c.b16 %v622, %v621
        %v666 = vpack.c.b16 %v624, %v623
        %v667 = vpack.c.b16 %v626, %v625
        %v668 = vpack.c.b16 %v628, %v627
        %v669 = vpack.c.b16 %v630, %v629
        %v670 = vpack.c.b16 %v632, %v631
        %v671 = vpack.c.b16 %v634, %v633
        %v672 = vpack.c.b16 %v636, %v635
        %v673 = vpack.c.b16 %v638, %v637
        %v674 = vpack.c.b16 %v640, %v639
        %v675 = vpack.c.b16 %v642, %v641
        %v676 = vpack.c.b16 %v644, %v643
        %709 = vmatprep.subr.bf16.mxu0 0
        %710 = vmatpush1.bf16.msra.mxu0 %v652
        %711 = vmatprep.subr.bf16.mxu0 0
        %712 = vmatpush1.bf16.msra.mxu0 %v651
        %713 = vmatprep.subr.bf16.mxu0 0
        %714 = vmatpush1.bf16.msra.mxu0 %v650
        %715 = vmatprep.subr.bf16.mxu0 0
        %716 = vmatpush1.bf16.msra.mxu0 %v649
        %717 = vmatprep.subr.bf16.mxu0 0
        %718 = vmatpush1.bf16.msra.mxu0 %v648
        %719 = vmatprep.subr.bf16.mxu0 0
        %720 = vmatpush1.bf16.msra.mxu0 %v647
        %721 = vmatprep.subr.bf16.mxu0 0
        %722 = vmatpush1.bf16.msra.mxu0 %v646
        %723 = vmatprep.subr.bf16.mxu0 0
        %724 = vmatpush1.bf16.msra.mxu0 %v645
        %725 = vmatprep.subr.bf16.mxu0 0
        %726 = vmatpush2.bf16.msra.mxu0 %v660
        %727 = vmatprep.subr.bf16.mxu0 0
        %728 = vmatpush2.bf16.msra.mxu0 %v659
        %729 = vmatprep.subr.bf16.mxu0 0
        %730 = vmatpush2.bf16.msra.mxu0 %v658
        %731 = vmatprep.subr.bf16.mxu0 0
        %732 = vmatpush2.bf16.msra.mxu0 %v657
        %733 = vmatprep.subr.bf16.mxu0 0
        %734 = vmatpush2.bf16.msra.mxu0 %v656
        %735 = vmatprep.subr.bf16.mxu0 0
        %736 = vmatpush2.bf16.msra.mxu0 %v655
        %737 = vmatprep.subr.bf16.mxu0 0
        %738 = vmatpush2.bf16.msra.mxu0 %v654
        %739 = vmatprep.subr.bf16.mxu0 0
        %740 = vmatpush2.bf16.msra.mxu0 %v653
        %741 = vmatprep.mubr.bf16.mxu0 %v486
        %742 = vmatmul.mubr.bf16.gmra.mxu0 %v485
        %v743 = vpop.f32.mrf.mxu0
        %v744 = vadd.f32 0.0, %v743
        %v745 = vpop.f32.mrf.mxu0
        %v746 = vpop.f32.mrf.mxu0
        %v747 = vadd.f32 0.0, %v746
        %v748 = vpop.f32.mrf.mxu0
        %749 = vmatprep.mubr.bf16.mxu0 %v490
        %750 = vmatmul.mubr.bf16.gmra.mxu0 %v489
        %v751 = vpop.f32.mrf.mxu0
        %v752 = vadd.f32 0.0, %v751
        %v753 = vpop.f32.mrf.mxu0
        %v754 = vpop.f32.mrf.mxu0
        %v755 = vadd.f32 0.0, %v754
        %v756 = vpop.f32.mrf.mxu0
        %757 = vmatprep.mubr.bf16.mxu0 %v494
        %758 = vmatmul.mubr.bf16.gmra.mxu0 %v493
        %v759 = vpop.f32.mrf.mxu0
        %v760 = vadd.f32 0.0, %v759
        %v761 = vpop.f32.mrf.mxu0
        %v762 = vpop.f32.mrf.mxu0
        %v763 = vadd.f32 0.0, %v762
        %v764 = vpop.f32.mrf.mxu0
        %765 = vmatprep.mubr.bf16.mxu0 %v498
        %766 = vmatmul.mubr.bf16.gmra.mxu0 %v497
        %v767 = vpop.f32.mrf.mxu0
        %v768 = vadd.f32 0.0, %v767
        %v769 = vpop.f32.mrf.mxu0
        %v770 = vpop.f32.mrf.mxu0
        %v771 = vpop.f32.mrf.mxu0
        %772 = vdwg.mxu0
        %773 = vmatprep.subr.bf16.mxu0 0
        %774 = vmatpush1.bf16.msra.mxu0 %v668
        %775 = vmatprep.subr.bf16.mxu0 0
        %776 = vmatpush1.bf16.msra.mxu0 %v667
        %777 = vmatprep.subr.bf16.mxu0 0
        %778 = vmatpush1.bf16.msra.mxu0 %v666
        %779 = vmatprep.subr.bf16.mxu0 0
        %780 = vmatpush1.bf16.msra.mxu0 %v665
        %781 = vmatprep.subr.bf16.mxu0 0
        %782 = vmatpush1.bf16.msra.mxu0 %v664
        %783 = vmatprep.subr.bf16.mxu0 0
        %784 = vmatpush1.bf16.msra.mxu0 %v663
        %785 = vmatprep.subr.bf16.mxu0 0
        %786 = vmatpush1.bf16.msra.mxu0 %v662
        %787 = vmatprep.subr.bf16.mxu0 0
        %788 = vmatpush1.bf16.msra.mxu0 %v661
        %789 = vmatprep.subr.bf16.mxu0 0
        %790 = vmatpush2.bf16.msra.mxu0 %v676
        %791 = vmatprep.subr.bf16.mxu0 0
        %792 = vmatpush2.bf16.msra.mxu0 %v675
        %793 = vmatprep.subr.bf16.mxu0 0
        %794 = vmatpush2.bf16.msra.mxu0 %v674
        %795 = vmatprep.subr.bf16.mxu0 0
        %796 = vmatpush2.bf16.msra.mxu0 %v673
        %797 = vmatprep.subr.bf16.mxu0 0
        %798 = vmatpush2.bf16.msra.mxu0 %v672
        %799 = vmatprep.subr.bf16.mxu0 0
        %800 = vmatpush2.bf16.msra.mxu0 %v671
        %801 = vmatprep.subr.bf16.mxu0 0
        %802 = vmatpush2.bf16.msra.mxu0 %v670
        %803 = vmatprep.subr.bf16.mxu0 0
        %804 = vmatpush2.bf16.msra.mxu0 %v669
        %805 = vmatprep.mubr.bf16.mxu0 %v488
        %806 = vmatmul.mubr.bf16.gmra.mxu0 %v487
        %v807 = vpop.f32.mrf.mxu0
        %v808 = vadd.f32 %v744, %v807
        %v809 = vpop.f32.mrf.mxu0
        %v810 = vpop.f32.mrf.mxu0
        %v811 = vadd.f32 %v747, %v810
        %v812 = vpop.f32.mrf.mxu0
        %813 = vmatprep.mubr.bf16.mxu0 %v492
        %814 = vmatmul.mubr.bf16.gmra.mxu0 %v491
        %v815 = vpop.f32.mrf.mxu0
        %v816 = vadd.f32 %v752, %v815
        %v817 = vpop.f32.mrf.mxu0
        %v818 = vpop.f32.mrf.mxu0
        %v819 = vadd.f32 %v755, %v818
        %v820 = vpop.f32.mrf.mxu0
        %821 = vmatprep.mubr.bf16.mxu0 %v496
        %822 = vmatmul.mubr.bf16.gmra.mxu0 %v495
        %v823 = vpop.f32.mrf.mxu0
        %v824 = vadd.f32 %v760, %v823
        %v825 = vpop.f32.mrf.mxu0
        %v826 = vpop.f32.mrf.mxu0
        %v827 = vadd.f32 %v763, %v826
        %v828 = vpop.f32.mrf.mxu0
        %829 = vmatprep.mubr.bf16.mxu0 %v500
        %830 = vmatmul.mubr.bf16.gmra.mxu0 %v499
        %v831 = vpop.f32.mrf.mxu0
        %v832 = vadd.f32 %v768, %v831
        %v833 = vpop.f32.mrf.mxu0
        %v834 = vpop.f32.mrf.mxu0
        %v835 = vpop.f32.mrf.mxu0
        %836 = vdwg.mxu0
        %v837 = vadd.f32 %v358, %v808
        %v838 = vadd.f32 %v359, %v811
        %v839 = vadd.f32 %v360, %v816
        %v840 = vadd.f32 %v361, %v819
        %v841 = vadd.f32 %v362, %v824
        %v842 = vadd.f32 %v363, %v827
        %v843 = vadd.f32 %v364, %v832
        %vm844 = vcmask 261120
        %845 = vst.msk [vmem:[#allocation2] sm:$0xff] %vm844, %v837
        %846 = vst.msk [vmem:[#allocation2 + $0x8] sm:$0xff] %vm844, %v838
        %847 = vst.msk [vmem:[#allocation2 + $0x10] sm:$0xff] %vm844, %v839
        %848 = vst.msk [vmem:[#allocation2 + $0x18] sm:$0xff] %vm844, %v840
        %849 = vst.msk [vmem:[#allocation2 + $0x20] sm:$0xff] %vm844, %v841
        %850 = vst.msk [vmem:[#allocation2 + $0x28] sm:$0xff] %vm844, %v842
        %851 = vst.msk [vmem:[#allocation2 + $0x30] sm:$0xff] %vm844, %v843
        %p852 = scmp.eq.s32.totalorder %s25, 1
        // Predicated region
        $region72: #{tpu_custom_call.1} parent=62 // pred_check
          %p853 = pneg %p852
        $region73: #{tpu_custom_call.1} parent=62 // pred_check_branch
          %855 = sbr.rel (%p853) target = $region75
        $region74: #{tpu_custom_call.1} parent=62 // pred_region
          %v856 = vld [vmem:[#allocation2] sm:$0xff]
          %v857 = vld [vmem:[#allocation2 + $0x8] sm:$0xff]
          %v858 = vld [vmem:[#allocation2 + $0x10] sm:$0xff]
          %v859 = vld [vmem:[#allocation2 + $0x18] sm:$0xff]
          %v860 = vld [vmem:[#allocation2 + $0x20] sm:$0xff]
          %v861 = vld [vmem:[#allocation2 + $0x28] sm:$0xff]
          %v862 = vld [vmem:[#allocation2 + $0x30] sm:$0xff]
          %v863 = vpack.c.bf16 %v857, %v856
          %v864 = vpack.c.bf16 %v859, %v858
          %v865 = vpack.c.bf16 %v861, %v860
          %v866 = vpack.c.bf16 %v862, %v862
          %v867 = vld [vmem:[%s2] sm:$0xff]
          %v868 = vld [vmem:[%s2 + $0x8] sm:$0xff]
          %v869 = vld [vmem:[%s2 + $0x10] sm:$0xff]
          %v870 = vld [vmem:[%s2 + $0x18] sm:$0xff]
          %v871 = vld [vmem:[%s2 + $0x20] sm:$0xff]
          %v872 = vld [vmem:[%s2 + $0x28] sm:$0xff]
          %v873 = vld [vmem:[%s2 + $0x30] sm:$0xff]
          %v874 = vld [vmem:[%s2 + $0x38] sm:$0xff]
          %v883 = vunpack.c.l.b16 %v867
          %v884 = vunpack.c.h.b16 %v867
          %v885 = vunpack.c.l.b16 %v868
          %v886 = vunpack.c.h.b16 %v868
          %v887 = vunpack.c.l.b16 %v869
          %v888 = vunpack.c.h.b16 %v869
          %v889 = vunpack.c.l.b16 %v870
          %v890 = vunpack.c.h.b16 %v870
          %v891 = vunpack.c.l.b16 %v871
          %v892 = vunpack.c.h.b16 %v871
          %v893 = vunpack.c.l.b16 %v872
          %v894 = vunpack.c.h.b16 %v872
          %v895 = vunpack.c.l.b16 %v873
          %v896 = vunpack.c.h.b16 %v873
          %v897 = vunpack.c.l.b16 %v874
          %v898 = vunpack.c.h.b16 %v874
          %v899 = vpack.c.b16 %v887, %v883
          %v900 = vpack.c.b16 %v888, %v884
          %v901 = vpack.c.b16 %v889, %v885
          %v902 = vpack.c.b16 %v890, %v886
          %v903 = vpack.c.b16 %v895, %v891
          %v904 = vpack.c.b16 %v896, %v892
          %v905 = vpack.c.b16 %v897, %v893
          %v906 = vpack.c.b16 %v898, %v894
          %v916 = vsel %vm844, %v863, 0
          %v919 = vsel %vm844, %v864, 0
          %v922 = vsel %vm844, %v865, 0
          %v925 = vsel %vm844, %v866, 0
          %927 = vmatprep.subr.bf16.mxu0 0
          %928 = vmatpush1.bf16.msra.mxu0 0
          %929 = vmatprep.subr.bf16.mxu0 0
          %930 = vmatpush1.bf16.msra.mxu0 0
          %931 = vmatprep.subr.bf16.mxu0 0
          %932 = vmatpush1.bf16.msra.mxu0 0
          %933 = vmatprep.subr.bf16.mxu0 0
          %934 = vmatpush1.bf16.msra.mxu0 0
          %935 = vmatprep.subr.bf16.mxu0 0
          %936 = vmatpush1.bf16.msra.mxu0 0
          %937 = vmatprep.subr.bf16.mxu0 0
          %938 = vmatpush1.bf16.msra.mxu0 0
          %939 = vmatprep.subr.bf16.mxu0 %v904
          %940 = vmatpush1.bf16.msra.mxu0 %v903
          %941 = vmatprep.subr.bf16.mxu0 %v900
          %942 = vmatpush1.bf16.msra.mxu0 %v899
          %943 = vmatprep.subr.bf16.mxu0 0
          %944 = vmatpush2.bf16.msra.mxu0 0
          %945 = vmatprep.subr.bf16.mxu0 0
          %946 = vmatpush2.bf16.msra.mxu0 0
          %947 = vmatprep.subr.bf16.mxu0 0
          %948 = vmatpush2.bf16.msra.mxu0 0
          %949 = vmatprep.subr.bf16.mxu0 0
          %950 = vmatpush2.bf16.msra.mxu0 0
          %951 = vmatprep.subr.bf16.mxu0 0
          %952 = vmatpush2.bf16.msra.mxu0 0
          %953 = vmatprep.subr.bf16.mxu0 0
          %954 = vmatpush2.bf16.msra.mxu0 0
          %955 = vmatprep.subr.bf16.mxu0 0
          %956 = vmatpush2.bf16.msra.mxu0 0
          %957 = vmatprep.subr.bf16.mxu0 0
          %958 = vmatpush2.bf16.msra.mxu0 0
          %959 = vmatprep.mubr.bf16.mxu0 0
          %960 = vmatmul.mubr.bf16.gmra.mxu0 %v916
          %v961 = vpop.f32.mrf.mxu0
          %v962 = vadd.f32 0.0, %v961
          %v963 = vpop.f32.mrf.mxu0
          %v964 = vadd.f32 0.0, %v963
          %v965 = vpop.f32.mrf.mxu0
          %v966 = vadd.f32 0.0, %v965
          %v967 = vpop.f32.mrf.mxu0
          %v968 = vadd.f32 0.0, %v967
          %969 = vmatprep.mubr.bf16.mxu0 0
          %970 = vmatmul.mubr.bf16.gmra.mxu0 %v919
          %v971 = vpop.f32.mrf.mxu0
          %v972 = vadd.f32 0.0, %v971
          %v973 = vpop.f32.mrf.mxu0
          %v974 = vadd.f32 0.0, %v973
          %v975 = vpop.f32.mrf.mxu0
          %v976 = vadd.f32 0.0, %v975
          %v977 = vpop.f32.mrf.mxu0
          %v978 = vadd.f32 0.0, %v977
          %979 = vmatprep.mubr.bf16.mxu0 0
          %980 = vmatmul.mubr.bf16.gmra.mxu0 %v922
          %v981 = vpop.f32.mrf.mxu0
          %v982 = vadd.f32 0.0, %v981
          %v983 = vpop.f32.mrf.mxu0
          %v984 = vadd.f32 0.0, %v983
          %v985 = vpop.f32.mrf.mxu0
          %v986 = vadd.f32 0.0, %v985
          %v987 = vpop.f32.mrf.mxu0
          %v988 = vadd.f32 0.0, %v987
          %989 = vmatprep.mubr.bf16.mxu0 0
          %990 = vmatmul.mubr.bf16.gmra.mxu0 %v925
          %v991 = vpop.f32.mrf.mxu0
          %v992 = vadd.f32 0.0, %v991
          %v993 = vpop.f32.mrf.mxu0
          %v994 = vadd.f32 0.0, %v993
          %v995 = vpop.f32.mrf.mxu0
          %v996 = vpop.f32.mrf.mxu0
          %997 = vdwg.mxu0
          %998 = vmatprep.subr.bf16.mxu0 0
          %999 = vmatpush1.bf16.msra.mxu0 0
          %1000 = vmatprep.subr.bf16.mxu0 0
          %1001 = vmatpush1.bf16.msra.mxu0 0
          %1002 = vmatprep.subr.bf16.mxu0 0
          %1003 = vmatpush1.bf16.msra.mxu0 0
          %1004 = vmatprep.subr.bf16.mxu0 0
          %1005 = vmatpush1.bf16.msra.mxu0 0
          %1006 = vmatprep.subr.bf16.mxu0 0
          %1007 = vmatpush1.bf16.msra.mxu0 0
          %1008 = vmatprep.subr.bf16.mxu0 0
          %1009 = vmatpush1.bf16.msra.mxu0 0
          %1010 = vmatprep.subr.bf16.mxu0 %v906
          %1011 = vmatpush1.bf16.msra.mxu0 %v905
          %1012 = vmatprep.subr.bf16.mxu0 %v902
          %1013 = vmatpush1.bf16.msra.mxu0 %v901
          %1014 = vmatprep.subr.bf16.mxu0 0
          %1015 = vmatpush2.bf16.msra.mxu0 0
          %1016 = vmatprep.subr.bf16.mxu0 0
          %1017 = vmatpush2.bf16.msra.mxu0 0
          %1018 = vmatprep.subr.bf16.mxu0 0
          %1019 = vmatpush2.bf16.msra.mxu0 0
          %1020 = vmatprep.subr.bf16.mxu0 0
          %1021 = vmatpush2.bf16.msra.mxu0 0
          %1022 = vmatprep.subr.bf16.mxu0 0
          %1023 = vmatpush2.bf16.msra.mxu0 0
          %1024 = vmatprep.subr.bf16.mxu0 0
          %1025 = vmatpush2.bf16.msra.mxu0 0
          %1026 = vmatprep.subr.bf16.mxu0 0
          %1027 = vmatpush2.bf16.msra.mxu0 0
          %1028 = vmatprep.subr.bf16.mxu0 0
          %1029 = vmatpush2.bf16.msra.mxu0 0
          %1030 = vmatprep.mubr.bf16.mxu0 0
          %1031 = vmatmul.mubr.bf16.gmra.mxu0 %v916
          %v1032 = vpop.f32.mrf.mxu0
          %v1033 = vadd.f32 0.0, %v1032
          %v1034 = vpop.f32.mrf.mxu0
          %v1035 = vadd.f32 0.0, %v1034
          %v1036 = vpop.f32.mrf.mxu0
          %v1037 = vadd.f32 0.0, %v1036
          %v1038 = vpop.f32.mrf.mxu0
          %v1039 = vadd.f32 0.0, %v1038
          %1040 = vmatprep.mubr.bf16.mxu0 0
          %1041 = vmatmul.mubr.bf16.gmra.mxu0 %v919
          %v1042 = vpop.f32.mrf.mxu0
          %v1043 = vadd.f32 0.0, %v1042
          %v1044 = vpop.f32.mrf.mxu0
          %v1045 = vadd.f32 0.0, %v1044
          %v1046 = vpop.f32.mrf.mxu0
          %v1047 = vadd.f32 0.0, %v1046
          %v1048 = vpop.f32.mrf.mxu0
          %v1049 = vadd.f32 0.0, %v1048
          %1050 = vmatprep.mubr.bf16.mxu0 0
          %1051 = vmatmul.mubr.bf16.gmra.mxu0 %v922
          %v1052 = vpop.f32.mrf.mxu0
          %v1053 = vadd.f32 0.0, %v1052
          %v1054 = vpop.f32.mrf.mxu0
          %v1055 = vadd.f32 0.0, %v1054
          %v1056 = vpop.f32.mrf.mxu0
          %v1057 = vadd.f32 0.0, %v1056
          %v1058 = vpop.f32.mrf.mxu0
          %v1059 = vadd.f32 0.0, %v1058
          %1060 = vmatprep.mubr.bf16.mxu0 0
          %1061 = vmatmul.mubr.bf16.gmra.mxu0 %v925
          %v1062 = vpop.f32.mrf.mxu0
          %v1063 = vadd.f32 0.0, %v1062
          %v1064 = vpop.f32.mrf.mxu0
          %v1065 = vadd.f32 0.0, %v1064
          %v1066 = vpop.f32.mrf.mxu0
          %v1067 = vpop.f32.mrf.mxu0
          %1068 = vdwg.mxu0
          %v1069 = vld [vmem:[%s3] sm:$0xf]
          %v1071 = vlaneseq
          %v1072 = vshrl.u32 %v1071, 7
          %v1073 = vsub.s32 0, %v1072
          %v1074 = vrot.slane %v1069, %v1073
          %v1075 = vlaneseq
          %v1076 = vshrl.u32 %v1075, 7
          %v1077 = vsub.s32 1, %v1076
          %v1078 = vrot.slane %v1069, %v1077
          %v1079 = vlaneseq
          %v1080 = vshrl.u32 %v1079, 7
          %v1081 = vsub.s32 2, %v1080
          %v1082 = vrot.slane %v1069, %v1081
          %v1083 = vlaneseq
          %v1084 = vshrl.u32 %v1083, 7
          %v1085 = vsub.s32 3, %v1084
          %v1086 = vrot.slane %v1069, %v1085
          %v1091 = vmul.f32 %v962, %v1074
          %v1092 = vmul.f32 %v964, %v1078
          %v1093 = vmul.f32 %v1033, %v1082
          %v1094 = vmul.f32 %v1035, %v1086
          %v1095 = vmul.f32 %v966, %v1074
          %v1096 = vmul.f32 %v968, %v1078
          %v1097 = vmul.f32 %v1037, %v1082
          %v1098 = vmul.f32 %v1039, %v1086
          %v1099 = vmul.f32 %v972, %v1074
          %v1100 = vmul.f32 %v974, %v1078
          %v1101 = vmul.f32 %v1043, %v1082
          %v1102 = vmul.f32 %v1045, %v1086
          %v1103 = vmul.f32 %v976, %v1074
          %v1104 = vmul.f32 %v978, %v1078
          %v1105 = vmul.f32 %v1047, %v1082
          %v1106 = vmul.f32 %v1049, %v1086
          %v1107 = vmul.f32 %v982, %v1074
          %v1108 = vmul.f32 %v984, %v1078
          %v1109 = vmul.f32 %v1053, %v1082
          %v1110 = vmul.f32 %v1055, %v1086
          %v1111 = vmul.f32 %v986, %v1074
          %v1112 = vmul.f32 %v988, %v1078
          %v1113 = vmul.f32 %v1057, %v1082
          %v1114 = vmul.f32 %v1059, %v1086
          %v1115 = vmul.f32 %v992, %v1074
          %v1116 = vmul.f32 %v994, %v1078
          %v1117 = vmul.f32 %v1063, %v1082
          %v1118 = vmul.f32 %v1065, %v1086
          %v1119 = vld [vmem:[%s4] sm:$0xf]
          %v1121 = vlaneseq
          %v1122 = vshrl.u32 %v1121, 7
          %v1123 = vsub.s32 0, %v1122
          %v1124 = vrot.slane %v1119, %v1123
          %v1125 = vlaneseq
          %v1126 = vshrl.u32 %v1125, 7
          %v1127 = vsub.s32 1, %v1126
          %v1128 = vrot.slane %v1119, %v1127
          %v1129 = vlaneseq
          %v1130 = vshrl.u32 %v1129, 7
          %v1131 = vsub.s32 2, %v1130
          %v1132 = vrot.slane %v1119, %v1131
          %v1133 = vlaneseq
          %v1134 = vshrl.u32 %v1133, 7
          %v1135 = vsub.s32 3, %v1134
          %v1136 = vrot.slane %v1119, %v1135
          %v1141 = vadd.f32 %v1091, %v1124
          %v1142 = vadd.f32 %v1092, %v1128
          %v1143 = vadd.f32 %v1093, %v1132
          %v1144 = vadd.f32 %v1094, %v1136
          %v1145 = vadd.f32 %v1095, %v1124
          %v1146 = vadd.f32 %v1096, %v1128
          %v1147 = vadd.f32 %v1097, %v1132
          %v1148 = vadd.f32 %v1098, %v1136
          %v1149 = vadd.f32 %v1099, %v1124
          %v1150 = vadd.f32 %v1100, %v1128
          %v1151 = vadd.f32 %v1101, %v1132
          %v1152 = vadd.f32 %v1102, %v1136
          %v1153 = vadd.f32 %v1103, %v1124
          %v1154 = vadd.f32 %v1104, %v1128
          %v1155 = vadd.f32 %v1105, %v1132
          %v1156 = vadd.f32 %v1106, %v1136
          %v1157 = vadd.f32 %v1107, %v1124
          %v1158 = vadd.f32 %v1108, %v1128
          %v1159 = vadd.f32 %v1109, %v1132
          %v1160 = vadd.f32 %v1110, %v1136
          %v1161 = vadd.f32 %v1111, %v1124
          %v1162 = vadd.f32 %v1112, %v1128
          %v1163 = vadd.f32 %v1113, %v1132
          %v1164 = vadd.f32 %v1114, %v1136
          %v1165 = vadd.f32 %v1115, %v1124
          %v1166 = vadd.f32 %v1116, %v1128
          %v1167 = vadd.f32 %v1117, %v1132
          %v1168 = vadd.f32 %v1118, %v1136
          %vm1169 = vcmp.ge.f32.partialorder %v1141, 0.0
          %vm1170 = vcmp.ge.f32.partialorder %v1142, 0.0
          %vm1171 = vcmp.ge.f32.partialorder %v1143, 0.0
          %vm1172 = vcmp.ge.f32.partialorder %v1144, 0.0
          %vm1173 = vcmp.ge.f32.partialorder %v1145, 0.0
          %vm1174 = vcmp.ge.f32.partialorder %v1146, 0.0
          %vm1175 = vcmp.ge.f32.partialorder %v1147, 0.0
          %vm1176 = vcmp.ge.f32.partialorder %v1148, 0.0
          %vm1177 = vcmp.ge.f32.partialorder %v1149, 0.0
          %vm1178 = vcmp.ge.f32.partialorder %v1150, 0.0
          %vm1179 = vcmp.ge.f32.partialorder %v1151, 0.0
          %vm1180 = vcmp.ge.f32.partialorder %v1152, 0.0
          %vm1181 = vcmp.ge.f32.partialorder %v1153, 0.0
          %vm1182 = vcmp.ge.f32.partialorder %v1154, 0.0
          %vm1183 = vcmp.ge.f32.partialorder %v1155, 0.0
          %vm1184 = vcmp.ge.f32.partialorder %v1156, 0.0
          %vm1185 = vcmp.ge.f32.partialorder %v1157, 0.0
          %vm1186 = vcmp.ge.f32.partialorder %v1158, 0.0
          %vm1187 = vcmp.ge.f32.partialorder %v1159, 0.0
          %vm1188 = vcmp.ge.f32.partialorder %v1160, 0.0
          %vm1189 = vcmp.ge.f32.partialorder %v1161, 0.0
          %vm1190 = vcmp.ge.f32.partialorder %v1162, 0.0
          %vm1191 = vcmp.ge.f32.partialorder %v1163, 0.0
          %vm1192 = vcmp.ge.f32.partialorder %v1164, 0.0
          %vm1193 = vcmp.ge.f32.partialorder %v1165, 0.0
          %vm1194 = vcmp.ge.f32.partialorder %v1166, 0.0
          %vm1195 = vcmp.ge.f32.partialorder %v1167, 0.0
          %vm1196 = vcmp.ge.f32.partialorder %v1168, 0.0
          %v1197 = vmul.f32 %v1141, 0.01
          %v1198 = vmul.f32 %v1142, 0.01
          %v1199 = vmul.f32 %v1143, 0.01
          %v1200 = vmul.f32 %v1144, 0.01
          %v1201 = vmul.f32 %v1145, 0.01
          %v1202 = vmul.f32 %v1146, 0.01
          %v1203 = vmul.f32 %v1147, 0.01
          %v1204 = vmul.f32 %v1148, 0.01
          %v1205 = vmul.f32 %v1149, 0.01
          %v1206 = vmul.f32 %v1150, 0.01
          %v1207 = vmul.f32 %v1151, 0.01
          %v1208 = vmul.f32 %v1152, 0.01
          %v1209 = vmul.f32 %v1153, 0.01
          %v1210 = vmul.f32 %v1154, 0.01
          %v1211 = vmul.f32 %v1155, 0.01
          %v1212 = vmul.f32 %v1156, 0.01
          %v1213 = vmul.f32 %v1157, 0.01
          %v1214 = vmul.f32 %v1158, 0.01
          %v1215 = vmul.f32 %v1159, 0.01
          %v1216 = vmul.f32 %v1160, 0.01
          %v1217 = vmul.f32 %v1161, 0.01
          %v1218 = vmul.f32 %v1162, 0.01
          %v1219 = vmul.f32 %v1163, 0.01
          %v1220 = vmul.f32 %v1164, 0.01
          %v1221 = vmul.f32 %v1165, 0.01
          %v1222 = vmul.f32 %v1166, 0.01
          %v1223 = vmul.f32 %v1167, 0.01
          %v1224 = vmul.f32 %v1168, 0.01
          %v1225 = vsel %vm1169, %v1141, %v1197
          %v1226 = vsel %vm1170, %v1142, %v1198
          %v1227 = vsel %vm1171, %v1143, %v1199
          %v1228 = vsel %vm1172, %v1144, %v1200
          %v1229 = vsel %vm1173, %v1145, %v1201
          %v1230 = vsel %vm1174, %v1146, %v1202
          %v1231 = vsel %vm1175, %v1147, %v1203
          %v1232 = vsel %vm1176, %v1148, %v1204
          %v1233 = vsel %vm1177, %v1149, %v1205
          %v1234 = vsel %vm1178, %v1150, %v1206
          %v1235 = vsel %vm1179, %v1151, %v1207
          %v1236 = vsel %vm1180, %v1152, %v1208
          %v1237 = vsel %vm1181, %v1153, %v1209
          %v1238 = vsel %vm1182, %v1154, %v1210
          %v1239 = vsel %vm1183, %v1155, %v1211
          %v1240 = vsel %vm1184, %v1156, %v1212
          %v1241 = vsel %vm1185, %v1157, %v1213
          %v1242 = vsel %vm1186, %v1158, %v1214
          %v1243 = vsel %vm1187, %v1159, %v1215
          %v1244 = vsel %vm1188, %v1160, %v1216
          %v1245 = vsel %vm1189, %v1161, %v1217
          %v1246 = vsel %vm1190, %v1162, %v1218
          %v1247 = vsel %vm1191, %v1163, %v1219
          %v1248 = vsel %vm1192, %v1164, %v1220
          %v1249 = vsel %vm1193, %v1165, %v1221
          %v1250 = vsel %vm1194, %v1166, %v1222
          %v1251 = vsel %vm1195, %v1167, %v1223
          %v1252 = vsel %vm1196, %v1168, %v1224
          %v1253 = vld [vmem:[%s5] sm:$0xff]
          %v1254 = vld [vmem:[%s5 + $0x8] sm:$0xff]
          %v1255 = vld [vmem:[%s5 + $0x10] sm:$0xff]
          %v1256 = vld [vmem:[%s5 + $0x18] sm:$0xff]
          %v1257 = vld [vmem:[%s5 + $0x20] sm:$0xff]
          %v1258 = vld [vmem:[%s5 + $0x28] sm:$0xff]
          %v1259 = vld [vmem:[%s5 + $0x30] sm:$0xff]
          %v1260 = vld [vmem:[%s5 + $0x38] sm:$0xff]
          %v1261 = vld [vmem:[%s5 + $0x40] sm:$0xff]
          %v1262 = vld [vmem:[%s5 + $0x48] sm:$0xff]
          %v1263 = vld [vmem:[%s5 + $0x50] sm:$0xff]
          %v1264 = vld [vmem:[%s5 + $0x58] sm:$0xff]
          %v1265 = vld [vmem:[%s5 + $0x60] sm:$0xff]
          %v1266 = vld [vmem:[%s5 + $0x68] sm:$0xff]
          %v1267 = vld [vmem:[%s5 + $0x70] sm:$0xff]
          %v1268 = vld [vmem:[%s5 + $0x78] sm:$0xff]
          %v1269 = vld [vmem:[%s5 + $0x80] sm:$0xff]
          %v1270 = vld [vmem:[%s5 + $0x88] sm:$0xff]
          %v1271 = vld [vmem:[%s5 + $0x90] sm:$0xff]
          %v1272 = vld [vmem:[%s5 + $0x98] sm:$0xff]
          %v1273 = vld [vmem:[%s5 + $0xa0] sm:$0xff]
          %v1274 = vld [vmem:[%s5 + $0xa8] sm:$0xff]
          %v1275 = vld [vmem:[%s5 + $0xb0] sm:$0xff]
          %v1276 = vld [vmem:[%s5 + $0xb8] sm:$0xff]
          %v1277 = vld [vmem:[%s5 + $0xc0] sm:$0xff]
          %v1278 = vld [vmem:[%s5 + $0xc8] sm:$0xff]
          %v1279 = vld [vmem:[%s5 + $0xd0] sm:$0xff]
          %v1280 = vld [vmem:[%s5 + $0xd8] sm:$0xff]
          %v1281 = vmul.f32 %v1225, %v1253
          %v1282 = vmul.f32 %v1226, %v1254
          %v1283 = vmul.f32 %v1227, %v1255
          %v1284 = vmul.f32 %v1228, %v1256
          %v1285 = vmul.f32 %v1229, %v1257
          %v1286 = vmul.f32 %v1230, %v1258
          %v1287 = vmul.f32 %v1231, %v1259
          %v1288 = vmul.f32 %v1232, %v1260
          %v1289 = vmul.f32 %v1233, %v1261
          %v1290 = vmul.f32 %v1234, %v1262
          %v1291 = vmul.f32 %v1235, %v1263
          %v1292 = vmul.f32 %v1236, %v1264
          %v1293 = vmul.f32 %v1237, %v1265
          %v1294 = vmul.f32 %v1238, %v1266
          %v1295 = vmul.f32 %v1239, %v1267
          %v1296 = vmul.f32 %v1240, %v1268
          %v1297 = vmul.f32 %v1241, %v1269
          %v1298 = vmul.f32 %v1242, %v1270
          %v1299 = vmul.f32 %v1243, %v1271
          %v1300 = vmul.f32 %v1244, %v1272
          %v1301 = vmul.f32 %v1245, %v1273
          %v1302 = vmul.f32 %v1246, %v1274
          %v1303 = vmul.f32 %v1247, %v1275
          %v1304 = vmul.f32 %v1248, %v1276
          %v1305 = vmul.f32 %v1249, %v1277
          %v1306 = vmul.f32 %v1250, %v1278
          %v1307 = vmul.f32 %v1251, %v1279
          %v1308 = vmul.f32 %v1252, %v1280
          %v1309 = vpack.c.bf16 %v1285, %v1281
          %v1310 = vpack.c.bf16 %v1286, %v1282
          %v1311 = vpack.c.bf16 %v1287, %v1283
          %v1312 = vpack.c.bf16 %v1288, %v1284
          %v1313 = vpack.c.bf16 %v1293, %v1289
          %v1314 = vpack.c.bf16 %v1294, %v1290
          %v1315 = vpack.c.bf16 %v1295, %v1291
          %v1316 = vpack.c.bf16 %v1296, %v1292
          %v1317 = vpack.c.bf16 %v1301, %v1297
          %v1318 = vpack.c.bf16 %v1302, %v1298
          %v1319 = vpack.c.bf16 %v1303, %v1299
          %v1320 = vpack.c.bf16 %v1304, %v1300
          %v1321 = vpack.c.bf16 %v1305, %v1305
          %v1322 = vpack.c.bf16 %v1306, %v1306
          %v1323 = vpack.c.bf16 %v1307, %v1307
          %v1324 = vpack.c.bf16 %v1308, %v1308
          %v1341 = vunpack.c.l.b16 %v1309
          %v1342 = vunpack.c.l.b16 %v1310
          %v1343 = vunpack.c.l.b16 %v1311
          %v1344 = vunpack.c.l.b16 %v1312
          %v1345 = vunpack.c.h.b16 %v1309
          %v1346 = vunpack.c.h.b16 %v1310
          %v1347 = vunpack.c.h.b16 %v1311
          %v1348 = vunpack.c.h.b16 %v1312
          %v1349 = vunpack.c.l.b16 %v1313
          %v1350 = vunpack.c.l.b16 %v1314
          %v1351 = vunpack.c.l.b16 %v1315
          %v1352 = vunpack.c.l.b16 %v1316
          %v1353 = vunpack.c.h.b16 %v1313
          %v1354 = vunpack.c.h.b16 %v1314
          %v1355 = vunpack.c.h.b16 %v1315
          %v1356 = vunpack.c.h.b16 %v1316
          %v1357 = vunpack.c.l.b16 %v1317
          %v1358 = vunpack.c.l.b16 %v1318
          %v1359 = vunpack.c.l.b16 %v1319
          %v1360 = vunpack.c.l.b16 %v1320
          %v1361 = vunpack.c.h.b16 %v1317
          %v1362 = vunpack.c.h.b16 %v1318
          %v1363 = vunpack.c.h.b16 %v1319
          %v1364 = vunpack.c.h.b16 %v1320
          %v1365 = vunpack.c.l.b16 %v1321
          %v1366 = vunpack.c.l.b16 %v1322
          %v1367 = vunpack.c.l.b16 %v1323
          %v1368 = vunpack.c.l.b16 %v1324
          %v1369 = vpack.c.b16 %v1342, %v1341
          %v1370 = vpack.c.b16 %v1344, %v1343
          %v1371 = vpack.c.b16 %v1346, %v1345
          %v1372 = vpack.c.b16 %v1348, %v1347
          %v1373 = vpack.c.b16 %v1350, %v1349
          %v1374 = vpack.c.b16 %v1352, %v1351
          %v1375 = vpack.c.b16 %v1354, %v1353
          %v1376 = vpack.c.b16 %v1356, %v1355
          %v1377 = vpack.c.b16 %v1358, %v1357
          %v1378 = vpack.c.b16 %v1360, %v1359
          %v1379 = vpack.c.b16 %v1362, %v1361
          %v1380 = vpack.c.b16 %v1364, %v1363
          %v1381 = vpack.c.b16 %v1366, %v1365
          %v1382 = vpack.c.b16 %v1368, %v1367
          %1397 = vst [vmem:[%s333] sm:$0xff] %v1369
          %1398 = vst [vmem:[%s333 + $0x8] sm:$0xff] %v1370
          %1399 = vst [vmem:[%s333 + $0x10] sm:$0xff] %v1371
          %1400 = vst [vmem:[%s333 + $0x18] sm:$0xff] %v1372
          %1401 = vst [vmem:[%s333 + $0x20] sm:$0xff] %v1373
          %1402 = vst [vmem:[%s333 + $0x28] sm:$0xff] %v1374
          %1403 = vst [vmem:[%s333 + $0x30] sm:$0xff] %v1375
          %1404 = vst [vmem:[%s333 + $0x38] sm:$0xff] %v1376
          %1405 = vst [vmem:[%s333 + $0x40] sm:$0xff] %v1377
          %1406 = vst [vmem:[%s333 + $0x48] sm:$0xff] %v1378
          %1407 = vst [vmem:[%s333 + $0x50] sm:$0xff] %v1379
          %1408 = vst [vmem:[%s333 + $0x58] sm:$0xff] %v1380
          %1409 = vst [vmem:[%s333 + $0x60] sm:$0xff] %v1381
          %1410 = vst [vmem:[%s333 + $0x68] sm:$0xff] %v1382
        $region75: #{tpu_custom_call.1} parent=62 // pred_fallthru
          _
        %s1411 = sand.u32 %s178, 1
        %s1412 = scalar_lea.sflag [#allocation5], %s1411
        %s1413 = sand.u32 %s178, 1
        %s1414 = smul.addr %s1413, 112
        %s1415 = scalar_lea.vmem [#allocation4], %s1414
        // Predicated region
        $region76: #{tpu_custom_call.1} parent=62 // pred_check
          %p1416 = pneg %p188
        $region77: #{tpu_custom_call.1} parent=62 // pred_check_branch
          %1418 = sbr.rel (%p1416) target = $region79
        $region78: #{tpu_custom_call.1} parent=62 // pred_region
          %s1420 = ssub.s32 1792, 1792
          %1421 = vsyncadd %s1412, %s1420
          %s1422 = smul.addr %s24, 28
          %s1423 = smul.addr %s1422, 64
          %s1424 = scalar_lea.hbm %s6, %s1423
          %s1425 = sshll.u32 %s1415, 4
          %s1426 = int_to_ptr.vmem [resolvable:$true] %s1425
          %1431 = dma.vmem_to_hbm [thread:$0]  %s1426, 1792, %s1424, %s1412, 256, 256, 16
        $region79: #{tpu_custom_call.1} parent=62 // pred_fallthru
          _
      $region63: #{tpu_custom_call.1} parent=5 // pred_fallthru
        _
      %p1432 = scmp.le.s32.totalorder 2, %s15
      // Predicated region
      $region80: #{tpu_custom_call.1} parent=5 // pred_check
        %p1433 = pneg %p1432
      $region81: #{tpu_custom_call.1} parent=5 // pred_check_branch
        %1435 = sbr.rel (%p1433) target = $region83
      $region82: #{tpu_custom_call.1} parent=5 // pred_region
        %s1436 = ssub.s32 %s15, 2
        // Predicated region
        $region84: #{tpu_custom_call.1} parent=82 // pred_check
          %p1437 = pneg %p194
        $region85: #{tpu_custom_call.1} parent=82 // pred_check_branch
          %1439 = sbr.rel (%p1437) target = $region87
        $region86: #{tpu_custom_call.1} parent=82 // pred_region
          %s1440 = sand.u32 %s179, 1
          %s1441 = scalar_lea.sflag [#allocation5], %s1440
          %s1442 = sand.u32 %s179, 1
          %s1443 = smul.addr %s1442, 112
          %s1444 = scalar_lea.vmem [#allocation4], %s1443
          %1445 = dma.done %s1441, 1792
        $region87: #{tpu_custom_call.1} parent=82 // pred_fallthru
          _
      $region83: #{tpu_custom_call.1} parent=5 // pred_fallthru
        _
    $region6: #{tpu_custom_call.1} parent=1 // loop_footer
      %s19 = sadd.s32 1, %s15
    $region7: #{tpu_custom_call.1} parent=1 // loop_footer_branch
      %14 = sbr.rel target = $region3
    $region8: #{tpu_custom_call.1} parent=1 // loop_exit
      _
    %1446 = vsyncpa [#allocation5], 1
    %s1447 = scalar_lea.sflag [#allocation5], 1
    %1448 = vsyncpa %s1447, 1

</llo_original>
